<compile_context>
chip_gen: v5e
topology: v5e:2x2
jax: 0.10.0
libtpu: 0.0.40
codegen_flags: <defaults>
</compile_context>

<pallas_src>
import math

import numpy as np
import jax
import jax.numpy as jnp
from jax.experimental import pallas as pl
from jax.experimental.pallas import tpu as pltpu

BN_EPS = 1e-5
LEAKY_SLOPE = 0.1


# ---------------------------------------------------------------------------
# tiling helpers (trace-time, pure Python)
# ---------------------------------------------------------------------------
def _divisors_desc(n):
    return [d for d in range(n, 0, -1) if n % d == 0]


def _pick_spatial_tile(hw, cin, cout, budget_bytes=12 << 20, cap=2048):
    """Pass-1 spatial tile: largest divisor of H*W that is a multiple of 128 and
    fits a conservative VMEM budget (covers v5e 16MiB / v7x 32MiB default scoped
    limits): x f32 (double-buffered) + bf16 copy + f32 y temp + bf16 y out."""
    per_elem = cin * 10 + cout * 8
    max_thw = max(128, min(cap, budget_bytes // max(per_elem, 1)))
    for d in _divisors_desc(hw):
        if d % 128 == 0 and d <= max_thw:
            return d
    # Full-map block (allowed: equals the full array dim).  Fine for the small
    # feature maps this module targets.
    # TODO(synk): very large maps whose H*W has no 128-multiple divisor would
    # need spatial padding + tail masking here.
    return hw


def _pick_row_chunk(h, w, p_budget_bytes=4 << 20):
    """Pass-2 spatial chunk = th full rows.  Needs th*W % 128 == 0 (lane-dense
    blocks) or th == H (full extent), and the bf16 upsample matrix
    (th*W, 4*th*W) must fit a small VMEM budget."""
    for th in _divisors_desc(h):
        chunk = th * w
        if chunk % 128 != 0 and th != h:
            continue
        if 2 * chunk * 4 * chunk > p_budget_bytes:
            continue
        return th
    # TODO(synk): very large maps: fall back to single-row chunks (or accept a
    # bigger P); only reachable for maps far larger than this module's use case.
    return 1 if (w % 128 == 0) else h


def _pick_channel_tile(cout, chunk, budget_bytes=8 << 20):
    """Pass-2 channel tile: largest multiple-of-8 divisor of Cout keeping the
    double-buffered y(bf16)+out(f32) blocks under budget."""
    best = cout
    if cout % 8 == 0:
        for tc in range(8, cout + 1, 8):
            if cout % tc == 0 and 36 * tc * chunk <= budget_bytes:
                best = tc
    return best


def _upsample_matrix(th, w):
    """0/1 matrix P (th*W, 4*th*W): row h*W+w has ones at columns
    (2h+dh)*2W + 2w+dw, dh,dw in {0,1}.  act @ P == nearest-x2 upsample of the
    flattened (th, W) chunk, already in NCHW row-major order."""
    chunk = th * w
    p = np.zeros((chunk, 4 * chunk), np.float32)
    hh, ww = np.meshgrid(np.arange(th), np.arange(w), indexing="ij")
    src = (hh * w + ww).reshape(-1)
    for dh in (0, 1):
        for dw in (0, 1):
            dst = ((2 * hh + dh) * (2 * w) + (2 * ww + dw)).reshape(-1)
            p[src, dst] = 1.0
    return jnp.asarray(p, jnp.bfloat16)


# ---------------------------------------------------------------------------
# Pass 1: 1x1 conv as NCHW matmul (bf16 in, f32 accumulate) + per-tile BN
#         partial statistics (tile mean and centered sum of squares).
# ---------------------------------------------------------------------------
def _conv_stats_kernel(x_ref, w_ref, y_ref, mean_ref, m2_ref):
    x = x_ref[0].astype(jnp.bfloat16)                                   # (Cin, tHW)
    y = jnp.dot(w_ref[...], x, preferred_element_type=jnp.float32)      # (Cout, tHW) f32
    y_ref[0] = y.astype(y_ref.dtype)                                    # bf16 store
    mu = jnp.mean(y, axis=1, keepdims=True)                             # (Cout, 1)
    mean_ref[0, 0] = mu
    m2_ref[0, 0] = jnp.sum((y - mu) ** 2, axis=1, keepdims=True)        # centered


# ---------------------------------------------------------------------------
# Pass 2: BN affine + LeakyReLU + nearest-x2 upsample (one MXU matmul with the
#         constant duplication matrix P), writing the final NCHW output with a
#         lane-dense flattened-spatial last dim.
# ---------------------------------------------------------------------------
def _bn_act_up_kernel(y_ref, scale_ref, shift_ref, p_ref, o_ref):
    v = y_ref[0].astype(jnp.float32) * scale_ref[...] + shift_ref[...]  # (tc, chunk)
    v = jnp.where(v > 0, v, LEAKY_SLOPE * v)                            # LeakyReLU(0.1)
    o_ref[0] = jnp.dot(v.astype(jnp.bfloat16), p_ref[...],
                       preferred_element_type=jnp.float32).astype(o_ref.dtype)


# ---------------------------------------------------------------------------
# Wrapper: NCHW f32 in -> NCHW f32 out, shape (N, Cout, 2H, 2W).  No transposes.
# ---------------------------------------------------------------------------
def upsample_forward(params, x_nchw):
    w_mat, gamma, beta = params["w"], params["gamma"], params["beta"]   # (Cin,Cout),(1,Cout),(1,Cout)
    N, Cin, H, W = x_nchw.shape
    Cout = w_mat.shape[1]
    HW = H * W

    x3 = x_nchw.reshape(N, Cin, HW).astype(jnp.float32)   # free contiguous reshape
    wT = jnp.transpose(w_mat).astype(jnp.bfloat16)        # (Cout, Cin), tiny

    thw = _pick_spatial_tile(HW, Cin, Cout)
    T = HW // thw

    y, t_mean, t_m2 = pl.pallas_call(
        _conv_stats_kernel,
        out_shape=(
            jax.ShapeDtypeStruct((N, Cout, HW), jnp.bfloat16),          # bf16 intermediate
            jax.ShapeDtypeStruct((N, T, Cout, 1), jnp.float32),
            jax.ShapeDtypeStruct((N, T, Cout, 1), jnp.float32),
        ),
        grid=(N, T),
        in_specs=[
            pl.BlockSpec((1, Cin, thw), lambda n, t: (n, 0, t)),
            pl.BlockSpec((Cout, Cin), lambda n, t: (0, 0)),             # weights resident
        ],
        out_specs=(
            pl.BlockSpec((1, Cout, thw), lambda n, t: (n, 0, t)),
            pl.BlockSpec((1, 1, Cout, 1), lambda n, t: (n, t, 0, 0)),
            pl.BlockSpec((1, 1, Cout, 1), lambda n, t: (n, t, 0, 0)),
        ),
        compiler_params=pltpu.CompilerParams(
            dimension_semantics=("parallel", "parallel")),
    )(x3, wT)

    # Combine equal-sized per-tile stats -> global biased batch statistics
    # (Chan et al. parallel combine); tiny [N*T, Cout] arrays, negligible traffic.
    tm = t_mean.reshape(N * T, Cout)
    m2 = t_m2.reshape(N * T, Cout)
    g_mean = jnp.mean(tm, axis=0)                                        # (Cout,)
    g_var = (jnp.sum(m2, axis=0)
             + thw * jnp.sum((tm - g_mean) ** 2, axis=0)) / (N * HW)

    scale_1d = gamma.reshape(Cout).astype(jnp.float32) * jax.lax.rsqrt(g_var + BN_EPS)
    shift_1d = beta.reshape(Cout).astype(jnp.float32) - g_mean * scale_1d
    scale = scale_1d.reshape(Cout, 1)
    shift = shift_1d.reshape(Cout, 1)

    th = _pick_row_chunk(H, W)
    chunk = th * W
    R = H // th
    tc = _pick_channel_tile(Cout, chunk)
    P = _upsample_matrix(th, W)                                          # (chunk, 4*chunk) bf16

    out_flat = pl.pallas_call(
        _bn_act_up_kernel,
        out_shape=jax.ShapeDtypeStruct((N, Cout, 4 * HW), jnp.float32),
        grid=(N, Cout // tc, R),
        in_specs=[
            pl.BlockSpec((1, tc, chunk), lambda n, c, r: (n, c, r)),
            pl.BlockSpec((tc, 1), lambda n, c, r: (c, 0)),
            pl.BlockSpec((tc, 1), lambda n, c, r: (c, 0)),
            pl.BlockSpec((chunk, 4 * chunk), lambda n, c, r: (0, 0)),    # P resident
        ],
        out_specs=pl.BlockSpec((1, tc, 4 * chunk), lambda n, c, r: (n, c, r)),
        compiler_params=pltpu.CompilerParams(
            dimension_semantics=("parallel", "parallel", "parallel")),
    )(y, scale, shift, P)

    # Free contiguous reshape of the flattened spatial dim back to (2H, 2W).
    return out_flat.reshape(N, Cout, 2 * H, 2 * W)


# ---------------------------------------------------------------------------
# Pure-JAX reference (f32) for a correctness check.
# ---------------------------------------------------------------------------
def upsample_reference(params, x_nchw):
    w_mat, gamma, beta = params["w"], params["gamma"], params["beta"]
    y = jnp.einsum("ncij,cd->ndij", x_nchw.astype(jnp.float32), w_mat.astype(jnp.float32))
    mean = jnp.mean(y, axis=(0, 2, 3), keepdims=True)
    var = jnp.mean((y - mean) ** 2, axis=(0, 2, 3), keepdims=True)
    y = (y - mean) * jax.lax.rsqrt(var + BN_EPS) * gamma.reshape(1, -1, 1, 1) \
        + beta.reshape(1, -1, 1, 1)
    y = jnp.where(y > 0, y, LEAKY_SLOPE * y)
    return jnp.repeat(jnp.repeat(y, 2, axis=2), 2, axis=3)               # nearest x2


# ---------------------------------------------------------------------------
if __name__ == "__main__":
    key = jax.random.PRNGKey(0)
    kx, kw, kg, kb = jax.random.split(key, 4)

    # Upsample(256 -> 128) on a small 16x16 feature map, batch 2 (tiny-yolo style).
    N, Cin, H, W = 2, 256, 16, 16
    Cout = 128

    x = jax.random.normal(kx, (N, Cin, H, W), jnp.float32)
    params = {
        "w": jax.random.normal(kw, (Cin, Cout), jnp.float32) / math.sqrt(Cin),
        "gamma": 1.0 + 0.1 * jax.random.normal(kg, (1, Cout), jnp.float32),
        "beta": 0.1 * jax.random.normal(kb, (1, Cout), jnp.float32),
    }

    fwd = jax.jit(upsample_forward)
    out = jax.block_until_ready(fwd(params, x))

    expected_shape = (N, Cout, 2 * H, 2 * W)
    assert out.shape == expected_shape, (out.shape, expected_shape)
    assert bool(jnp.all(jnp.isfinite(out)))

    ref = upsample_reference(params, x)
    # bf16 matmul inputs + bf16 intermediate/epilogue -> loose tolerance vs f32 reference.
    max_err = float(jnp.max(jnp.abs(out - ref)))
    assert bool(jnp.allclose(out, ref, atol=0.2, rtol=0.05)), max_err

    # NOTE: BatchNorm2d running-stat buffer updates are a training side effect
    # only; they do not affect this forward output and are not modeled.
    print("KERNEL_OK")
</pallas_src>

<mosaic_0001>
module attributes {stable_mosaic.version = 11 : i64} {
  func.func @_conv_stats_kernel(%arg0: i32, %arg1: i32, %arg2: memref<1x256x256xf32, #tpu.memory_space<vmem>>, %arg3: memref<128x256xbf16, #tpu.memory_space<vmem>>, %arg4: memref<1x128x256xbf16, #tpu.memory_space<vmem>>, %arg5: memref<1x1x128x1xf32, #tpu.memory_space<vmem>>, %arg6: memref<1x1x128x1xf32, #tpu.memory_space<vmem>>) attributes {dimension_semantics = [#tpu.dimension_semantics<parallel>, #tpu.dimension_semantics<parallel>], iteration_bounds = array<i64: 2, 1>, scalar_prefetch = 0 : i64, scratch_operands = 0 : i64, tpu.core_type = #tpu.core_type<tc>, window_params = [{transform_indices = @transform_0, window_bounds = array<i64: 1, 256, 256>}, {pipeline_mode = #tpu.pipeline_mode<synchronous>, transform_indices = @transform_1, window_bounds = array<i64: 128, 256>}, {transform_indices = @transform_2, window_bounds = array<i64: 1, 128, 256>}, {transform_indices = @transform_3, window_bounds = array<i64: 1, 1, 128, 1>}, {transform_indices = @transform_4, window_bounds = array<i64: 1, 1, 128, 1>}]} {
    %c0 = arith.constant 0 : index
    %c0_0 = arith.constant 0 : index
    %c0_1 = arith.constant 0 : index
    %0 = vector.load %arg2[%c0, %c0_0, %c0_1] : memref<1x256x256xf32, #tpu.memory_space<vmem>>, vector<1x256x256xf32>
    %1 = vector.shape_cast %0 : vector<1x256x256xf32> to vector<256x256xf32>
    %2 = arith.truncf %1 : vector<256x256xf32> to vector<256x256xbf16>
    %c0_2 = arith.constant 0 : index
    %c0_3 = arith.constant 0 : index
    %3 = vector.load %arg3[%c0_2, %c0_3] : memref<128x256xbf16, #tpu.memory_space<vmem>>, vector<128x256xbf16>
    %cst = arith.constant dense<0.000000e+00> : vector<128x256xf32>
    %4 = tpu.matmul %3, %2, %cst {dimension_numbers = #tpu.dot_dimension_numbers<[1], [0], [0], [1], [0, 0, 1, 1], [], []>} : vector<128x256xbf16>, vector<256x256xbf16>, vector<128x256xf32> -> vector<128x256xf32>
    %5 = arith.truncf %4 : vector<128x256xf32> to vector<128x256xbf16>
    %c0_4 = arith.constant 0 : index
    %c0_5 = arith.constant 0 : index
    %c0_6 = arith.constant 0 : index
    %6 = vector.load %arg4[%c0_4, %c0_5, %c0_6] : memref<1x128x256xbf16, #tpu.memory_space<vmem>>, vector<1x128x256xbf16>
    %7 = vector.shape_cast %6 : vector<1x128x256xbf16> to vector<128x256xbf16>
    %8 = vector.shape_cast %5 : vector<128x256xbf16> to vector<1x128x256xbf16>
    tpu.vector_store %arg4[%c0_4, %c0_5, %c0_6], %8 {strides = array<i32>} : memref<1x128x256xbf16, #tpu.memory_space<vmem>>, vector<1x128x256xbf16>,
    %cst_7 = arith.constant dense<0.000000e+00> : vector<128xf32>
    %9 = vector.multi_reduction <add>, %4, %cst_7 [1] : vector<128x256xf32> to vector<128xf32>
    %10 = vector.shape_cast %9 : vector<128xf32> to vector<128x1xf32>
    %cst_8 = arith.constant 2.560000e+02 : f32
    %11 = vector.broadcast %cst_8 : f32 to vector<128x1xf32>
    %12 = arith.divf %10, %11 : vector<128x1xf32>
    %c0_9 = arith.constant 0 : index
    %c0_10 = arith.constant 0 : index
    %c0_11 = arith.constant 0 : index
    %c0_12 = arith.constant 0 : index
    %13 = vector.load %arg5[%c0_9, %c0_10, %c0_11, %c0_12] : memref<1x1x128x1xf32, #tpu.memory_space<vmem>>, vector<1x1x128x1xf32>
    %14 = vector.shape_cast %13 : vector<1x1x128x1xf32> to vector<128x1xf32>
    %15 = vector.shape_cast %12 : vector<128x1xf32> to vector<1x1x128x1xf32>
    tpu.vector_store %arg5[%c0_9, %c0_10, %c0_11, %c0_12], %15 {strides = array<i32>} : memref<1x1x128x1xf32, #tpu.memory_space<vmem>>, vector<1x1x128x1xf32>,
    %16 = vector.broadcast %12 : vector<128x1xf32> to vector<128x256xf32>
    %17 = arith.subf %4, %16 : vector<128x256xf32>
    %18 = arith.mulf %17, %17 : vector<128x256xf32>
    %cst_13 = arith.constant dense<0.000000e+00> : vector<128xf32>
    %19 = vector.multi_reduction <add>, %18, %cst_13 [1] : vector<128x256xf32> to vector<128xf32>
    %20 = vector.shape_cast %19 : vector<128xf32> to vector<128x1xf32>
    %c0_14 = arith.constant 0 : index
    %c0_15 = arith.constant 0 : index
    %c0_16 = arith.constant 0 : index
    %c0_17 = arith.constant 0 : index
    %21 = vector.load %arg6[%c0_14, %c0_15, %c0_16, %c0_17] : memref<1x1x128x1xf32, #tpu.memory_space<vmem>>, vector<1x1x128x1xf32>
    %22 = vector.shape_cast %21 : vector<1x1x128x1xf32> to vector<128x1xf32>
    %23 = vector.shape_cast %20 : vector<128x1xf32> to vector<1x1x128x1xf32>
    tpu.vector_store %arg6[%c0_14, %c0_15, %c0_16, %c0_17], %23 {strides = array<i32>} : memref<1x1x128x1xf32, #tpu.memory_space<vmem>>, vector<1x1x128x1xf32>,
    return
  }
  func.func @transform_0(%arg0: i32, %arg1: i32) -> (i32, i32, i32) {
    %c0_i32 = arith.constant 0 : i32
    %c0_i32_0 = arith.constant 0 : i32
    return %arg0, %c0_i32, %arg1 : i32, i32, i32
  }
  func.func @transform_1(%arg0: i32, %arg1: i32) -> (i32, i32) {
    %c0_i32 = arith.constant 0 : i32
    %c0_i32_0 = arith.constant 0 : i32
    %c0_i32_1 = arith.constant 0 : i32
    return %c0_i32, %c0_i32_0 : i32, i32
  }
  func.func @transform_2(%arg0: i32, %arg1: i32) -> (i32, i32, i32) {
    %c0_i32 = arith.constant 0 : i32
    %c0_i32_0 = arith.constant 0 : i32
    return %arg0, %c0_i32, %arg1 : i32, i32, i32
  }
  func.func @transform_3(%arg0: i32, %arg1: i32) -> (i32, i32, i32, i32) {
    %c0_i32 = arith.constant 0 : i32
    %c0_i32_0 = arith.constant 0 : i32
    %c0_i32_1 = arith.constant 0 : i32
    return %arg0, %arg1, %c0_i32, %c0_i32_0 : i32, i32, i32, i32
  }
  func.func @transform_4(%arg0: i32, %arg1: i32) -> (i32, i32, i32, i32) {
    %c0_i32 = arith.constant 0 : i32
    %c0_i32_0 = arith.constant 0 : i32
    %c0_i32_1 = arith.constant 0 : i32
    return %arg0, %arg1, %c0_i32, %c0_i32_0 : i32, i32, i32, i32
  }
}

module attributes {stable_mosaic.version = 11 : i64} {
  func.func @_bn_act_up_kernel(%arg0: i32, %arg1: i32, %arg2: i32, %arg3: memref<1x128x256xbf16, #tpu.memory_space<vmem>>, %arg4: memref<128x1xf32, #tpu.memory_space<vmem>>, %arg5: memref<128x1xf32, #tpu.memory_space<vmem>>, %arg6: memref<256x1024xbf16, #tpu.memory_space<vmem>>, %arg7: memref<1x128x1024xf32, #tpu.memory_space<vmem>>) attributes {dimension_semantics = [#tpu.dimension_semantics<parallel>, #tpu.dimension_semantics<parallel>, #tpu.dimension_semantics<parallel>], iteration_bounds = array<i64: 2, 1, 1>, scalar_prefetch = 0 : i64, scratch_operands = 0 : i64, tpu.core_type = #tpu.core_type<tc>, window_params = [{transform_indices = @transform_0, window_bounds = array<i64: 1, 128, 256>}, {transform_indices = @transform_1, window_bounds = array<i64: 128, 1>}, {transform_indices = @transform_2, window_bounds = array<i64: 128, 1>}, {pipeline_mode = #tpu.pipeline_mode<synchronous>, transform_indices = @transform_3, window_bounds = array<i64: 256, 1024>}, {transform_indices = @transform_4, window_bounds = array<i64: 1, 128, 1024>}]} {
    %c0 = arith.constant 0 : index
    %c0_0 = arith.constant 0 : index
    %c0_1 = arith.constant 0 : index
    %0 = vector.load %arg3[%c0, %c0_0, %c0_1] : memref<1x128x256xbf16, #tpu.memory_space<vmem>>, vector<1x128x256xbf16>
    %1 = vector.shape_cast %0 : vector<1x128x256xbf16> to vector<128x256xbf16>
    %2 = arith.extf %1 : vector<128x256xbf16> to vector<128x256xf32>
    %c0_2 = arith.constant 0 : index
    %c0_3 = arith.constant 0 : index
    %3 = vector.load %arg4[%c0_2, %c0_3] : memref<128x1xf32, #tpu.memory_space<vmem>>, vector<128x1xf32>
    %4 = vector.broadcast %3 : vector<128x1xf32> to vector<128x256xf32>
    %5 = arith.mulf %2, %4 : vector<128x256xf32>
    %c0_4 = arith.constant 0 : index
    %c0_5 = arith.constant 0 : index
    %6 = vector.load %arg5[%c0_4, %c0_5] : memref<128x1xf32, #tpu.memory_space<vmem>>, vector<128x1xf32>
    %7 = vector.broadcast %6 : vector<128x1xf32> to vector<128x256xf32>
    %8 = arith.addf %5, %7 : vector<128x256xf32>
    %cst = arith.constant 0.000000e+00 : f32
    %9 = vector.broadcast %cst : f32 to vector<128x256xf32>
    %10 = arith.cmpf ogt, %8, %9 : vector<128x256xf32>
    %cst_6 = arith.constant 1.000000e-01 : f32
    %11 = vector.broadcast %cst_6 : f32 to vector<128x256xf32>
    %12 = arith.mulf %11, %8 : vector<128x256xf32>
    %13 = arith.select %10, %8, %12 : vector<128x256xi1>, vector<128x256xf32>
    %14 = arith.truncf %13 : vector<128x256xf32> to vector<128x256xbf16>
    %c0_7 = arith.constant 0 : index
    %c0_8 = arith.constant 0 : index
    %15 = vector.load %arg6[%c0_7, %c0_8] : memref<256x1024xbf16, #tpu.memory_space<vmem>>, vector<256x1024xbf16>
    %cst_9 = arith.constant dense<0.000000e+00> : vector<128x1024xf32>
    %16 = tpu.matmul %14, %15, %cst_9 {dimension_numbers = #tpu.dot_dimension_numbers<[1], [0], [0], [1], [0, 0, 1, 1], [], []>} : vector<128x256xbf16>, vector<256x1024xbf16>, vector<128x1024xf32> -> vector<128x1024xf32>
    %c0_10 = arith.constant 0 : index
    %c0_11 = arith.constant 0 : index
    %c0_12 = arith.constant 0 : index
    %17 = vector.load %arg7[%c0_10, %c0_11, %c0_12] : memref<1x128x1024xf32, #tpu.memory_space<vmem>>, vector<1x128x1024xf32>
    %18 = vector.shape_cast %17 : vector<1x128x1024xf32> to vector<128x1024xf32>
    %19 = vector.shape_cast %16 : vector<128x1024xf32> to vector<1x128x1024xf32>
    tpu.vector_store %arg7[%c0_10, %c0_11, %c0_12], %19 {strides = array<i32>} : memref<1x128x1024xf32, #tpu.memory_space<vmem>>, vector<1x128x1024xf32>,
    return
  }
  func.func @transform_0(%arg0: i32, %arg1: i32, %arg2: i32) -> (i32, i32, i32) {
    %c0_i32 = arith.constant 0 : i32
    return %arg0, %arg1, %arg2 : i32, i32, i32
  }
  func.func @transform_1(%arg0: i32, %arg1: i32, %arg2: i32) -> (i32, i32) {
    %c0_i32 = arith.constant 0 : i32
    %c0_i32_0 = arith.constant 0 : i32
    return %arg1, %c0_i32 : i32, i32
  }
  func.func @transform_2(%arg0: i32, %arg1: i32, %arg2: i32) -> (i32, i32) {
    %c0_i32 = arith.constant 0 : i32
    %c0_i32_0 = arith.constant 0 : i32
    return %arg1, %c0_i32 : i32, i32
  }
  func.func @transform_3(%arg0: i32, %arg1: i32, %arg2: i32) -> (i32, i32) {
    %c0_i32 = arith.constant 0 : i32
    %c0_i32_0 = arith.constant 0 : i32
    %c0_i32_1 = arith.constant 0 : i32
    return %c0_i32, %c0_i32_0 : i32, i32
  }
  func.func @transform_4(%arg0: i32, %arg1: i32, %arg2: i32) -> (i32, i32, i32) {
    %c0_i32 = arith.constant 0 : i32
    return %arg0, %arg1, %arg2 : i32, i32, i32
  }
}

</mosaic_0001>

<llo_original>
// kernel: upsample_forward.2
$region0: #{upsample_forward.2}
  #allocation0 [shape = 'u32[]', space=smem, size = 0x4, offset = 0x4, fixed_abs, tag = 'smem constant byte address 0x4 - core index']
  #allocation1 [shape = 'u32[72,128]{1,0:T(1,128)}', space=vmem, size = 0x9000, scoped, tag = 'internal scratch']
  %s0 = inlined_call_operand.vmem [shape: f32[2,256,256], index: 0, kind: input, shape index: {}]
  %s1 = inlined_call_operand.vmem [shape: bf16[128,256], index: 1, kind: input, shape index: {}]
  %s2 = inlined_call_operand.vmem [shape: bf16[2,128,256], index: 2, kind: output, shape index: {0}]
  %s3 = inlined_call_operand.vmem [shape: f32[2,1,128,1], index: 3, kind: output, shape index: {1}]
  %s4 = inlined_call_operand.vmem [shape: f32[2,1,128,1], index: 4, kind: output, shape index: {2}]
  %5 = xla_tuple %s2, %s3, %s4
  %s6 = sld [smem:[#allocation0]]
  $region57: #{upsample_forward.2} parent=0
    _
  %s8 = ssub.s32 1, %s6
  %s9 = scalar_select 0, %s8, %s6
  loop: start=0, step=1, limit=4
  $region2: #{upsample_forward.2} parent=0 // loop_pre_header
    _
  $region3: #{upsample_forward.2} parent=0 // loop_header
    %s11 = sphi 0, %s15
    %p12 = scmp.ge.s32.totalorder %s11, 4
    %s18 = sphi 0, %s30
    %s19 = sphi 0, %s26
    %s20 = sphi 0, %s18
    %s21 = sphi 0, %s19
    %s22 = sphi 0, %s20
    %s23 = sphi 0, %s21
    %s35 = sphi 0, %s37
    %s38 = sphi 0, %s35
    %s39 = sphi 0, %s38
    %s55 = sphi 0, %s39
    %s59 = sphi 0, %s59
    %s61 = sphi 0, %s59
    %s62 = sphi 0, %s61
    %s76 = sphi 0, %s62
    %s84 = sphi 0, %s86
    %s87 = sphi 0, %s84
    %s88 = sphi 0, %s87
    %s104 = sphi 0, %s88
    %s112 = sphi 0, %s114
    %s115 = sphi 0, %s112
    %s116 = sphi 0, %s115
    %s132 = sphi 0, %s116
    %s140 = sphi 0, %s142
    %s143 = sphi 0, %s140
    %s144 = sphi 0, %s143
    %s160 = sphi 0, %s144
  $region4: #{upsample_forward.2} parent=0 // loop_header_branch
    %14 = sbr.rel (%p12) target = $region8
  $region5: #{upsample_forward.2} parent=0 // loop_body
    %s16 = ssub.s32 %s11, 1
    %s17 = ssub.s32 %s11, 2
    %s24 = sadd.s32 1, %s19
    %p25 = scmp.ge.s32.totalorder %s24, 1
    %s26 = scalar_select %p25, 0, %s24
    %s27 = sadd.s32 1, %s18
    %s28 = scalar_select %p25, %s27, %s18
    %p29 = scmp.ge.s32.totalorder %s28, 2
    %s30 = scalar_select %p29, 0, %s28
    %s31 = ssub.s32 %s18, %s30
    %s32 = ssub.s32 %s19, %s26
    %s33 = sor.u32 %s31, %s32
    %p34 = scmp.eq.s32.totalorder %s33, 0
    %s36 = sadd.s32 %s35, 1
    %s37 = scalar_select %p34, %s35, %s36
    %p40 = pneg %p34
    %p41 = scmp.eq.s32.totalorder %s11, 1
    %p42 = por %p40, %p41
    %p43 = scmp.ne.s32.totalorder %s35, %s38
    %p44 = scmp.eq.s32.totalorder %s11, 0
    %p45 = por %p43, %p44
    %p46 = scmp.ne.s32.totalorder %s35, %s38
    %p47 = scmp.eq.s32.totalorder %s16, 1
    %p48 = por %p46, %p47
    %p49 = scmp.ne.s32.totalorder %s38, %s39
    %p50 = scmp.eq.s32.totalorder %s16, 0
    %p51 = por %p49, %p50
    %p52 = scmp.ne.s32.totalorder %s38, %s39
    %p53 = scmp.eq.s32.totalorder %s17, 1
    %p54 = por %p52, %p53
    %p56 = scmp.ne.s32.totalorder %s39, %s55
    %p57 = scmp.eq.s32.totalorder %s17, 0
    %p58 = por %p56, %p57
    %s60 = sadd.s32 %s59, 1
    %p63 = scmp.eq.s32.totalorder %s11, 1
    %p64 = scmp.ne.s32.totalorder %s59, %s61
    %p65 = scmp.eq.s32.totalorder %s11, 0
    %p66 = por %p64, %p65
    %p67 = scmp.ne.s32.totalorder %s59, %s61
    %p68 = scmp.eq.s32.totalorder %s16, 1
    %p69 = por %p67, %p68
    %p70 = scmp.ne.s32.totalorder %s61, %s62
    %p71 = scmp.eq.s32.totalorder %s16, 0
    %p72 = por %p70, %p71
    %p73 = scmp.ne.s32.totalorder %s61, %s62
    %p74 = scmp.eq.s32.totalorder %s17, 1
    %p75 = por %p73, %p74
    %p77 = scmp.ne.s32.totalorder %s62, %s76
    %p78 = scmp.eq.s32.totalorder %s17, 0
    %p79 = por %p77, %p78
    %s80 = ssub.s32 %s18, %s30
    %s81 = ssub.s32 %s19, %s26
    %s82 = sor.u32 %s80, %s81
    %p83 = scmp.eq.s32.totalorder %s82, 0
    %s85 = sadd.s32 %s84, 1
    %s86 = scalar_select %p83, %s84, %s85
    %p89 = pneg %p83
    %p90 = scmp.eq.s32.totalorder %s11, 1
    %p91 = por %p89, %p90
    %p92 = scmp.ne.s32.totalorder %s84, %s87
    %p93 = scmp.eq.s32.totalorder %s11, 0
    %p94 = por %p92, %p93
    %p95 = scmp.ne.s32.totalorder %s84, %s87
    %p96 = scmp.eq.s32.totalorder %s16, 1
    %p97 = por %p95, %p96
    %p98 = scmp.ne.s32.totalorder %s87, %s88
    %p99 = scmp.eq.s32.totalorder %s16, 0
    %p100 = por %p98, %p99
    %p101 = scmp.ne.s32.totalorder %s87, %s88
    %p102 = scmp.eq.s32.totalorder %s17, 1
    %p103 = por %p101, %p102
    %p105 = scmp.ne.s32.totalorder %s88, %s104
    %p106 = scmp.eq.s32.totalorder %s17, 0
    %p107 = por %p105, %p106
    %s108 = ssub.s32 %s18, %s30
    %s109 = ssub.s32 %s19, %s26
    %s110 = sor.u32 %s108, %s109
    %p111 = scmp.eq.s32.totalorder %s110, 0
    %s113 = sadd.s32 %s112, 1
    %s114 = scalar_select %p111, %s112, %s113
    %p117 = pneg %p111
    %p118 = scmp.eq.s32.totalorder %s11, 1
    %p119 = por %p117, %p118
    %p120 = scmp.ne.s32.totalorder %s112, %s115
    %p121 = scmp.eq.s32.totalorder %s11, 0
    %p122 = por %p120, %p121
    %p123 = scmp.ne.s32.totalorder %s112, %s115
    %p124 = scmp.eq.s32.totalorder %s16, 1
    %p125 = por %p123, %p124
    %p126 = scmp.ne.s32.totalorder %s115, %s116
    %p127 = scmp.eq.s32.totalorder %s16, 0
    %p128 = por %p126, %p127
    %p129 = scmp.ne.s32.totalorder %s115, %s116
    %p130 = scmp.eq.s32.totalorder %s17, 1
    %p131 = por %p129, %p130
    %p133 = scmp.ne.s32.totalorder %s116, %s132
    %p134 = scmp.eq.s32.totalorder %s17, 0
    %p135 = por %p133, %p134
    %s136 = ssub.s32 %s18, %s30
    %s137 = ssub.s32 %s19, %s26
    %s138 = sor.u32 %s136, %s137
    %p139 = scmp.eq.s32.totalorder %s138, 0
    %s141 = sadd.s32 %s140, 1
    %s142 = scalar_select %p139, %s140, %s141
    %p145 = pneg %p139
    %p146 = scmp.eq.s32.totalorder %s11, 1
    %p147 = por %p145, %p146
    %p148 = scmp.ne.s32.totalorder %s140, %s143
    %p149 = scmp.eq.s32.totalorder %s11, 0
    %p150 = por %p148, %p149
    %p151 = scmp.ne.s32.totalorder %s140, %s143
    %p152 = scmp.eq.s32.totalorder %s16, 1
    %p153 = por %p151, %p152
    %p154 = scmp.ne.s32.totalorder %s143, %s144
    %p155 = scmp.eq.s32.totalorder %s16, 0
    %p156 = por %p154, %p155
    %p157 = scmp.ne.s32.totalorder %s143, %s144
    %p158 = scmp.eq.s32.totalorder %s17, 1
    %p159 = por %p157, %p158
    %p161 = scmp.ne.s32.totalorder %s144, %s160
    %p162 = scmp.eq.s32.totalorder %s17, 0
    %p163 = por %p161, %p162
    %p164 = scmp.le.s32.totalorder 1, %s11
    %p165 = scmp.lt.s32.totalorder %s11, 3
    %p166 = pnand %p164, %p165
    %p167 = pneg %p166
    // Predicated region
    $region9: #{upsample_forward.2} parent=5 // pred_check
      _
    $region10: #{upsample_forward.2} parent=5 // pred_check_branch
      %169 = sbr.rel (%p166) target = $region12
    $region11: #{upsample_forward.2} parent=5 // pred_region
      %s170 = ssub.s32 %s11, 1
      // Predicated region
      $region13: #{upsample_forward.2} parent=11 // pred_check
        %p171 = pneg %p72
      $region14: #{upsample_forward.2} parent=11 // pred_check_branch
        %173 = sbr.rel (%p171) target = $region16
      $region15: #{upsample_forward.2} parent=11 // pred_region
        _
      $region16: #{upsample_forward.2} parent=11 // pred_fallthru
        _
    $region12: #{upsample_forward.2} parent=5 // pred_fallthru
      _
    %p174 = scmp.lt.s32.totalorder %s11, 2
    // Predicated region
    $region17: #{upsample_forward.2} parent=5 // pred_check
      %p175 = pneg %p174
    $region18: #{upsample_forward.2} parent=5 // pred_check_branch
      %177 = sbr.rel (%p175) target = $region20
    $region19: #{upsample_forward.2} parent=5 // pred_region
      // Predicated region
      $region21: #{upsample_forward.2} parent=19 // pred_check
        %p178 = pneg %p45
      $region22: #{upsample_forward.2} parent=19 // pred_check_branch
        %180 = sbr.rel (%p178) target = $region24
      $region23: #{upsample_forward.2} parent=19 // pred_region
        %s181 = smul.u32 2, %s19
        %p182 = scmp.lt.s32.totalorder %s18, 1
        %s183 = scalar_select %p182, %s18, 1
        %p184 = scmp.lt.s32.totalorder %s181, 1
        %s185 = scalar_select %p184, %s181, 1
        %s186 = smul.addr %s183, 64
        %s187 = sadd.s32 %s185, %s186
        %s188 = smul.addr %s187, 8
        %s189 = scalar_lea.vmem %s0, %s188
        %s190 = smul.u32 2, %s19
      $region24: #{upsample_forward.2} parent=19 // pred_fallthru
        _
    $region20: #{upsample_forward.2} parent=5 // pred_fallthru
      _
    %p191 = scmp.le.s32.totalorder 1, %s11
    %p192 = scmp.lt.s32.totalorder %s11, 3
    %p193 = pnand %p191, %p192
    %p194 = pneg %p193
    // Predicated region
    $region25: #{upsample_forward.2} parent=5 // pred_check
      _
    $region26: #{upsample_forward.2} parent=5 // pred_check_branch
      %196 = sbr.rel (%p193) target = $region28
    $region27: #{upsample_forward.2} parent=5 // pred_region
      %s197 = ssub.s32 %s11, 1
      %s198 = smul.u32 2, %s21
      %p199 = scmp.lt.s32.totalorder %s20, 1
      %s200 = scalar_select %p199, %s20, 1
      %p201 = scmp.lt.s32.totalorder %s198, 1
      %s202 = scalar_select %p201, %s198, 1
      %s203 = smul.addr %s200, 64
      %s204 = sadd.s32 %s202, %s203
      %s205 = smul.addr %s204, 8
      %s206 = scalar_lea.vmem %s0, %s205
      %p207 = pneg %p51
      %p208 = pneg %p48
      %p209 = pneg %p72
      %p210 = pneg %p69
      %p211 = pneg %p100
      %p212 = pneg %p97
      %s213 = smul.u32 2, %s21
      %p214 = scmp.lt.s32.totalorder %s20, 1
      %s215 = scalar_select %p214, %s20, 1
      %p216 = scmp.lt.s32.totalorder %s213, 1
      %s217 = scalar_select %p216, %s213, 1
      %s218 = smul.addr %s215, 32
      %s219 = sadd.s32 %s217, %s218
      %s220 = smul.addr %s219, 4
      %s221 = scalar_lea.vmem %s2, %s220
      %p222 = pneg %p128
      %p223 = pneg %p125
      %p224 = scmp.lt.s32.totalorder %s20, 1
      %s225 = scalar_select %p224, %s20, 1
      %p226 = scmp.lt.s32.totalorder %s21, 0
      %s227 = scalar_select %p226, %s21, 0
      %s228 = smul.addr %s227, 16
      %s229 = smul.addr %s225, 16
      %s230 = sadd.s32 %s228, %s229
      %s231 = smul.addr %s230, 8
      %s232 = scalar_lea.vmem %s3, %s231
      %p233 = pneg %p156
      %p234 = pneg %p153
      %p235 = scmp.lt.s32.totalorder %s20, 1
      %s236 = scalar_select %p235, %s20, 1
      %p237 = scmp.lt.s32.totalorder %s21, 0
      %s238 = scalar_select %p237, %s21, 0
      %s239 = smul.addr %s238, 16
      %s240 = smul.addr %s236, 16
      %s241 = sadd.s32 %s239, %s240
      %s242 = smul.addr %s241, 8
      %s243 = scalar_lea.vmem %s4, %s242
      %s244 = smul.u32 2, %s21
      %p245 = scmp.lt.s32.totalorder %s20, 1
      %s246 = scalar_select %p245, %s20, 1
      %p247 = scmp.lt.s32.totalorder %s244, 1
      %s248 = scalar_select %p247, %s244, 1
      %s249 = smul.addr %s246, 64
      %s250 = sadd.s32 %s248, %s249
      %s251 = smul.addr %s250, 8
      %s252 = scalar_lea.vmem %s0, %s251
      %s253 = smul.u32 2, %s21
      %s254 = smul.u32 2, %s21
      %p255 = scmp.lt.s32.totalorder %s20, 1
      %s256 = scalar_select %p255, %s20, 1
      %p257 = scmp.lt.s32.totalorder %s254, 1
      %s258 = scalar_select %p257, %s254, 1
      %s259 = smul.addr %s256, 32
      %s260 = sadd.s32 %s258, %s259
      %s261 = smul.addr %s260, 4
      %s262 = scalar_lea.vmem %s2, %s261
      %s263 = smul.u32 2, %s21
      %p264 = scmp.lt.s32.totalorder %s20, 1
      %s265 = scalar_select %p264, %s20, 1
      %p266 = scmp.lt.s32.totalorder %s21, 0
      %s267 = scalar_select %p266, %s21, 0
      %s268 = smul.addr %s267, 16
      %s269 = smul.addr %s265, 16
      %s270 = sadd.s32 %s268, %s269
      %s271 = smul.addr %s270, 8
      %s272 = scalar_lea.vmem %s3, %s271
      %p273 = scmp.lt.s32.totalorder %s20, 1
      %s274 = scalar_select %p273, %s20, 1
      %p275 = scmp.lt.s32.totalorder %s21, 0
      %s276 = scalar_select %p275, %s21, 0
      %s277 = smul.addr %s276, 16
      %s278 = smul.addr %s274, 16
      %s279 = sadd.s32 %s277, %s278
      %s280 = smul.addr %s279, 8
      %s281 = scalar_lea.vmem %s4, %s280
      %v282 = vld [vmem:[%s252] sm:$0xff]
      %v283 = vld [vmem:[%s252 + $0x8] sm:$0xff]
      %v284 = vld [vmem:[%s252 + $0x10] sm:$0xff]
      %v285 = vld [vmem:[%s252 + $0x18] sm:$0xff]
      %v286 = vld [vmem:[%s252 + $0x20] sm:$0xff]
      %v287 = vld [vmem:[%s252 + $0x28] sm:$0xff]
      %v288 = vld [vmem:[%s252 + $0x30] sm:$0xff]
      %v289 = vld [vmem:[%s252 + $0x38] sm:$0xff]
      %v290 = vld [vmem:[%s252 + $0x40] sm:$0xff]
      %v291 = vld [vmem:[%s252 + $0x48] sm:$0xff]
      %v292 = vld [vmem:[%s252 + $0x50] sm:$0xff]
      %v293 = vld [vmem:[%s252 + $0x58] sm:$0xff]
      %v294 = vld [vmem:[%s252 + $0x60] sm:$0xff]
      %v295 = vld [vmem:[%s252 + $0x68] sm:$0xff]
      %v296 = vld [vmem:[%s252 + $0x70] sm:$0xff]
      %v297 = vld [vmem:[%s252 + $0x78] sm:$0xff]
      %v298 = vld [vmem:[%s252 + $0x80] sm:$0xff]
      %v299 = vld [vmem:[%s252 + $0x88] sm:$0xff]
      %v300 = vld [vmem:[%s252 + $0x90] sm:$0xff]
      %v301 = vld [vmem:[%s252 + $0x98] sm:$0xff]
      %v302 = vld [vmem:[%s252 + $0xa0] sm:$0xff]
      %v303 = vld [vmem:[%s252 + $0xa8] sm:$0xff]
      %v304 = vld [vmem:[%s252 + $0xb0] sm:$0xff]
      %v305 = vld [vmem:[%s252 + $0xb8] sm:$0xff]
      %v306 = vld [vmem:[%s252 + $0xc0] sm:$0xff]
      %v307 = vld [vmem:[%s252 + $0xc8] sm:$0xff]
      %v308 = vld [vmem:[%s252 + $0xd0] sm:$0xff]
      %v309 = vld [vmem:[%s252 + $0xd8] sm:$0xff]
      %v310 = vld [vmem:[%s252 + $0xe0] sm:$0xff]
      %v311 = vld [vmem:[%s252 + $0xe8] sm:$0xff]
      %v312 = vld [vmem:[%s252 + $0xf0] sm:$0xff]
      %v313 = vld [vmem:[%s252 + $0xf8] sm:$0xff]
      %v314 = vld [vmem:[%s252 + $0x100] sm:$0xff]
      %v315 = vld [vmem:[%s252 + $0x108] sm:$0xff]
      %v316 = vld [vmem:[%s252 + $0x110] sm:$0xff]
      %v317 = vld [vmem:[%s252 + $0x118] sm:$0xff]
      %v318 = vld [vmem:[%s252 + $0x120] sm:$0xff]
      %v319 = vld [vmem:[%s252 + $0x128] sm:$0xff]
      %v320 = vld [vmem:[%s252 + $0x130] sm:$0xff]
      %v321 = vld [vmem:[%s252 + $0x138] sm:$0xff]
      %v322 = vld [vmem:[%s252 + $0x140] sm:$0xff]
      %v323 = vld [vmem:[%s252 + $0x148] sm:$0xff]
      %v324 = vld [vmem:[%s252 + $0x150] sm:$0xff]
      %v325 = vld [vmem:[%s252 + $0x158] sm:$0xff]
      %v326 = vld [vmem:[%s252 + $0x160] sm:$0xff]
      %v327 = vld [vmem:[%s252 + $0x168] sm:$0xff]
      %v328 = vld [vmem:[%s252 + $0x170] sm:$0xff]
      %v329 = vld [vmem:[%s252 + $0x178] sm:$0xff]
      %v330 = vld [vmem:[%s252 + $0x180] sm:$0xff]
      %v331 = vld [vmem:[%s252 + $0x188] sm:$0xff]
      %v332 = vld [vmem:[%s252 + $0x190] sm:$0xff]
      %v333 = vld [vmem:[%s252 + $0x198] sm:$0xff]
      %v334 = vld [vmem:[%s252 + $0x1a0] sm:$0xff]
      %v335 = vld [vmem:[%s252 + $0x1a8] sm:$0xff]
      %v336 = vld [vmem:[%s252 + $0x1b0] sm:$0xff]
      %v337 = vld [vmem:[%s252 + $0x1b8] sm:$0xff]
      %v338 = vld [vmem:[%s252 + $0x1c0] sm:$0xff]
      %v339 = vld [vmem:[%s252 + $0x1c8] sm:$0xff]
      %v340 = vld [vmem:[%s252 + $0x1d0] sm:$0xff]
      %v341 = vld [vmem:[%s252 + $0x1d8] sm:$0xff]
      %v342 = vld [vmem:[%s252 + $0x1e0] sm:$0xff]
      %v343 = vld [vmem:[%s252 + $0x1e8] sm:$0xff]
      %v344 = vld [vmem:[%s252 + $0x1f0] sm:$0xff]
      %v345 = vld [vmem:[%s252 + $0x1f8] sm:$0xff]
      %v346 = vpack.c.bf16 %v284, %v282
      %v347 = vpack.c.bf16 %v285, %v283
      %v348 = vpack.c.bf16 %v288, %v286
      %v349 = vpack.c.bf16 %v289, %v287
      %v350 = vpack.c.bf16 %v292, %v290
      %v351 = vpack.c.bf16 %v293, %v291
      %v352 = vpack.c.bf16 %v296, %v294
      %v353 = vpack.c.bf16 %v297, %v295
      %v354 = vpack.c.bf16 %v300, %v298
      %v355 = vpack.c.bf16 %v301, %v299
      %v356 = vpack.c.bf16 %v304, %v302
      %v357 = vpack.c.bf16 %v305, %v303
      %v358 = vpack.c.bf16 %v308, %v306
      %v359 = vpack.c.bf16 %v309, %v307
      %v360 = vpack.c.bf16 %v312, %v310
      %v361 = vpack.c.bf16 %v313, %v311
      %v362 = vpack.c.bf16 %v316, %v314
      %v363 = vpack.c.bf16 %v317, %v315
      %v364 = vpack.c.bf16 %v320, %v318
      %v365 = vpack.c.bf16 %v321, %v319
      %v366 = vpack.c.bf16 %v324, %v322
      %v367 = vpack.c.bf16 %v325, %v323
      %v368 = vpack.c.bf16 %v328, %v326
      %v369 = vpack.c.bf16 %v329, %v327
      %v370 = vpack.c.bf16 %v332, %v330
      %v371 = vpack.c.bf16 %v333, %v331
      %v372 = vpack.c.bf16 %v336, %v334
      %v373 = vpack.c.bf16 %v337, %v335
      %v374 = vpack.c.bf16 %v340, %v338
      %v375 = vpack.c.bf16 %v341, %v339
      %v376 = vpack.c.bf16 %v344, %v342
      %v377 = vpack.c.bf16 %v345, %v343
      %v378 = vld [vmem:[%s1] sm:$0xff]
      %v379 = vld [vmem:[%s1 + $0x8] sm:$0xff]
      %v380 = vld [vmem:[%s1 + $0x10] sm:$0xff]
      %v381 = vld [vmem:[%s1 + $0x18] sm:$0xff]
      %v382 = vld [vmem:[%s1 + $0x20] sm:$0xff]
      %v383 = vld [vmem:[%s1 + $0x28] sm:$0xff]
      %v384 = vld [vmem:[%s1 + $0x30] sm:$0xff]
      %v385 = vld [vmem:[%s1 + $0x38] sm:$0xff]
      %v386 = vld [vmem:[%s1 + $0x40] sm:$0xff]
      %v387 = vld [vmem:[%s1 + $0x48] sm:$0xff]
      %v388 = vld [vmem:[%s1 + $0x50] sm:$0xff]
      %v389 = vld [vmem:[%s1 + $0x58] sm:$0xff]
      %v390 = vld [vmem:[%s1 + $0x60] sm:$0xff]
      %v391 = vld [vmem:[%s1 + $0x68] sm:$0xff]
      %v392 = vld [vmem:[%s1 + $0x70] sm:$0xff]
      %v393 = vld [vmem:[%s1 + $0x78] sm:$0xff]
      %v410 = vunpack.c.l.b16 %v378
      %v411 = vunpack.c.h.b16 %v378
      %v412 = vunpack.c.l.b16 %v379
      %v413 = vunpack.c.h.b16 %v379
      %v414 = vunpack.c.l.b16 %v380
      %v415 = vunpack.c.h.b16 %v380
      %v416 = vunpack.c.l.b16 %v381
      %v417 = vunpack.c.h.b16 %v381
      %v418 = vunpack.c.l.b16 %v382
      %v419 = vunpack.c.h.b16 %v382
      %v420 = vunpack.c.l.b16 %v383
      %v421 = vunpack.c.h.b16 %v383
      %v422 = vunpack.c.l.b16 %v384
      %v423 = vunpack.c.h.b16 %v384
      %v424 = vunpack.c.l.b16 %v385
      %v425 = vunpack.c.h.b16 %v385
      %v426 = vunpack.c.l.b16 %v386
      %v427 = vunpack.c.h.b16 %v386
      %v428 = vunpack.c.l.b16 %v387
      %v429 = vunpack.c.h.b16 %v387
      %v430 = vunpack.c.l.b16 %v388
      %v431 = vunpack.c.h.b16 %v388
      %v432 = vunpack.c.l.b16 %v389
      %v433 = vunpack.c.h.b16 %v389
      %v434 = vunpack.c.l.b16 %v390
      %v435 = vunpack.c.h.b16 %v390
      %v436 = vunpack.c.l.b16 %v391
      %v437 = vunpack.c.h.b16 %v391
      %v438 = vunpack.c.l.b16 %v392
      %v439 = vunpack.c.h.b16 %v392
      %v440 = vunpack.c.l.b16 %v393
      %v441 = vunpack.c.h.b16 %v393
      %v442 = vpack.c.b16 %v412, %v410
      %v443 = vpack.c.b16 %v413, %v411
      %v444 = vpack.c.b16 %v416, %v414
      %v445 = vpack.c.b16 %v417, %v415
      %v446 = vpack.c.b16 %v420, %v418
      %v447 = vpack.c.b16 %v421, %v419
      %v448 = vpack.c.b16 %v424, %v422
      %v449 = vpack.c.b16 %v425, %v423
      %v450 = vpack.c.b16 %v428, %v426
      %v451 = vpack.c.b16 %v429, %v427
      %v452 = vpack.c.b16 %v432, %v430
      %v453 = vpack.c.b16 %v433, %v431
      %v454 = vpack.c.b16 %v436, %v434
      %v455 = vpack.c.b16 %v437, %v435
      %v456 = vpack.c.b16 %v440, %v438
      %v457 = vpack.c.b16 %v441, %v439
      %474 = vmatpush.bf16.msra.mxu0 %v360
      %475 = vmatpush.bf16.msra.mxu0 %v358
      %476 = vmatpush.bf16.msra.mxu0 %v356
      %477 = vmatpush.bf16.msra.mxu0 %v354
      %478 = vmatpush.bf16.msra.mxu0 %v352
      %479 = vmatpush.bf16.msra.mxu0 %v350
      %480 = vmatpush.bf16.msra.mxu0 %v348
      %481 = vmatpush.bf16.msra.mxu0 %v346
      %482 = vmatmul.bf16.gmra.mxu0 %v442
      %v483 = vpop.f32.mrf.mxu0
      %v484 = vadd.f32 0.0, %v483
      %v485 = vpop.f32.mrf.mxu0
      %v486 = vadd.f32 0.0, %v485
      %487 = vmatmul.bf16.gmra.mxu0 %v444
      %v488 = vpop.f32.mrf.mxu0
      %v489 = vadd.f32 0.0, %v488
      %v490 = vpop.f32.mrf.mxu0
      %v491 = vadd.f32 0.0, %v490
      %492 = vmatmul.bf16.gmra.mxu0 %v446
      %v493 = vpop.f32.mrf.mxu0
      %v494 = vadd.f32 0.0, %v493
      %v495 = vpop.f32.mrf.mxu0
      %v496 = vadd.f32 0.0, %v495
      %497 = vmatmul.bf16.gmra.mxu0 %v448
      %v498 = vpop.f32.mrf.mxu0
      %v499 = vadd.f32 0.0, %v498
      %v500 = vpop.f32.mrf.mxu0
      %v501 = vadd.f32 0.0, %v500
      %502 = vmatmul.bf16.gmra.mxu0 %v450
      %v503 = vpop.f32.mrf.mxu0
      %v504 = vadd.f32 0.0, %v503
      %v505 = vpop.f32.mrf.mxu0
      %v506 = vadd.f32 0.0, %v505
      %507 = vmatmul.bf16.gmra.mxu0 %v452
      %v508 = vpop.f32.mrf.mxu0
      %v509 = vadd.f32 0.0, %v508
      %v510 = vpop.f32.mrf.mxu0
      %v511 = vadd.f32 0.0, %v510
      %512 = vmatmul.bf16.gmra.mxu0 %v454
      %v513 = vpop.f32.mrf.mxu0
      %v514 = vadd.f32 0.0, %v513
      %v515 = vpop.f32.mrf.mxu0
      %v516 = vadd.f32 0.0, %v515
      %517 = vmatmul.bf16.gmra.mxu0 %v456
      %v518 = vpop.f32.mrf.mxu0
      %v519 = vadd.f32 0.0, %v518
      %v520 = vpop.f32.mrf.mxu0
      %v521 = vadd.f32 0.0, %v520
      %522 = vdwg.mxu0
      %523 = vmatpush.bf16.msra.mxu0 %v376
      %524 = vmatpush.bf16.msra.mxu0 %v374
      %525 = vmatpush.bf16.msra.mxu0 %v372
      %526 = vmatpush.bf16.msra.mxu0 %v370
      %527 = vmatpush.bf16.msra.mxu0 %v368
      %528 = vmatpush.bf16.msra.mxu0 %v366
      %529 = vmatpush.bf16.msra.mxu0 %v364
      %530 = vmatpush.bf16.msra.mxu0 %v362
      %531 = vmatmul.bf16.gmra.mxu0 %v443
      %v532 = vpop.f32.mrf.mxu0
      %v533 = vadd.f32 %v484, %v532
      %v534 = vpop.f32.mrf.mxu0
      %v535 = vadd.f32 %v486, %v534
      %536 = vmatmul.bf16.gmra.mxu0 %v445
      %v537 = vpop.f32.mrf.mxu0
      %v538 = vadd.f32 %v489, %v537
      %v539 = vpop.f32.mrf.mxu0
      %v540 = vadd.f32 %v491, %v539
      %541 = vmatmul.bf16.gmra.mxu0 %v447
      %v542 = vpop.f32.mrf.mxu0
      %v543 = vadd.f32 %v494, %v542
      %v544 = vpop.f32.mrf.mxu0
      %v545 = vadd.f32 %v496, %v544
      %546 = vmatmul.bf16.gmra.mxu0 %v449
      %v547 = vpop.f32.mrf.mxu0
      %v548 = vadd.f32 %v499, %v547
      %v549 = vpop.f32.mrf.mxu0
      %v550 = vadd.f32 %v501, %v549
      %551 = vmatmul.bf16.gmra.mxu0 %v451
      %v552 = vpop.f32.mrf.mxu0
      %v553 = vadd.f32 %v504, %v552
      %v554 = vpop.f32.mrf.mxu0
      %v555 = vadd.f32 %v506, %v554
      %556 = vmatmul.bf16.gmra.mxu0 %v453
      %v557 = vpop.f32.mrf.mxu0
      %v558 = vadd.f32 %v509, %v557
      %v559 = vpop.f32.mrf.mxu0
      %v560 = vadd.f32 %v511, %v559
      %561 = vmatmul.bf16.gmra.mxu0 %v455
      %v562 = vpop.f32.mrf.mxu0
      %v563 = vadd.f32 %v514, %v562
      %v564 = vpop.f32.mrf.mxu0
      %v565 = vadd.f32 %v516, %v564
      %566 = vmatmul.bf16.gmra.mxu0 %v457
      %v567 = vpop.f32.mrf.mxu0
      %v568 = vadd.f32 %v519, %v567
      %v569 = vpop.f32.mrf.mxu0
      %v570 = vadd.f32 %v521, %v569
      %571 = vdwg.mxu0
      %572 = vmatpush.bf16.msra.mxu0 %v361
      %573 = vmatpush.bf16.msra.mxu0 %v359
      %574 = vmatpush.bf16.msra.mxu0 %v357
      %575 = vmatpush.bf16.msra.mxu0 %v355
      %576 = vmatpush.bf16.msra.mxu0 %v353
      %577 = vmatpush.bf16.msra.mxu0 %v351
      %578 = vmatpush.bf16.msra.mxu0 %v349
      %579 = vmatpush.bf16.msra.mxu0 %v347
      %580 = vmatmul.bf16.gmra.mxu0 %v442
      %v581 = vpop.f32.mrf.mxu0
      %v582 = vadd.f32 0.0, %v581
      %v583 = vpop.f32.mrf.mxu0
      %v584 = vadd.f32 0.0, %v583
      %585 = vmatmul.bf16.gmra.mxu0 %v444
      %v586 = vpop.f32.mrf.mxu0
      %v587 = vadd.f32 0.0, %v586
      %v588 = vpop.f32.mrf.mxu0
      %v589 = vadd.f32 0.0, %v588
      %590 = vmatmul.bf16.gmra.mxu0 %v446
      %v591 = vpop.f32.mrf.mxu0
      %v592 = vadd.f32 0.0, %v591
      %v593 = vpop.f32.mrf.mxu0
      %v594 = vadd.f32 0.0, %v593
      %595 = vmatmul.bf16.gmra.mxu0 %v448
      %v596 = vpop.f32.mrf.mxu0
      %v597 = vadd.f32 0.0, %v596
      %v598 = vpop.f32.mrf.mxu0
      %v599 = vadd.f32 0.0, %v598
      %600 = vmatmul.bf16.gmra.mxu0 %v450
      %v601 = vpop.f32.mrf.mxu0
      %v602 = vadd.f32 0.0, %v601
      %v603 = vpop.f32.mrf.mxu0
      %v604 = vadd.f32 0.0, %v603
      %605 = vmatmul.bf16.gmra.mxu0 %v452
      %v606 = vpop.f32.mrf.mxu0
      %v607 = vadd.f32 0.0, %v606
      %v608 = vpop.f32.mrf.mxu0
      %v609 = vadd.f32 0.0, %v608
      %610 = vmatmul.bf16.gmra.mxu0 %v454
      %v611 = vpop.f32.mrf.mxu0
      %v612 = vadd.f32 0.0, %v611
      %v613 = vpop.f32.mrf.mxu0
      %v614 = vadd.f32 0.0, %v613
      %615 = vmatmul.bf16.gmra.mxu0 %v456
      %v616 = vpop.f32.mrf.mxu0
      %v617 = vadd.f32 0.0, %v616
      %v618 = vpop.f32.mrf.mxu0
      %v619 = vadd.f32 0.0, %v618
      %620 = vdwg.mxu0
      %621 = vmatpush.bf16.msra.mxu0 %v377
      %622 = vmatpush.bf16.msra.mxu0 %v375
      %623 = vmatpush.bf16.msra.mxu0 %v373
      %624 = vmatpush.bf16.msra.mxu0 %v371
      %625 = vmatpush.bf16.msra.mxu0 %v369
      %626 = vmatpush.bf16.msra.mxu0 %v367
      %627 = vmatpush.bf16.msra.mxu0 %v365
      %628 = vmatpush.bf16.msra.mxu0 %v363
      %629 = vmatmul.bf16.gmra.mxu0 %v443
      %v630 = vpop.f32.mrf.mxu0
      %v631 = vadd.f32 %v582, %v630
      %v632 = vpop.f32.mrf.mxu0
      %v633 = vadd.f32 %v584, %v632
      %634 = vmatmul.bf16.gmra.mxu0 %v445
      %v635 = vpop.f32.mrf.mxu0
      %v636 = vadd.f32 %v587, %v635
      %v637 = vpop.f32.mrf.mxu0
      %v638 = vadd.f32 %v589, %v637
      %639 = vmatmul.bf16.gmra.mxu0 %v447
      %v640 = vpop.f32.mrf.mxu0
      %v641 = vadd.f32 %v592, %v640
      %v642 = vpop.f32.mrf.mxu0
      %v643 = vadd.f32 %v594, %v642
      %644 = vmatmul.bf16.gmra.mxu0 %v449
      %v645 = vpop.f32.mrf.mxu0
      %v646 = vadd.f32 %v597, %v645
      %v647 = vpop.f32.mrf.mxu0
      %v648 = vadd.f32 %v599, %v647
      %649 = vmatmul.bf16.gmra.mxu0 %v451
      %v650 = vpop.f32.mrf.mxu0
      %v651 = vadd.f32 %v602, %v650
      %v652 = vpop.f32.mrf.mxu0
      %v653 = vadd.f32 %v604, %v652
      %654 = vmatmul.bf16.gmra.mxu0 %v453
      %v655 = vpop.f32.mrf.mxu0
      %v656 = vadd.f32 %v607, %v655
      %v657 = vpop.f32.mrf.mxu0
      %v658 = vadd.f32 %v609, %v657
      %659 = vmatmul.bf16.gmra.mxu0 %v455
      %v660 = vpop.f32.mrf.mxu0
      %v661 = vadd.f32 %v612, %v660
      %v662 = vpop.f32.mrf.mxu0
      %v663 = vadd.f32 %v614, %v662
      %664 = vmatmul.bf16.gmra.mxu0 %v457
      %v665 = vpop.f32.mrf.mxu0
      %v666 = vadd.f32 %v617, %v665
      %v667 = vpop.f32.mrf.mxu0
      %v668 = vadd.f32 %v619, %v667
      %669 = vdwg.mxu0
      %v670 = vpack.c.bf16 %v631, %v533
      %v671 = vpack.c.bf16 %v633, %v535
      %v672 = vpack.c.bf16 %v636, %v538
      %v673 = vpack.c.bf16 %v638, %v540
      %v674 = vpack.c.bf16 %v641, %v543
      %v675 = vpack.c.bf16 %v643, %v545
      %v676 = vpack.c.bf16 %v646, %v548
      %v677 = vpack.c.bf16 %v648, %v550
      %v678 = vpack.c.bf16 %v651, %v553
      %v679 = vpack.c.bf16 %v653, %v555
      %v680 = vpack.c.bf16 %v656, %v558
      %v681 = vpack.c.bf16 %v658, %v560
      %v682 = vpack.c.bf16 %v661, %v563
      %v683 = vpack.c.bf16 %v663, %v565
      %v684 = vpack.c.bf16 %v666, %v568
      %v685 = vpack.c.bf16 %v668, %v570
      %686 = vst [vmem:[%s262] sm:$0xff] %v670
      %687 = vst [vmem:[%s262 + $0x8] sm:$0xff] %v671
      %688 = vst [vmem:[%s262 + $0x10] sm:$0xff] %v672
      %689 = vst [vmem:[%s262 + $0x18] sm:$0xff] %v673
      %690 = vst [vmem:[%s262 + $0x20] sm:$0xff] %v674
      %691 = vst [vmem:[%s262 + $0x28] sm:$0xff] %v675
      %692 = vst [vmem:[%s262 + $0x30] sm:$0xff] %v676
      %693 = vst [vmem:[%s262 + $0x38] sm:$0xff] %v677
      %694 = vst [vmem:[%s262 + $0x40] sm:$0xff] %v678
      %695 = vst [vmem:[%s262 + $0x48] sm:$0xff] %v679
      %696 = vst [vmem:[%s262 + $0x50] sm:$0xff] %v680
      %697 = vst [vmem:[%s262 + $0x58] sm:$0xff] %v681
      %698 = vst [vmem:[%s262 + $0x60] sm:$0xff] %v682
      %699 = vst [vmem:[%s262 + $0x68] sm:$0xff] %v683
      %700 = vst [vmem:[%s262 + $0x70] sm:$0xff] %v684
      %701 = vst [vmem:[%s262 + $0x78] sm:$0xff] %v685
      %v702 = vadd.f32 %v533, %v631
      %703 = vadd.xlane.f32.xlu0 %v702
      %v704 = vpop.xlane.xlu0 %703
      %v705 = vadd.f32 %v535, %v633
      %706 = vadd.xlane.f32.xlu0 %v705
      %v707 = vpop.xlane.xlu0 %706
      %v708 = vadd.f32 %v538, %v636
      %709 = vadd.xlane.f32.xlu0 %v708
      %v710 = vpop.xlane.xlu0 %709
      %v711 = vadd.f32 %v540, %v638
      %712 = vadd.xlane.f32.xlu0 %v711
      %v713 = vpop.xlane.xlu0 %712
      %v714 = vadd.f32 %v543, %v641
      %715 = vadd.xlane.f32.xlu0 %v714
      %v716 = vpop.xlane.xlu0 %715
      %v717 = vadd.f32 %v545, %v643
      %718 = vadd.xlane.f32.xlu0 %v717
      %v719 = vpop.xlane.xlu0 %718
      %v720 = vadd.f32 %v548, %v646
      %721 = vadd.xlane.f32.xlu0 %v720
      %v722 = vpop.xlane.xlu0 %721
      %v723 = vadd.f32 %v550, %v648
      %724 = vadd.xlane.f32.xlu0 %v723
      %v725 = vpop.xlane.xlu0 %724
      %v726 = vadd.f32 %v553, %v651
      %727 = vadd.xlane.f32.xlu0 %v726
      %v728 = vpop.xlane.xlu0 %727
      %v729 = vadd.f32 %v555, %v653
      %730 = vadd.xlane.f32.xlu0 %v729
      %v731 = vpop.xlane.xlu0 %730
      %v732 = vadd.f32 %v558, %v656
      %733 = vadd.xlane.f32.xlu0 %v732
      %v734 = vpop.xlane.xlu0 %733
      %v735 = vadd.f32 %v560, %v658
      %736 = vadd.xlane.f32.xlu0 %v735
      %v737 = vpop.xlane.xlu0 %736
      %v738 = vadd.f32 %v563, %v661
      %739 = vadd.xlane.f32.xlu0 %v738
      %v740 = vpop.xlane.xlu0 %739
      %v741 = vadd.f32 %v565, %v663
      %742 = vadd.xlane.f32.xlu0 %v741
      %v743 = vpop.xlane.xlu0 %742
      %v744 = vadd.f32 %v568, %v666
      %745 = vadd.xlane.f32.xlu0 %v744
      %v746 = vpop.xlane.xlu0 %745
      %v747 = vadd.f32 %v570, %v668
      %748 = vadd.xlane.f32.xlu0 %v747
      %v749 = vpop.xlane.xlu0 %748
      %v750 = vrcp.pop 256.0
      %v751 = vmul.f32 256.0, %v750
      %v752 = vsub.f32 1.0, %v751
      %v753 = vmul.f32 %v750, %v752
      %v754 = vadd.f32 %v750, %v753
      %vm755 = vweird.f32 %v750
      %v756 = vsel %vm755, %v750, %v754
      %v757 = vmul.f32 %v704, %v756
      %v758 = vmul.f32 %v707, %v756
      %v759 = vmul.f32 %v710, %v756
      %v760 = vmul.f32 %v713, %v756
      %v761 = vmul.f32 %v716, %v756
      %v762 = vmul.f32 %v719, %v756
      %v763 = vmul.f32 %v722, %v756
      %v764 = vmul.f32 %v725, %v756
      %v765 = vmul.f32 %v728, %v756
      %v766 = vmul.f32 %v731, %v756
      %v767 = vmul.f32 %v734, %v756
      %v768 = vmul.f32 %v737, %v756
      %v769 = vmul.f32 %v740, %v756
      %v770 = vmul.f32 %v743, %v756
      %v771 = vmul.f32 %v746, %v756
      %v772 = vmul.f32 %v749, %v756
      %vm773 = vcmask 7168
      %774 = vst.msk [vmem:[%s272] sm:$0xff] %vm773, %v757
      %775 = vst.msk [vmem:[%s272 + $0x8] sm:$0xff] %vm773, %v758
      %776 = vst.msk [vmem:[%s272 + $0x10] sm:$0xff] %vm773, %v759
      %777 = vst.msk [vmem:[%s272 + $0x18] sm:$0xff] %vm773, %v760
      %778 = vst.msk [vmem:[%s272 + $0x20] sm:$0xff] %vm773, %v761
      %779 = vst.msk [vmem:[%s272 + $0x28] sm:$0xff] %vm773, %v762
      %780 = vst.msk [vmem:[%s272 + $0x30] sm:$0xff] %vm773, %v763
      %781 = vst.msk [vmem:[%s272 + $0x38] sm:$0xff] %vm773, %v764
      %782 = vst.msk [vmem:[%s272 + $0x40] sm:$0xff] %vm773, %v765
      %783 = vst.msk [vmem:[%s272 + $0x48] sm:$0xff] %vm773, %v766
      %784 = vst.msk [vmem:[%s272 + $0x50] sm:$0xff] %vm773, %v767
      %785 = vst.msk [vmem:[%s272 + $0x58] sm:$0xff] %vm773, %v768
      %786 = vst.msk [vmem:[%s272 + $0x60] sm:$0xff] %vm773, %v769
      %787 = vst.msk [vmem:[%s272 + $0x68] sm:$0xff] %vm773, %v770
      %788 = vst.msk [vmem:[%s272 + $0x70] sm:$0xff] %vm773, %v771
      %789 = vst.msk [vmem:[%s272 + $0x78] sm:$0xff] %vm773, %v772
      %v790 = vsub.f32 %v533, %v757
      %v791 = vsub.f32 %v631, %v757
      %v792 = vsub.f32 %v535, %v758
      %v793 = vsub.f32 %v633, %v758
      %v794 = vsub.f32 %v538, %v759
      %v795 = vsub.f32 %v636, %v759
      %v796 = vsub.f32 %v540, %v760
      %v797 = vsub.f32 %v638, %v760
      %v798 = vsub.f32 %v543, %v761
      %v799 = vsub.f32 %v641, %v761
      %v800 = vsub.f32 %v545, %v762
      %v801 = vsub.f32 %v643, %v762
      %v802 = vsub.f32 %v548, %v763
      %v803 = vsub.f32 %v646, %v763
      %v804 = vsub.f32 %v550, %v764
      %v805 = vsub.f32 %v648, %v764
      %v806 = vsub.f32 %v553, %v765
      %v807 = vsub.f32 %v651, %v765
      %v808 = vsub.f32 %v555, %v766
      %v809 = vsub.f32 %v653, %v766
      %v810 = vsub.f32 %v558, %v767
      %v811 = vsub.f32 %v656, %v767
      %v812 = vsub.f32 %v560, %v768
      %v813 = vsub.f32 %v658, %v768
      %v814 = vsub.f32 %v563, %v769
      %v815 = vsub.f32 %v661, %v769
      %v816 = vsub.f32 %v565, %v770
      %v817 = vsub.f32 %v663, %v770
      %v818 = vsub.f32 %v568, %v771
      %v819 = vsub.f32 %v666, %v771
      %v820 = vsub.f32 %v570, %v772
      %v821 = vsub.f32 %v668, %v772
      %v822 = vmul.f32 %v790, %v790
      %v823 = vmul.f32 %v791, %v791
      %v824 = vmul.f32 %v792, %v792
      %v825 = vmul.f32 %v793, %v793
      %v826 = vmul.f32 %v794, %v794
      %v827 = vmul.f32 %v795, %v795
      %v828 = vmul.f32 %v796, %v796
      %v829 = vmul.f32 %v797, %v797
      %v830 = vmul.f32 %v798, %v798
      %v831 = vmul.f32 %v799, %v799
      %v832 = vmul.f32 %v800, %v800
      %v833 = vmul.f32 %v801, %v801
      %v834 = vmul.f32 %v802, %v802
      %v835 = vmul.f32 %v803, %v803
      %v836 = vmul.f32 %v804, %v804
      %v837 = vmul.f32 %v805, %v805
      %v838 = vmul.f32 %v806, %v806
      %v839 = vmul.f32 %v807, %v807
      %v840 = vmul.f32 %v808, %v808
      %v841 = vmul.f32 %v809, %v809
      %v842 = vmul.f32 %v810, %v810
      %v843 = vmul.f32 %v811, %v811
      %v844 = vmul.f32 %v812, %v812
      %v845 = vmul.f32 %v813, %v813
      %v846 = vmul.f32 %v814, %v814
      %v847 = vmul.f32 %v815, %v815
      %v848 = vmul.f32 %v816, %v816
      %v849 = vmul.f32 %v817, %v817
      %v850 = vmul.f32 %v818, %v818
      %v851 = vmul.f32 %v819, %v819
      %v852 = vmul.f32 %v820, %v820
      %v853 = vmul.f32 %v821, %v821
      %v854 = vadd.f32 %v822, %v823
      %855 = vadd.xlane.f32.xlu0 %v854
      %v856 = vpop.xlane.xlu0 %855
      %v857 = vadd.f32 %v824, %v825
      %858 = vadd.xlane.f32.xlu0 %v857
      %v859 = vpop.xlane.xlu0 %858
      %v860 = vadd.f32 %v826, %v827
      %861 = vadd.xlane.f32.xlu0 %v860
      %v862 = vpop.xlane.xlu0 %861
      %v863 = vadd.f32 %v828, %v829
      %864 = vadd.xlane.f32.xlu0 %v863
      %v865 = vpop.xlane.xlu0 %864
      %v866 = vadd.f32 %v830, %v831
      %867 = vadd.xlane.f32.xlu0 %v866
      %v868 = vpop.xlane.xlu0 %867
      %v869 = vadd.f32 %v832, %v833
      %870 = vadd.xlane.f32.xlu0 %v869
      %v871 = vpop.xlane.xlu0 %870
      %v872 = vadd.f32 %v834, %v835
      %873 = vadd.xlane.f32.xlu0 %v872
      %v874 = vpop.xlane.xlu0 %873
      %v875 = vadd.f32 %v836, %v837
      %876 = vadd.xlane.f32.xlu0 %v875
      %v877 = vpop.xlane.xlu0 %876
      %v878 = vadd.f32 %v838, %v839
      %879 = vadd.xlane.f32.xlu0 %v878
      %v880 = vpop.xlane.xlu0 %879
      %v881 = vadd.f32 %v840, %v841
      %882 = vadd.xlane.f32.xlu0 %v881
      %v883 = vpop.xlane.xlu0 %882
      %v884 = vadd.f32 %v842, %v843
      %885 = vadd.xlane.f32.xlu0 %v884
      %v886 = vpop.xlane.xlu0 %885
      %v887 = vadd.f32 %v844, %v845
      %888 = vadd.xlane.f32.xlu0 %v887
      %v889 = vpop.xlane.xlu0 %888
      %v890 = vadd.f32 %v846, %v847
      %891 = vadd.xlane.f32.xlu0 %v890
      %v892 = vpop.xlane.xlu0 %891
      %v893 = vadd.f32 %v848, %v849
      %894 = vadd.xlane.f32.xlu0 %v893
      %v895 = vpop.xlane.xlu0 %894
      %v896 = vadd.f32 %v850, %v851
      %897 = vadd.xlane.f32.xlu0 %v896
      %v898 = vpop.xlane.xlu0 %897
      %v899 = vadd.f32 %v852, %v853
      %900 = vadd.xlane.f32.xlu0 %v899
      %v901 = vpop.xlane.xlu0 %900
      %902 = vst.msk [vmem:[%s281] sm:$0xff] %vm773, %v856
      %903 = vst.msk [vmem:[%s281 + $0x8] sm:$0xff] %vm773, %v859
      %904 = vst.msk [vmem:[%s281 + $0x10] sm:$0xff] %vm773, %v862
      %905 = vst.msk [vmem:[%s281 + $0x18] sm:$0xff] %vm773, %v865
      %906 = vst.msk [vmem:[%s281 + $0x20] sm:$0xff] %vm773, %v868
      %907 = vst.msk [vmem:[%s281 + $0x28] sm:$0xff] %vm773, %v871
      %908 = vst.msk [vmem:[%s281 + $0x30] sm:$0xff] %vm773, %v874
      %909 = vst.msk [vmem:[%s281 + $0x38] sm:$0xff] %vm773, %v877
      %910 = vst.msk [vmem:[%s281 + $0x40] sm:$0xff] %vm773, %v880
      %911 = vst.msk [vmem:[%s281 + $0x48] sm:$0xff] %vm773, %v883
      %912 = vst.msk [vmem:[%s281 + $0x50] sm:$0xff] %vm773, %v886
      %913 = vst.msk [vmem:[%s281 + $0x58] sm:$0xff] %vm773, %v889
      %914 = vst.msk [vmem:[%s281 + $0x60] sm:$0xff] %vm773, %v892
      %915 = vst.msk [vmem:[%s281 + $0x68] sm:$0xff] %vm773, %v895
      %916 = vst.msk [vmem:[%s281 + $0x70] sm:$0xff] %vm773, %v898
      %917 = vst.msk [vmem:[%s281 + $0x78] sm:$0xff] %vm773, %v901
      %s918 = smul.u32 2, %s21
      %p919 = scmp.lt.s32.totalorder %s20, 1
      %s920 = scalar_select %p919, %s20, 1
      %p921 = scmp.lt.s32.totalorder %s918, 1
      %s922 = scalar_select %p921, %s918, 1
      %s923 = smul.addr %s920, 32
      %s924 = sadd.s32 %s922, %s923
      %s925 = smul.addr %s924, 4
      %s926 = scalar_lea.vmem %s2, %s925
      %p927 = scmp.lt.s32.totalorder %s20, 1
      %s928 = scalar_select %p927, %s20, 1
      %p929 = scmp.lt.s32.totalorder %s21, 0
      %s930 = scalar_select %p929, %s21, 0
      %s931 = smul.addr %s930, 16
      %s932 = smul.addr %s928, 16
      %s933 = sadd.s32 %s931, %s932
      %s934 = smul.addr %s933, 8
      %s935 = scalar_lea.vmem %s3, %s934
      %p936 = scmp.lt.s32.totalorder %s20, 1
      %s937 = scalar_select %p936, %s20, 1
      %p938 = scmp.lt.s32.totalorder %s21, 0
      %s939 = scalar_select %p938, %s21, 0
      %s940 = smul.addr %s939, 16
      %s941 = smul.addr %s937, 16
      %s942 = sadd.s32 %s940, %s941
      %s943 = smul.addr %s942, 8
      %s944 = scalar_lea.vmem %s4, %s943
      // Predicated region
      $region29: #{upsample_forward.2} parent=27 // pred_check
        %p945 = pneg %p97
      $region30: #{upsample_forward.2} parent=27 // pred_check_branch
        %947 = sbr.rel (%p945) target = $region32
      $region31: #{upsample_forward.2} parent=27 // pred_region
        %s948 = smul.u32 2, %s21
      $region32: #{upsample_forward.2} parent=27 // pred_fallthru
        _
      // Predicated region
      $region33: #{upsample_forward.2} parent=27 // pred_check
        %p949 = pneg %p125
      $region34: #{upsample_forward.2} parent=27 // pred_check_branch
        %951 = sbr.rel (%p949) target = $region36
      $region35: #{upsample_forward.2} parent=27 // pred_region
        _
      $region36: #{upsample_forward.2} parent=27 // pred_fallthru
        _
      // Predicated region
      $region37: #{upsample_forward.2} parent=27 // pred_check
        %p952 = pneg %p153
      $region38: #{upsample_forward.2} parent=27 // pred_check_branch
        %954 = sbr.rel (%p952) target = $region40
      $region39: #{upsample_forward.2} parent=27 // pred_region
        _
      $region40: #{upsample_forward.2} parent=27 // pred_fallthru
        _
    $region28: #{upsample_forward.2} parent=5 // pred_fallthru
      _
    %p955 = scmp.le.s32.totalorder 2, %s11
    // Predicated region
    $region41: #{upsample_forward.2} parent=5 // pred_check
      %p956 = pneg %p955
    $region42: #{upsample_forward.2} parent=5 // pred_check_branch
      %958 = sbr.rel (%p956) target = $region44
    $region43: #{upsample_forward.2} parent=5 // pred_region
      %s959 = ssub.s32 %s11, 2
      // Predicated region
      $region45: #{upsample_forward.2} parent=43 // pred_check
        %p960 = pneg %p103
      $region46: #{upsample_forward.2} parent=43 // pred_check_branch
        %962 = sbr.rel (%p960) target = $region48
      $region47: #{upsample_forward.2} parent=43 // pred_region
        %s963 = smul.u32 2, %s23
        %p964 = scmp.lt.s32.totalorder %s22, 1
        %s965 = scalar_select %p964, %s22, 1
        %p966 = scmp.lt.s32.totalorder %s963, 1
        %s967 = scalar_select %p966, %s963, 1
        %s968 = smul.addr %s965, 32
        %s969 = sadd.s32 %s967, %s968
        %s970 = smul.addr %s969, 4
        %s971 = scalar_lea.vmem %s2, %s970
      $region48: #{upsample_forward.2} parent=43 // pred_fallthru
        _
      // Predicated region
      $region49: #{upsample_forward.2} parent=43 // pred_check
        %p972 = pneg %p131
      $region50: #{upsample_forward.2} parent=43 // pred_check_branch
        %974 = sbr.rel (%p972) target = $region52
      $region51: #{upsample_forward.2} parent=43 // pred_region
        %p975 = scmp.lt.s32.totalorder %s22, 1
        %s976 = scalar_select %p975, %s22, 1
        %p977 = scmp.lt.s32.totalorder %s23, 0
        %s978 = scalar_select %p977, %s23, 0
        %s979 = smul.addr %s978, 16
        %s980 = smul.addr %s976, 16
        %s981 = sadd.s32 %s979, %s980
        %s982 = smul.addr %s981, 8
        %s983 = scalar_lea.vmem %s3, %s982
      $region52: #{upsample_forward.2} parent=43 // pred_fallthru
        _
      // Predicated region
      $region53: #{upsample_forward.2} parent=43 // pred_check
        %p984 = pneg %p159
      $region54: #{upsample_forward.2} parent=43 // pred_check_branch
        %986 = sbr.rel (%p984) target = $region56
      $region55: #{upsample_forward.2} parent=43 // pred_region
        %p987 = scmp.lt.s32.totalorder %s22, 1
        %s988 = scalar_select %p987, %s22, 1
        %p989 = scmp.lt.s32.totalorder %s23, 0
        %s990 = scalar_select %p989, %s23, 0
        %s991 = smul.addr %s990, 16
        %s992 = smul.addr %s988, 16
        %s993 = sadd.s32 %s991, %s992
        %s994 = smul.addr %s993, 8
        %s995 = scalar_lea.vmem %s4, %s994
      $region56: #{upsample_forward.2} parent=43 // pred_fallthru
        _
    $region44: #{upsample_forward.2} parent=5 // pred_fallthru
      _
  $region6: #{upsample_forward.2} parent=0 // loop_footer
    %s15 = sadd.s32 1, %s11
  $region7: #{upsample_forward.2} parent=0 // loop_footer_branch
    %10 = sbr.rel target = $region3
  $region8: #{upsample_forward.2} parent=0 // loop_exit
    _

// kernel: upsample_forward.3
$region0: #{upsample_forward.3}
  #allocation0 [shape = 'u32[]', space=smem, size = 0x4, offset = 0x4, fixed_abs, tag = 'smem constant byte address 0x4 - core index']
  #allocation1 [shape = 'u32[72,128]{1,0:T(1,128)}', space=vmem, size = 0x9000, scoped, tag = 'internal scratch']
  %s0 = inlined_call_operand.vmem [shape: bf16[2,128,256], index: 0, kind: input, shape index: {}]
  %s1 = inlined_call_operand.vmem [shape: f32[128,1], index: 1, kind: input, shape index: {}]
  %s2 = inlined_call_operand.vmem [shape: f32[128,1], index: 2, kind: input, shape index: {}]
  %s3 = inlined_call_operand.vmem [shape: bf16[256,1024], index: 3, kind: input, shape index: {}]
  %s4 = inlined_call_operand.vmem [shape: f32[2,128,1024], index: 4, kind: output, shape index: {}]
  %s5 = sld [smem:[#allocation0]]
  $region49: #{upsample_forward.3} parent=0
    _
  %s7 = ssub.s32 1, %s5
  %s8 = scalar_select 0, %s7, %s5
  loop: start=0, step=1, limit=4
  $region2: #{upsample_forward.3} parent=0 // loop_pre_header
    _
  $region3: #{upsample_forward.3} parent=0 // loop_header
    %s10 = sphi 0, %s14
    %p11 = scmp.ge.s32.totalorder %s10, 4
    %s17 = sphi 0, %s36
    %s18 = sphi 0, %s32
    %s19 = sphi 0, %s28
    %s20 = sphi 0, %s17
    %s21 = sphi 0, %s18
    %s22 = sphi 0, %s19
    %s23 = sphi 0, %s20
    %s24 = sphi 0, %s21
    %s25 = sphi 0, %s22
    %s43 = sphi 0, %s45
    %s46 = sphi 0, %s43
    %s47 = sphi 0, %s46
    %s63 = sphi 0, %s47
    %s69 = sphi 0, %s71
    %s72 = sphi 0, %s69
    %s73 = sphi 0, %s72
    %s89 = sphi 0, %s73
    %s95 = sphi 0, %s97
    %s98 = sphi 0, %s95
    %s99 = sphi 0, %s98
    %s115 = sphi 0, %s99
    %s119 = sphi 0, %s119
    %s121 = sphi 0, %s119
    %s122 = sphi 0, %s121
    %s136 = sphi 0, %s122
    %s146 = sphi 0, %s148
    %s149 = sphi 0, %s146
    %s150 = sphi 0, %s149
    %s166 = sphi 0, %s150
  $region4: #{upsample_forward.3} parent=0 // loop_header_branch
    %13 = sbr.rel (%p11) target = $region8
  $region5: #{upsample_forward.3} parent=0 // loop_body
    %s15 = ssub.s32 %s10, 1
    %s16 = ssub.s32 %s10, 2
    %s26 = sadd.s32 1, %s19
    %p27 = scmp.ge.s32.totalorder %s26, 1
    %s28 = scalar_select %p27, 0, %s26
    %s29 = sadd.s32 1, %s18
    %s30 = scalar_select %p27, %s29, %s18
    %p31 = scmp.ge.s32.totalorder %s30, 1
    %s32 = scalar_select %p31, 0, %s30
    %s33 = sadd.s32 1, %s17
    %s34 = scalar_select %p31, %s33, %s17
    %p35 = scmp.ge.s32.totalorder %s34, 2
    %s36 = scalar_select %p35, 0, %s34
    %s37 = ssub.s32 %s17, %s36
    %s38 = ssub.s32 %s18, %s32
    %s39 = sor.u32 %s37, %s38
    %s40 = ssub.s32 %s19, %s28
    %s41 = sor.u32 %s39, %s40
    %p42 = scmp.eq.s32.totalorder %s41, 0
    %s44 = sadd.s32 %s43, 1
    %s45 = scalar_select %p42, %s43, %s44
    %p48 = pneg %p42
    %p49 = scmp.eq.s32.totalorder %s10, 1
    %p50 = por %p48, %p49
    %p51 = scmp.ne.s32.totalorder %s43, %s46
    %p52 = scmp.eq.s32.totalorder %s10, 0
    %p53 = por %p51, %p52
    %p54 = scmp.ne.s32.totalorder %s43, %s46
    %p55 = scmp.eq.s32.totalorder %s15, 1
    %p56 = por %p54, %p55
    %p57 = scmp.ne.s32.totalorder %s46, %s47
    %p58 = scmp.eq.s32.totalorder %s15, 0
    %p59 = por %p57, %p58
    %p60 = scmp.ne.s32.totalorder %s46, %s47
    %p61 = scmp.eq.s32.totalorder %s16, 1
    %p62 = por %p60, %p61
    %p64 = scmp.ne.s32.totalorder %s47, %s63
    %p65 = scmp.eq.s32.totalorder %s16, 0
    %p66 = por %p64, %p65
    %s67 = ssub.s32 %s18, %s32
    %p68 = scmp.eq.s32.totalorder %s67, 0
    %s70 = sadd.s32 %s69, 1
    %s71 = scalar_select %p68, %s69, %s70
    %p74 = pneg %p68
    %p75 = scmp.eq.s32.totalorder %s10, 1
    %p76 = por %p74, %p75
    %p77 = scmp.ne.s32.totalorder %s69, %s72
    %p78 = scmp.eq.s32.totalorder %s10, 0
    %p79 = por %p77, %p78
    %p80 = scmp.ne.s32.totalorder %s69, %s72
    %p81 = scmp.eq.s32.totalorder %s15, 1
    %p82 = por %p80, %p81
    %p83 = scmp.ne.s32.totalorder %s72, %s73
    %p84 = scmp.eq.s32.totalorder %s15, 0
    %p85 = por %p83, %p84
    %p86 = scmp.ne.s32.totalorder %s72, %s73
    %p87 = scmp.eq.s32.totalorder %s16, 1
    %p88 = por %p86, %p87
    %p90 = scmp.ne.s32.totalorder %s73, %s89
    %p91 = scmp.eq.s32.totalorder %s16, 0
    %p92 = por %p90, %p91
    %s93 = ssub.s32 %s18, %s32
    %p94 = scmp.eq.s32.totalorder %s93, 0
    %s96 = sadd.s32 %s95, 1
    %s97 = scalar_select %p94, %s95, %s96
    %p100 = pneg %p94
    %p101 = scmp.eq.s32.totalorder %s10, 1
    %p102 = por %p100, %p101
    %p103 = scmp.ne.s32.totalorder %s95, %s98
    %p104 = scmp.eq.s32.totalorder %s10, 0
    %p105 = por %p103, %p104
    %p106 = scmp.ne.s32.totalorder %s95, %s98
    %p107 = scmp.eq.s32.totalorder %s15, 1
    %p108 = por %p106, %p107
    %p109 = scmp.ne.s32.totalorder %s98, %s99
    %p110 = scmp.eq.s32.totalorder %s15, 0
    %p111 = por %p109, %p110
    %p112 = scmp.ne.s32.totalorder %s98, %s99
    %p113 = scmp.eq.s32.totalorder %s16, 1
    %p114 = por %p112, %p113
    %p116 = scmp.ne.s32.totalorder %s99, %s115
    %p117 = scmp.eq.s32.totalorder %s16, 0
    %p118 = por %p116, %p117
    %s120 = sadd.s32 %s119, 1
    %p123 = scmp.eq.s32.totalorder %s10, 1
    %p124 = scmp.ne.s32.totalorder %s119, %s121
    %p125 = scmp.eq.s32.totalorder %s10, 0
    %p126 = por %p124, %p125
    %p127 = scmp.ne.s32.totalorder %s119, %s121
    %p128 = scmp.eq.s32.totalorder %s15, 1
    %p129 = por %p127, %p128
    %p130 = scmp.ne.s32.totalorder %s121, %s122
    %p131 = scmp.eq.s32.totalorder %s15, 0
    %p132 = por %p130, %p131
    %p133 = scmp.ne.s32.totalorder %s121, %s122
    %p134 = scmp.eq.s32.totalorder %s16, 1
    %p135 = por %p133, %p134
    %p137 = scmp.ne.s32.totalorder %s122, %s136
    %p138 = scmp.eq.s32.totalorder %s16, 0
    %p139 = por %p137, %p138
    %s140 = ssub.s32 %s17, %s36
    %s141 = ssub.s32 %s18, %s32
    %s142 = sor.u32 %s140, %s141
    %s143 = ssub.s32 %s19, %s28
    %s144 = sor.u32 %s142, %s143
    %p145 = scmp.eq.s32.totalorder %s144, 0
    %s147 = sadd.s32 %s146, 1
    %s148 = scalar_select %p145, %s146, %s147
    %p151 = pneg %p145
    %p152 = scmp.eq.s32.totalorder %s10, 1
    %p153 = por %p151, %p152
    %p154 = scmp.ne.s32.totalorder %s146, %s149
    %p155 = scmp.eq.s32.totalorder %s10, 0
    %p156 = por %p154, %p155
    %p157 = scmp.ne.s32.totalorder %s146, %s149
    %p158 = scmp.eq.s32.totalorder %s15, 1
    %p159 = por %p157, %p158
    %p160 = scmp.ne.s32.totalorder %s149, %s150
    %p161 = scmp.eq.s32.totalorder %s15, 0
    %p162 = por %p160, %p161
    %p163 = scmp.ne.s32.totalorder %s149, %s150
    %p164 = scmp.eq.s32.totalorder %s16, 1
    %p165 = por %p163, %p164
    %p167 = scmp.ne.s32.totalorder %s150, %s166
    %p168 = scmp.eq.s32.totalorder %s16, 0
    %p169 = por %p167, %p168
    %p170 = scmp.le.s32.totalorder 1, %s10
    %p171 = scmp.lt.s32.totalorder %s10, 3
    %p172 = pnand %p170, %p171
    %p173 = pneg %p172
    // Predicated region
    $region9: #{upsample_forward.3} parent=5 // pred_check
      _
    $region10: #{upsample_forward.3} parent=5 // pred_check_branch
      %175 = sbr.rel (%p172) target = $region12
    $region11: #{upsample_forward.3} parent=5 // pred_region
      %s176 = ssub.s32 %s10, 1
      // Predicated region
      $region13: #{upsample_forward.3} parent=11 // pred_check
        %p177 = pneg %p85
      $region14: #{upsample_forward.3} parent=11 // pred_check_branch
        %179 = sbr.rel (%p177) target = $region16
      $region15: #{upsample_forward.3} parent=11 // pred_region
        %s180 = smul.u32 16, %s21
        %p181 = scmp.lt.s32.totalorder %s180, 15
        %s182 = scalar_select %p181, %s180, 15
        %s183 = smul.addr %s182, 8
        %s184 = scalar_lea.vmem %s1, %s183
        %s185 = smul.u32 16, %s21
      $region16: #{upsample_forward.3} parent=11 // pred_fallthru
        _
      // Predicated region
      $region17: #{upsample_forward.3} parent=11 // pred_check
        %p186 = pneg %p111
      $region18: #{upsample_forward.3} parent=11 // pred_check_branch
        %188 = sbr.rel (%p186) target = $region20
      $region19: #{upsample_forward.3} parent=11 // pred_region
        %s189 = smul.u32 16, %s21
        %p190 = scmp.lt.s32.totalorder %s189, 15
        %s191 = scalar_select %p190, %s189, 15
        %s192 = smul.addr %s191, 8
        %s193 = scalar_lea.vmem %s2, %s192
        %s194 = smul.u32 16, %s21
      $region20: #{upsample_forward.3} parent=11 // pred_fallthru
        _
      // Predicated region
      $region21: #{upsample_forward.3} parent=11 // pred_check
        %p195 = pneg %p132
      $region22: #{upsample_forward.3} parent=11 // pred_check_branch
        %197 = sbr.rel (%p195) target = $region24
      $region23: #{upsample_forward.3} parent=11 // pred_region
        _
      $region24: #{upsample_forward.3} parent=11 // pred_fallthru
        _
    $region12: #{upsample_forward.3} parent=5 // pred_fallthru
      _
    %p198 = scmp.lt.s32.totalorder %s10, 2
    // Predicated region
    $region25: #{upsample_forward.3} parent=5 // pred_check
      %p199 = pneg %p198
    $region26: #{upsample_forward.3} parent=5 // pred_check_branch
      %201 = sbr.rel (%p199) target = $region28
    $region27: #{upsample_forward.3} parent=5 // pred_region
      // Predicated region
      $region29: #{upsample_forward.3} parent=27 // pred_check
        %p202 = pneg %p53
      $region30: #{upsample_forward.3} parent=27 // pred_check_branch
        %204 = sbr.rel (%p202) target = $region32
      $region31: #{upsample_forward.3} parent=27 // pred_region
        %s205 = smul.u32 16, %s18
        %s206 = smul.u32 2, %s19
        %p207 = scmp.lt.s32.totalorder %s17, 1
        %s208 = scalar_select %p207, %s17, 1
        %p209 = scmp.lt.s32.totalorder %s205, 15
        %s210 = scalar_select %p209, %s205, 15
        %p211 = scmp.lt.s32.totalorder %s206, 1
        %s212 = scalar_select %p211, %s206, 1
        %s213 = smul.addr %s210, 2
        %s214 = sadd.s32 %s212, %s213
        %s215 = smul.addr %s208, 32
        %s216 = sadd.s32 %s214, %s215
        %s217 = smul.addr %s216, 4
        %s218 = scalar_lea.vmem %s0, %s217
        %s219 = smul.u32 16, %s18
        %s220 = smul.u32 2, %s19
      $region32: #{upsample_forward.3} parent=27 // pred_fallthru
        _
    $region28: #{upsample_forward.3} parent=5 // pred_fallthru
      _
    %p221 = scmp.le.s32.totalorder 1, %s10
    %p222 = scmp.lt.s32.totalorder %s10, 3
    %p223 = pnand %p221, %p222
    %p224 = pneg %p223
    // Predicated region
    $region33: #{upsample_forward.3} parent=5 // pred_check
      _
    $region34: #{upsample_forward.3} parent=5 // pred_check_branch
      %226 = sbr.rel (%p223) target = $region36
    $region35: #{upsample_forward.3} parent=5 // pred_region
      %s227 = ssub.s32 %s10, 1
      %s228 = smul.u32 16, %s21
      %s229 = smul.u32 2, %s22
      %p230 = scmp.lt.s32.totalorder %s20, 1
      %s231 = scalar_select %p230, %s20, 1
      %p232 = scmp.lt.s32.totalorder %s228, 15
      %s233 = scalar_select %p232, %s228, 15
      %p234 = scmp.lt.s32.totalorder %s229, 1
      %s235 = scalar_select %p234, %s229, 1
      %s236 = smul.addr %s233, 2
      %s237 = sadd.s32 %s235, %s236
      %s238 = smul.addr %s231, 32
      %s239 = sadd.s32 %s237, %s238
      %s240 = smul.addr %s239, 4
      %s241 = scalar_lea.vmem %s0, %s240
      %p242 = pneg %p59
      %p243 = pneg %p56
      %s244 = smul.u32 16, %s21
      %p245 = scmp.lt.s32.totalorder %s244, 15
      %s246 = scalar_select %p245, %s244, 15
      %s247 = smul.addr %s246, 8
      %s248 = scalar_lea.vmem %s1, %s247
      %p249 = pneg %p85
      %p250 = pneg %p82
      %s251 = smul.u32 16, %s21
      %p252 = scmp.lt.s32.totalorder %s251, 15
      %s253 = scalar_select %p252, %s251, 15
      %s254 = smul.addr %s253, 8
      %s255 = scalar_lea.vmem %s2, %s254
      %p256 = pneg %p111
      %p257 = pneg %p108
      %p258 = pneg %p132
      %p259 = pneg %p129
      %p260 = pneg %p162
      %p261 = pneg %p159
      %s262 = smul.u32 16, %s21
      %s263 = smul.u32 8, %s22
      %p264 = scmp.lt.s32.totalorder %s20, 1
      %s265 = scalar_select %p264, %s20, 1
      %p266 = scmp.lt.s32.totalorder %s262, 15
      %s267 = scalar_select %p266, %s262, 15
      %p268 = scmp.lt.s32.totalorder %s263, 7
      %s269 = scalar_select %p268, %s263, 7
      %s270 = smul.addr %s267, 8
      %s271 = sadd.s32 %s269, %s270
      %s272 = smul.addr %s265, 128
      %s273 = sadd.s32 %s271, %s272
      %s274 = smul.addr %s273, 8
      %s275 = scalar_lea.vmem %s4, %s274
      %s276 = smul.u32 16, %s21
      %s277 = smul.u32 2, %s22
      %p278 = scmp.lt.s32.totalorder %s20, 1
      %s279 = scalar_select %p278, %s20, 1
      %p280 = scmp.lt.s32.totalorder %s276, 15
      %s281 = scalar_select %p280, %s276, 15
      %p282 = scmp.lt.s32.totalorder %s277, 1
      %s283 = scalar_select %p282, %s277, 1
      %s284 = smul.addr %s281, 2
      %s285 = sadd.s32 %s283, %s284
      %s286 = smul.addr %s279, 32
      %s287 = sadd.s32 %s285, %s286
      %s288 = smul.addr %s287, 4
      %s289 = scalar_lea.vmem %s0, %s288
      %s290 = smul.u32 16, %s21
      %s291 = smul.u32 2, %s22
      %s292 = smul.u32 16, %s21
      %p293 = scmp.lt.s32.totalorder %s292, 15
      %s294 = scalar_select %p293, %s292, 15
      %s295 = smul.addr %s294, 8
      %s296 = scalar_lea.vmem %s1, %s295
      %s297 = smul.u32 16, %s21
      %s298 = smul.u32 16, %s21
      %p299 = scmp.lt.s32.totalorder %s298, 15
      %s300 = scalar_select %p299, %s298, 15
      %s301 = smul.addr %s300, 8
      %s302 = scalar_lea.vmem %s2, %s301
      %s303 = smul.u32 16, %s21
      %s304 = smul.u32 16, %s21
      %s305 = smul.u32 8, %s22
      %p306 = scmp.lt.s32.totalorder %s20, 1
      %s307 = scalar_select %p306, %s20, 1
      %p308 = scmp.lt.s32.totalorder %s304, 15
      %s309 = scalar_select %p308, %s304, 15
      %p310 = scmp.lt.s32.totalorder %s305, 7
      %s311 = scalar_select %p310, %s305, 7
      %s312 = smul.addr %s309, 8
      %s313 = sadd.s32 %s311, %s312
      %s314 = smul.addr %s307, 128
      %s315 = sadd.s32 %s313, %s314
      %s316 = smul.addr %s315, 8
      %s317 = scalar_lea.vmem %s4, %s316
      %s318 = smul.u32 16, %s21
      %s319 = smul.u32 8, %s22
      %v320 = vld [vmem:[%s289] sm:$0xff]
      %v321 = vld [vmem:[%s289 + $0x8] sm:$0xff]
      %v322 = vld [vmem:[%s289 + $0x10] sm:$0xff]
      %v323 = vld [vmem:[%s289 + $0x18] sm:$0xff]
      %v324 = vld [vmem:[%s289 + $0x20] sm:$0xff]
      %v325 = vld [vmem:[%s289 + $0x28] sm:$0xff]
      %v326 = vld [vmem:[%s289 + $0x30] sm:$0xff]
      %v327 = vld [vmem:[%s289 + $0x38] sm:$0xff]
      %v328 = vld [vmem:[%s289 + $0x40] sm:$0xff]
      %v329 = vld [vmem:[%s289 + $0x48] sm:$0xff]
      %v330 = vld [vmem:[%s289 + $0x50] sm:$0xff]
      %v331 = vld [vmem:[%s289 + $0x58] sm:$0xff]
      %v332 = vld [vmem:[%s289 + $0x60] sm:$0xff]
      %v333 = vld [vmem:[%s289 + $0x68] sm:$0xff]
      %v334 = vld [vmem:[%s289 + $0x70] sm:$0xff]
      %v335 = vld [vmem:[%s289 + $0x78] sm:$0xff]
      %v336 = vunpack.c.l.bf16 %v320
      %v337 = vunpack.c.h.bf16 %v320
      %v338 = vunpack.c.l.bf16 %v321
      %v339 = vunpack.c.h.bf16 %v321
      %v340 = vunpack.c.l.bf16 %v322
      %v341 = vunpack.c.h.bf16 %v322
      %v342 = vunpack.c.l.bf16 %v323
      %v343 = vunpack.c.h.bf16 %v323
      %v344 = vunpack.c.l.bf16 %v324
      %v345 = vunpack.c.h.bf16 %v324
      %v346 = vunpack.c.l.bf16 %v325
      %v347 = vunpack.c.h.bf16 %v325
      %v348 = vunpack.c.l.bf16 %v326
      %v349 = vunpack.c.h.bf16 %v326
      %v350 = vunpack.c.l.bf16 %v327
      %v351 = vunpack.c.h.bf16 %v327
      %v352 = vunpack.c.l.bf16 %v328
      %v353 = vunpack.c.h.bf16 %v328
      %v354 = vunpack.c.l.bf16 %v329
      %v355 = vunpack.c.h.bf16 %v329
      %v356 = vunpack.c.l.bf16 %v330
      %v357 = vunpack.c.h.bf16 %v330
      %v358 = vunpack.c.l.bf16 %v331
      %v359 = vunpack.c.h.bf16 %v331
      %v360 = vunpack.c.l.bf16 %v332
      %v361 = vunpack.c.h.bf16 %v332
      %v362 = vunpack.c.l.bf16 %v333
      %v363 = vunpack.c.h.bf16 %v333
      %v364 = vunpack.c.l.bf16 %v334
      %v365 = vunpack.c.h.bf16 %v334
      %v366 = vunpack.c.l.bf16 %v335
      %v367 = vunpack.c.h.bf16 %v335
      %v368 = vld [vmem:[%s296] sm:$0xff]
      %v369 = vld [vmem:[%s296 + $0x8] sm:$0xff]
      %v370 = vld [vmem:[%s296 + $0x10] sm:$0xff]
      %v371 = vld [vmem:[%s296 + $0x18] sm:$0xff]
      %v372 = vld [vmem:[%s296 + $0x20] sm:$0xff]
      %v373 = vld [vmem:[%s296 + $0x28] sm:$0xff]
      %v374 = vld [vmem:[%s296 + $0x30] sm:$0xff]
      %v375 = vld [vmem:[%s296 + $0x38] sm:$0xff]
      %v376 = vld [vmem:[%s296 + $0x40] sm:$0xff]
      %v377 = vld [vmem:[%s296 + $0x48] sm:$0xff]
      %v378 = vld [vmem:[%s296 + $0x50] sm:$0xff]
      %v379 = vld [vmem:[%s296 + $0x58] sm:$0xff]
      %v380 = vld [vmem:[%s296 + $0x60] sm:$0xff]
      %v381 = vld [vmem:[%s296 + $0x68] sm:$0xff]
      %v382 = vld [vmem:[%s296 + $0x70] sm:$0xff]
      %v383 = vld [vmem:[%s296 + $0x78] sm:$0xff]
      %385 = vset.pattern.permute.xlu0 0
      %386 = vperm.xlu0 %385, %v368
      %v387 = vpop.permute.xlu0 %386
      %390 = vset.pattern.permute.xlu0 0
      %391 = vperm.xlu0 %390, %v369
      %v392 = vpop.permute.xlu0 %391
      %395 = vset.pattern.permute.xlu0 0
      %396 = vperm.xlu0 %395, %v370
      %v397 = vpop.permute.xlu0 %396
      %400 = vset.pattern.permute.xlu0 0
      %401 = vperm.xlu0 %400, %v371
      %v402 = vpop.permute.xlu0 %401
      %405 = vset.pattern.permute.xlu0 0
      %406 = vperm.xlu0 %405, %v372
      %v407 = vpop.permute.xlu0 %406
      %410 = vset.pattern.permute.xlu0 0
      %411 = vperm.xlu0 %410, %v373
      %v412 = vpop.permute.xlu0 %411
      %415 = vset.pattern.permute.xlu0 0
      %416 = vperm.xlu0 %415, %v374
      %v417 = vpop.permute.xlu0 %416
      %420 = vset.pattern.permute.xlu0 0
      %421 = vperm.xlu0 %420, %v375
      %v422 = vpop.permute.xlu0 %421
      %425 = vset.pattern.permute.xlu0 0
      %426 = vperm.xlu0 %425, %v376
      %v427 = vpop.permute.xlu0 %426
      %430 = vset.pattern.permute.xlu0 0
      %431 = vperm.xlu0 %430, %v377
      %v432 = vpop.permute.xlu0 %431
      %435 = vset.pattern.permute.xlu0 0
      %436 = vperm.xlu0 %435, %v378
      %v437 = vpop.permute.xlu0 %436
      %440 = vset.pattern.permute.xlu0 0
      %441 = vperm.xlu0 %440, %v379
      %v442 = vpop.permute.xlu0 %441
      %445 = vset.pattern.permute.xlu0 0
      %446 = vperm.xlu0 %445, %v380
      %v447 = vpop.permute.xlu0 %446
      %450 = vset.pattern.permute.xlu0 0
      %451 = vperm.xlu0 %450, %v381
      %v452 = vpop.permute.xlu0 %451
      %455 = vset.pattern.permute.xlu0 0
      %456 = vperm.xlu0 %455, %v382
      %v457 = vpop.permute.xlu0 %456
      %460 = vset.pattern.permute.xlu0 0
      %461 = vperm.xlu0 %460, %v383
      %v462 = vpop.permute.xlu0 %461
      %v464 = vmul.f32 %v336, %v387
      %v465 = vmul.f32 %v337, %v387
      %v466 = vmul.f32 %v338, %v392
      %v467 = vmul.f32 %v339, %v392
      %v468 = vmul.f32 %v340, %v397
      %v469 = vmul.f32 %v341, %v397
      %v470 = vmul.f32 %v342, %v402
      %v471 = vmul.f32 %v343, %v402
      %v472 = vmul.f32 %v344, %v407
      %v473 = vmul.f32 %v345, %v407
      %v474 = vmul.f32 %v346, %v412
      %v475 = vmul.f32 %v347, %v412
      %v476 = vmul.f32 %v348, %v417
      %v477 = vmul.f32 %v349, %v417
      %v478 = vmul.f32 %v350, %v422
      %v479 = vmul.f32 %v351, %v422
      %v480 = vmul.f32 %v352, %v427
      %v481 = vmul.f32 %v353, %v427
      %v482 = vmul.f32 %v354, %v432
      %v483 = vmul.f32 %v355, %v432
      %v484 = vmul.f32 %v356, %v437
      %v485 = vmul.f32 %v357, %v437
      %v486 = vmul.f32 %v358, %v442
      %v487 = vmul.f32 %v359, %v442
      %v488 = vmul.f32 %v360, %v447
      %v489 = vmul.f32 %v361, %v447
      %v490 = vmul.f32 %v362, %v452
      %v491 = vmul.f32 %v363, %v452
      %v492 = vmul.f32 %v364, %v457
      %v493 = vmul.f32 %v365, %v457
      %v494 = vmul.f32 %v366, %v462
      %v495 = vmul.f32 %v367, %v462
      %v496 = vld [vmem:[%s302] sm:$0xff]
      %v497 = vld [vmem:[%s302 + $0x8] sm:$0xff]
      %v498 = vld [vmem:[%s302 + $0x10] sm:$0xff]
      %v499 = vld [vmem:[%s302 + $0x18] sm:$0xff]
      %v500 = vld [vmem:[%s302 + $0x20] sm:$0xff]
      %v501 = vld [vmem:[%s302 + $0x28] sm:$0xff]
      %v502 = vld [vmem:[%s302 + $0x30] sm:$0xff]
      %v503 = vld [vmem:[%s302 + $0x38] sm:$0xff]
      %v504 = vld [vmem:[%s302 + $0x40] sm:$0xff]
      %v505 = vld [vmem:[%s302 + $0x48] sm:$0xff]
      %v506 = vld [vmem:[%s302 + $0x50] sm:$0xff]
      %v507 = vld [vmem:[%s302 + $0x58] sm:$0xff]
      %v508 = vld [vmem:[%s302 + $0x60] sm:$0xff]
      %v509 = vld [vmem:[%s302 + $0x68] sm:$0xff]
      %v510 = vld [vmem:[%s302 + $0x70] sm:$0xff]
      %v511 = vld [vmem:[%s302 + $0x78] sm:$0xff]
      %513 = vset.pattern.permute.xlu0 0
      %514 = vperm.xlu0 %513, %v496
      %v515 = vpop.permute.xlu0 %514
      %518 = vset.pattern.permute.xlu0 0
      %519 = vperm.xlu0 %518, %v497
      %v520 = vpop.permute.xlu0 %519
      %523 = vset.pattern.permute.xlu0 0
      %524 = vperm.xlu0 %523, %v498
      %v525 = vpop.permute.xlu0 %524
      %528 = vset.pattern.permute.xlu0 0
      %529 = vperm.xlu0 %528, %v499
      %v530 = vpop.permute.xlu0 %529
      %533 = vset.pattern.permute.xlu0 0
      %534 = vperm.xlu0 %533, %v500
      %v535 = vpop.permute.xlu0 %534
      %538 = vset.pattern.permute.xlu0 0
      %539 = vperm.xlu0 %538, %v501
      %v540 = vpop.permute.xlu0 %539
      %543 = vset.pattern.permute.xlu0 0
      %544 = vperm.xlu0 %543, %v502
      %v545 = vpop.permute.xlu0 %544
      %548 = vset.pattern.permute.xlu0 0
      %549 = vperm.xlu0 %548, %v503
      %v550 = vpop.permute.xlu0 %549
      %553 = vset.pattern.permute.xlu0 0
      %554 = vperm.xlu0 %553, %v504
      %v555 = vpop.permute.xlu0 %554
      %558 = vset.pattern.permute.xlu0 0
      %559 = vperm.xlu0 %558, %v505
      %v560 = vpop.permute.xlu0 %559
      %563 = vset.pattern.permute.xlu0 0
      %564 = vperm.xlu0 %563, %v506
      %v565 = vpop.permute.xlu0 %564
      %568 = vset.pattern.permute.xlu0 0
      %569 = vperm.xlu0 %568, %v507
      %v570 = vpop.permute.xlu0 %569
      %573 = vset.pattern.permute.xlu0 0
      %574 = vperm.xlu0 %573, %v508
      %v575 = vpop.permute.xlu0 %574
      %578 = vset.pattern.permute.xlu0 0
      %579 = vperm.xlu0 %578, %v509
      %v580 = vpop.permute.xlu0 %579
      %583 = vset.pattern.permute.xlu0 0
      %584 = vperm.xlu0 %583, %v510
      %v585 = vpop.permute.xlu0 %584
      %588 = vset.pattern.permute.xlu0 0
      %589 = vperm.xlu0 %588, %v511
      %v590 = vpop.permute.xlu0 %589
      %v592 = vadd.f32 %v464, %v515
      %v593 = vadd.f32 %v465, %v515
      %v594 = vadd.f32 %v466, %v520
      %v595 = vadd.f32 %v467, %v520
      %v596 = vadd.f32 %v468, %v525
      %v597 = vadd.f32 %v469, %v525
      %v598 = vadd.f32 %v470, %v530
      %v599 = vadd.f32 %v471, %v530
      %v600 = vadd.f32 %v472, %v535
      %v601 = vadd.f32 %v473, %v535
      %v602 = vadd.f32 %v474, %v540
      %v603 = vadd.f32 %v475, %v540
      %v604 = vadd.f32 %v476, %v545
      %v605 = vadd.f32 %v477, %v545
      %v606 = vadd.f32 %v478, %v550
      %v607 = vadd.f32 %v479, %v550
      %v608 = vadd.f32 %v480, %v555
      %v609 = vadd.f32 %v481, %v555
      %v610 = vadd.f32 %v482, %v560
      %v611 = vadd.f32 %v483, %v560
      %v612 = vadd.f32 %v484, %v565
      %v613 = vadd.f32 %v485, %v565
      %v614 = vadd.f32 %v486, %v570
      %v615 = vadd.f32 %v487, %v570
      %v616 = vadd.f32 %v488, %v575
      %v617 = vadd.f32 %v489, %v575
      %v618 = vadd.f32 %v490, %v580
      %v619 = vadd.f32 %v491, %v580
      %v620 = vadd.f32 %v492, %v585
      %v621 = vadd.f32 %v493, %v585
      %v622 = vadd.f32 %v494, %v590
      %v623 = vadd.f32 %v495, %v590
      %vm624 = vcmp.gt.f32.partialorder %v592, 0.0
      %vm625 = vcmp.gt.f32.partialorder %v593, 0.0
      %vm626 = vcmp.gt.f32.partialorder %v594, 0.0
      %vm627 = vcmp.gt.f32.partialorder %v595, 0.0
      %vm628 = vcmp.gt.f32.partialorder %v596, 0.0
      %vm629 = vcmp.gt.f32.partialorder %v597, 0.0
      %vm630 = vcmp.gt.f32.partialorder %v598, 0.0
      %vm631 = vcmp.gt.f32.partialorder %v599, 0.0
      %vm632 = vcmp.gt.f32.partialorder %v600, 0.0
      %vm633 = vcmp.gt.f32.partialorder %v601, 0.0
      %vm634 = vcmp.gt.f32.partialorder %v602, 0.0
      %vm635 = vcmp.gt.f32.partialorder %v603, 0.0
      %vm636 = vcmp.gt.f32.partialorder %v604, 0.0
      %vm637 = vcmp.gt.f32.partialorder %v605, 0.0
      %vm638 = vcmp.gt.f32.partialorder %v606, 0.0
      %vm639 = vcmp.gt.f32.partialorder %v607, 0.0
      %vm640 = vcmp.gt.f32.partialorder %v608, 0.0
      %vm641 = vcmp.gt.f32.partialorder %v609, 0.0
      %vm642 = vcmp.gt.f32.partialorder %v610, 0.0
      %vm643 = vcmp.gt.f32.partialorder %v611, 0.0
      %vm644 = vcmp.gt.f32.partialorder %v612, 0.0
      %vm645 = vcmp.gt.f32.partialorder %v613, 0.0
      %vm646 = vcmp.gt.f32.partialorder %v614, 0.0
      %vm647 = vcmp.gt.f32.partialorder %v615, 0.0
      %vm648 = vcmp.gt.f32.partialorder %v616, 0.0
      %vm649 = vcmp.gt.f32.partialorder %v617, 0.0
      %vm650 = vcmp.gt.f32.partialorder %v618, 0.0
      %vm651 = vcmp.gt.f32.partialorder %v619, 0.0
      %vm652 = vcmp.gt.f32.partialorder %v620, 0.0
      %vm653 = vcmp.gt.f32.partialorder %v621, 0.0
      %vm654 = vcmp.gt.f32.partialorder %v622, 0.0
      %vm655 = vcmp.gt.f32.partialorder %v623, 0.0
      %v656 = vmul.f32 %v592, 0.1
      %v657 = vmul.f32 %v593, 0.1
      %v658 = vmul.f32 %v594, 0.1
      %v659 = vmul.f32 %v595, 0.1
      %v660 = vmul.f32 %v596, 0.1
      %v661 = vmul.f32 %v597, 0.1
      %v662 = vmul.f32 %v598, 0.1
      %v663 = vmul.f32 %v599, 0.1
      %v664 = vmul.f32 %v600, 0.1
      %v665 = vmul.f32 %v601, 0.1
      %v666 = vmul.f32 %v602, 0.1
      %v667 = vmul.f32 %v603, 0.1
      %v668 = vmul.f32 %v604, 0.1
      %v669 = vmul.f32 %v605, 0.1
      %v670 = vmul.f32 %v606, 0.1
      %v671 = vmul.f32 %v607, 0.1
      %v672 = vmul.f32 %v608, 0.1
      %v673 = vmul.f32 %v609, 0.1
      %v674 = vmul.f32 %v610, 0.1
      %v675 = vmul.f32 %v611, 0.1
      %v676 = vmul.f32 %v612, 0.1
      %v677 = vmul.f32 %v613, 0.1
      %v678 = vmul.f32 %v614, 0.1
      %v679 = vmul.f32 %v615, 0.1
      %v680 = vmul.f32 %v616, 0.1
      %v681 = vmul.f32 %v617, 0.1
      %v682 = vmul.f32 %v618, 0.1
      %v683 = vmul.f32 %v619, 0.1
      %v684 = vmul.f32 %v620, 0.1
      %v685 = vmul.f32 %v621, 0.1
      %v686 = vmul.f32 %v622, 0.1
      %v687 = vmul.f32 %v623, 0.1
      %v688 = vsel %vm624, %v592, %v656
      %v689 = vsel %vm625, %v593, %v657
      %v690 = vsel %vm626, %v594, %v658
      %v691 = vsel %vm627, %v595, %v659
      %v692 = vsel %vm628, %v596, %v660
      %v693 = vsel %vm629, %v597, %v661
      %v694 = vsel %vm630, %v598, %v662
      %v695 = vsel %vm631, %v599, %v663
      %v696 = vsel %vm632, %v600, %v664
      %v697 = vsel %vm633, %v601, %v665
      %v698 = vsel %vm634, %v602, %v666
      %v699 = vsel %vm635, %v603, %v667
      %v700 = vsel %vm636, %v604, %v668
      %v701 = vsel %vm637, %v605, %v669
      %v702 = vsel %vm638, %v606, %v670
      %v703 = vsel %vm639, %v607, %v671
      %v704 = vsel %vm640, %v608, %v672
      %v705 = vsel %vm641, %v609, %v673
      %v706 = vsel %vm642, %v610, %v674
      %v707 = vsel %vm643, %v611, %v675
      %v708 = vsel %vm644, %v612, %v676
      %v709 = vsel %vm645, %v613, %v677
      %v710 = vsel %vm646, %v614, %v678
      %v711 = vsel %vm647, %v615, %v679
      %v712 = vsel %vm648, %v616, %v680
      %v713 = vsel %vm649, %v617, %v681
      %v714 = vsel %vm650, %v618, %v682
      %v715 = vsel %vm651, %v619, %v683
      %v716 = vsel %vm652, %v620, %v684
      %v717 = vsel %vm653, %v621, %v685
      %v718 = vsel %vm654, %v622, %v686
      %v719 = vsel %vm655, %v623, %v687
      %v720 = vpack.c.bf16 %v690, %v688
      %v721 = vpack.c.bf16 %v691, %v689
      %v722 = vpack.c.bf16 %v694, %v692
      %v723 = vpack.c.bf16 %v695, %v693
      %v724 = vpack.c.bf16 %v698, %v696
      %v725 = vpack.c.bf16 %v699, %v697
      %v726 = vpack.c.bf16 %v702, %v700
      %v727 = vpack.c.bf16 %v703, %v701
      %v728 = vpack.c.bf16 %v706, %v704
      %v729 = vpack.c.bf16 %v707, %v705
      %v730 = vpack.c.bf16 %v710, %v708
      %v731 = vpack.c.bf16 %v711, %v709
      %v732 = vpack.c.bf16 %v714, %v712
      %v733 = vpack.c.bf16 %v715, %v713
      %v734 = vpack.c.bf16 %v718, %v716
      %v735 = vpack.c.bf16 %v719, %v717
      %v736 = vld [vmem:[%s3] sm:$0xff]
      %v737 = vld [vmem:[%s3 + $0x8] sm:$0xff]
      %v738 = vld [vmem:[%s3 + $0x10] sm:$0xff]
      %v739 = vld [vmem:[%s3 + $0x18] sm:$0xff]
      %v740 = vld [vmem:[%s3 + $0x20] sm:$0xff]
      %v741 = vld [vmem:[%s3 + $0x28] sm:$0xff]
      %v742 = vld [vmem:[%s3 + $0x30] sm:$0xff]
      %v743 = vld [vmem:[%s3 + $0x38] sm:$0xff]
      %v744 = vld [vmem:[%s3 + $0x40] sm:$0xff]
      %v745 = vld [vmem:[%s3 + $0x48] sm:$0xff]
      %v746 = vld [vmem:[%s3 + $0x50] sm:$0xff]
      %v747 = vld [vmem:[%s3 + $0x58] sm:$0xff]
      %v748 = vld [vmem:[%s3 + $0x60] sm:$0xff]
      %v749 = vld [vmem:[%s3 + $0x68] sm:$0xff]
      %v750 = vld [vmem:[%s3 + $0x70] sm:$0xff]
      %v751 = vld [vmem:[%s3 + $0x78] sm:$0xff]
      %v752 = vld [vmem:[%s3 + $0x80] sm:$0xff]
      %v753 = vld [vmem:[%s3 + $0x88] sm:$0xff]
      %v754 = vld [vmem:[%s3 + $0x90] sm:$0xff]
      %v755 = vld [vmem:[%s3 + $0x98] sm:$0xff]
      %v756 = vld [vmem:[%s3 + $0xa0] sm:$0xff]
      %v757 = vld [vmem:[%s3 + $0xa8] sm:$0xff]
      %v758 = vld [vmem:[%s3 + $0xb0] sm:$0xff]
      %v759 = vld [vmem:[%s3 + $0xb8] sm:$0xff]
      %v760 = vld [vmem:[%s3 + $0xc0] sm:$0xff]
      %v761 = vld [vmem:[%s3 + $0xc8] sm:$0xff]
      %v762 = vld [vmem:[%s3 + $0xd0] sm:$0xff]
      %v763 = vld [vmem:[%s3 + $0xd8] sm:$0xff]
      %v764 = vld [vmem:[%s3 + $0xe0] sm:$0xff]
      %v765 = vld [vmem:[%s3 + $0xe8] sm:$0xff]
      %v766 = vld [vmem:[%s3 + $0xf0] sm:$0xff]
      %v767 = vld [vmem:[%s3 + $0xf8] sm:$0xff]
      %v768 = vld [vmem:[%s3 + $0x100] sm:$0xff]
      %v769 = vld [vmem:[%s3 + $0x108] sm:$0xff]
      %v770 = vld [vmem:[%s3 + $0x110] sm:$0xff]
      %v771 = vld [vmem:[%s3 + $0x118] sm:$0xff]
      %v772 = vld [vmem:[%s3 + $0x120] sm:$0xff]
      %v773 = vld [vmem:[%s3 + $0x128] sm:$0xff]
      %v774 = vld [vmem:[%s3 + $0x130] sm:$0xff]
      %v775 = vld [vmem:[%s3 + $0x138] sm:$0xff]
      %v776 = vld [vmem:[%s3 + $0x140] sm:$0xff]
      %v777 = vld [vmem:[%s3 + $0x148] sm:$0xff]
      %v778 = vld [vmem:[%s3 + $0x150] sm:$0xff]
      %v779 = vld [vmem:[%s3 + $0x158] sm:$0xff]
      %v780 = vld [vmem:[%s3 + $0x160] sm:$0xff]
      %v781 = vld [vmem:[%s3 + $0x168] sm:$0xff]
      %v782 = vld [vmem:[%s3 + $0x170] sm:$0xff]
      %v783 = vld [vmem:[%s3 + $0x178] sm:$0xff]
      %v784 = vld [vmem:[%s3 + $0x180] sm:$0xff]
      %v785 = vld [vmem:[%s3 + $0x188] sm:$0xff]
      %v786 = vld [vmem:[%s3 + $0x190] sm:$0xff]
      %v787 = vld [vmem:[%s3 + $0x198] sm:$0xff]
      %v788 = vld [vmem:[%s3 + $0x1a0] sm:$0xff]
      %v789 = vld [vmem:[%s3 + $0x1a8] sm:$0xff]
      %v790 = vld [vmem:[%s3 + $0x1b0] sm:$0xff]
      %v791 = vld [vmem:[%s3 + $0x1b8] sm:$0xff]
      %v792 = vld [vmem:[%s3 + $0x1c0] sm:$0xff]
      %v793 = vld [vmem:[%s3 + $0x1c8] sm:$0xff]
      %v794 = vld [vmem:[%s3 + $0x1d0] sm:$0xff]
      %v795 = vld [vmem:[%s3 + $0x1d8] sm:$0xff]
      %v796 = vld [vmem:[%s3 + $0x1e0] sm:$0xff]
      %v797 = vld [vmem:[%s3 + $0x1e8] sm:$0xff]
      %v798 = vld [vmem:[%s3 + $0x1f0] sm:$0xff]
      %v799 = vld [vmem:[%s3 + $0x1f8] sm:$0xff]
      %v800 = vld [vmem:[%s3 + $0x200] sm:$0xff]
      %v801 = vld [vmem:[%s3 + $0x208] sm:$0xff]
      %v802 = vld [vmem:[%s3 + $0x210] sm:$0xff]
      %v803 = vld [vmem:[%s3 + $0x218] sm:$0xff]
      %v804 = vld [vmem:[%s3 + $0x220] sm:$0xff]
      %v805 = vld [vmem:[%s3 + $0x228] sm:$0xff]
      %v806 = vld [vmem:[%s3 + $0x230] sm:$0xff]
      %v807 = vld [vmem:[%s3 + $0x238] sm:$0xff]
      %v808 = vld [vmem:[%s3 + $0x240] sm:$0xff]
      %v809 = vld [vmem:[%s3 + $0x248] sm:$0xff]
      %v810 = vld [vmem:[%s3 + $0x250] sm:$0xff]
      %v811 = vld [vmem:[%s3 + $0x258] sm:$0xff]
      %v812 = vld [vmem:[%s3 + $0x260] sm:$0xff]
      %v813 = vld [vmem:[%s3 + $0x268] sm:$0xff]
      %v814 = vld [vmem:[%s3 + $0x270] sm:$0xff]
      %v815 = vld [vmem:[%s3 + $0x278] sm:$0xff]
      %v816 = vld [vmem:[%s3 + $0x280] sm:$0xff]
      %v817 = vld [vmem:[%s3 + $0x288] sm:$0xff]
      %v818 = vld [vmem:[%s3 + $0x290] sm:$0xff]
      %v819 = vld [vmem:[%s3 + $0x298] sm:$0xff]
      %v820 = vld [vmem:[%s3 + $0x2a0] sm:$0xff]
      %v821 = vld [vmem:[%s3 + $0x2a8] sm:$0xff]
      %v822 = vld [vmem:[%s3 + $0x2b0] sm:$0xff]
      %v823 = vld [vmem:[%s3 + $0x2b8] sm:$0xff]
      %v824 = vld [vmem:[%s3 + $0x2c0] sm:$0xff]
      %v825 = vld [vmem:[%s3 + $0x2c8] sm:$0xff]
      %v826 = vld [vmem:[%s3 + $0x2d0] sm:$0xff]
      %v827 = vld [vmem:[%s3 + $0x2d8] sm:$0xff]
      %v828 = vld [vmem:[%s3 + $0x2e0] sm:$0xff]
      %v829 = vld [vmem:[%s3 + $0x2e8] sm:$0xff]
      %v830 = vld [vmem:[%s3 + $0x2f0] sm:$0xff]
      %v831 = vld [vmem:[%s3 + $0x2f8] sm:$0xff]
      %v832 = vld [vmem:[%s3 + $0x300] sm:$0xff]
      %v833 = vld [vmem:[%s3 + $0x308] sm:$0xff]
      %v834 = vld [vmem:[%s3 + $0x310] sm:$0xff]
      %v835 = vld [vmem:[%s3 + $0x318] sm:$0xff]
      %v836 = vld [vmem:[%s3 + $0x320] sm:$0xff]
      %v837 = vld [vmem:[%s3 + $0x328] sm:$0xff]
      %v838 = vld [vmem:[%s3 + $0x330] sm:$0xff]
      %v839 = vld [vmem:[%s3 + $0x338] sm:$0xff]
      %v840 = vld [vmem:[%s3 + $0x340] sm:$0xff]
      %v841 = vld [vmem:[%s3 + $0x348] sm:$0xff]
      %v842 = vld [vmem:[%s3 + $0x350] sm:$0xff]
      %v843 = vld [vmem:[%s3 + $0x358] sm:$0xff]
      %v844 = vld [vmem:[%s3 + $0x360] sm:$0xff]
      %v845 = vld [vmem:[%s3 + $0x368] sm:$0xff]
      %v846 = vld [vmem:[%s3 + $0x370] sm:$0xff]
      %v847 = vld [vmem:[%s3 + $0x378] sm:$0xff]
      %v848 = vld [vmem:[%s3 + $0x380] sm:$0xff]
      %v849 = vld [vmem:[%s3 + $0x388] sm:$0xff]
      %v850 = vld [vmem:[%s3 + $0x390] sm:$0xff]
      %v851 = vld [vmem:[%s3 + $0x398] sm:$0xff]
      %v852 = vld [vmem:[%s3 + $0x3a0] sm:$0xff]
      %v853 = vld [vmem:[%s3 + $0x3a8] sm:$0xff]
      %v854 = vld [vmem:[%s3 + $0x3b0] sm:$0xff]
      %v855 = vld [vmem:[%s3 + $0x3b8] sm:$0xff]
      %v856 = vld [vmem:[%s3 + $0x3c0] sm:$0xff]
      %v857 = vld [vmem:[%s3 + $0x3c8] sm:$0xff]
      %v858 = vld [vmem:[%s3 + $0x3d0] sm:$0xff]
      %v859 = vld [vmem:[%s3 + $0x3d8] sm:$0xff]
      %v860 = vld [vmem:[%s3 + $0x3e0] sm:$0xff]
      %v861 = vld [vmem:[%s3 + $0x3e8] sm:$0xff]
      %v862 = vld [vmem:[%s3 + $0x3f0] sm:$0xff]
      %v863 = vld [vmem:[%s3 + $0x3f8] sm:$0xff]
      %v992 = vunpack.c.l.b16 %v736
      %v993 = vunpack.c.h.b16 %v736
      %v994 = vunpack.c.l.b16 %v737
      %v995 = vunpack.c.h.b16 %v737
      %v996 = vunpack.c.l.b16 %v738
      %v997 = vunpack.c.h.b16 %v738
      %v998 = vunpack.c.l.b16 %v739
      %v999 = vunpack.c.h.b16 %v739
      %v1000 = vunpack.c.l.b16 %v740
      %v1001 = vunpack.c.h.b16 %v740
      %v1002 = vunpack.c.l.b16 %v741
      %v1003 = vunpack.c.h.b16 %v741
      %v1004 = vunpack.c.l.b16 %v742
      %v1005 = vunpack.c.h.b16 %v742
      %v1006 = vunpack.c.l.b16 %v743
      %v1007 = vunpack.c.h.b16 %v743
      %v1008 = vunpack.c.l.b16 %v744
      %v1009 = vunpack.c.h.b16 %v744
      %v1010 = vunpack.c.l.b16 %v745
      %v1011 = vunpack.c.h.b16 %v745
      %v1012 = vunpack.c.l.b16 %v746
      %v1013 = vunpack.c.h.b16 %v746
      %v1014 = vunpack.c.l.b16 %v747
      %v1015 = vunpack.c.h.b16 %v747
      %v1016 = vunpack.c.l.b16 %v748
      %v1017 = vunpack.c.h.b16 %v748
      %v1018 = vunpack.c.l.b16 %v749
      %v1019 = vunpack.c.h.b16 %v749
      %v1020 = vunpack.c.l.b16 %v750
      %v1021 = vunpack.c.h.b16 %v750
      %v1022 = vunpack.c.l.b16 %v751
      %v1023 = vunpack.c.h.b16 %v751
      %v1024 = vunpack.c.l.b16 %v752
      %v1025 = vunpack.c.h.b16 %v752
      %v1026 = vunpack.c.l.b16 %v753
      %v1027 = vunpack.c.h.b16 %v753
      %v1028 = vunpack.c.l.b16 %v754
      %v1029 = vunpack.c.h.b16 %v754
      %v1030 = vunpack.c.l.b16 %v755
      %v1031 = vunpack.c.h.b16 %v755
      %v1032 = vunpack.c.l.b16 %v756
      %v1033 = vunpack.c.h.b16 %v756
      %v1034 = vunpack.c.l.b16 %v757
      %v1035 = vunpack.c.h.b16 %v757
      %v1036 = vunpack.c.l.b16 %v758
      %v1037 = vunpack.c.h.b16 %v758
      %v1038 = vunpack.c.l.b16 %v759
      %v1039 = vunpack.c.h.b16 %v759
      %v1040 = vunpack.c.l.b16 %v760
      %v1041 = vunpack.c.h.b16 %v760
      %v1042 = vunpack.c.l.b16 %v761
      %v1043 = vunpack.c.h.b16 %v761
      %v1044 = vunpack.c.l.b16 %v762
      %v1045 = vunpack.c.h.b16 %v762
      %v1046 = vunpack.c.l.b16 %v763
      %v1047 = vunpack.c.h.b16 %v763
      %v1048 = vunpack.c.l.b16 %v764
      %v1049 = vunpack.c.h.b16 %v764
      %v1050 = vunpack.c.l.b16 %v765
      %v1051 = vunpack.c.h.b16 %v765
      %v1052 = vunpack.c.l.b16 %v766
      %v1053 = vunpack.c.h.b16 %v766
      %v1054 = vunpack.c.l.b16 %v767
      %v1055 = vunpack.c.h.b16 %v767
      %v1056 = vunpack.c.l.b16 %v768
      %v1057 = vunpack.c.h.b16 %v768
      %v1058 = vunpack.c.l.b16 %v769
      %v1059 = vunpack.c.h.b16 %v769
      %v1060 = vunpack.c.l.b16 %v770
      %v1061 = vunpack.c.h.b16 %v770
      %v1062 = vunpack.c.l.b16 %v771
      %v1063 = vunpack.c.h.b16 %v771
      %v1064 = vunpack.c.l.b16 %v772
      %v1065 = vunpack.c.h.b16 %v772
      %v1066 = vunpack.c.l.b16 %v773
      %v1067 = vunpack.c.h.b16 %v773
      %v1068 = vunpack.c.l.b16 %v774
      %v1069 = vunpack.c.h.b16 %v774
      %v1070 = vunpack.c.l.b16 %v775
      %v1071 = vunpack.c.h.b16 %v775
      %v1072 = vunpack.c.l.b16 %v776
      %v1073 = vunpack.c.h.b16 %v776
      %v1074 = vunpack.c.l.b16 %v777
      %v1075 = vunpack.c.h.b16 %v777
      %v1076 = vunpack.c.l.b16 %v778
      %v1077 = vunpack.c.h.b16 %v778
      %v1078 = vunpack.c.l.b16 %v779
      %v1079 = vunpack.c.h.b16 %v779
      %v1080 = vunpack.c.l.b16 %v780
      %v1081 = vunpack.c.h.b16 %v780
      %v1082 = vunpack.c.l.b16 %v781
      %v1083 = vunpack.c.h.b16 %v781
      %v1084 = vunpack.c.l.b16 %v782
      %v1085 = vunpack.c.h.b16 %v782
      %v1086 = vunpack.c.l.b16 %v783
      %v1087 = vunpack.c.h.b16 %v783
      %v1088 = vunpack.c.l.b16 %v784
      %v1089 = vunpack.c.h.b16 %v784
      %v1090 = vunpack.c.l.b16 %v785
      %v1091 = vunpack.c.h.b16 %v785
      %v1092 = vunpack.c.l.b16 %v786
      %v1093 = vunpack.c.h.b16 %v786
      %v1094 = vunpack.c.l.b16 %v787
      %v1095 = vunpack.c.h.b16 %v787
      %v1096 = vunpack.c.l.b16 %v788
      %v1097 = vunpack.c.h.b16 %v788
      %v1098 = vunpack.c.l.b16 %v789
      %v1099 = vunpack.c.h.b16 %v789
      %v1100 = vunpack.c.l.b16 %v790
      %v1101 = vunpack.c.h.b16 %v790
      %v1102 = vunpack.c.l.b16 %v791
      %v1103 = vunpack.c.h.b16 %v791
      %v1104 = vunpack.c.l.b16 %v792
      %v1105 = vunpack.c.h.b16 %v792
      %v1106 = vunpack.c.l.b16 %v793
      %v1107 = vunpack.c.h.b16 %v793
      %v1108 = vunpack.c.l.b16 %v794
      %v1109 = vunpack.c.h.b16 %v794
      %v1110 = vunpack.c.l.b16 %v795
      %v1111 = vunpack.c.h.b16 %v795
      %v1112 = vunpack.c.l.b16 %v796
      %v1113 = vunpack.c.h.b16 %v796
      %v1114 = vunpack.c.l.b16 %v797
      %v1115 = vunpack.c.h.b16 %v797
      %v1116 = vunpack.c.l.b16 %v798
      %v1117 = vunpack.c.h.b16 %v798
      %v1118 = vunpack.c.l.b16 %v799
      %v1119 = vunpack.c.h.b16 %v799
      %v1120 = vunpack.c.l.b16 %v800
      %v1121 = vunpack.c.h.b16 %v800
      %v1122 = vunpack.c.l.b16 %v801
      %v1123 = vunpack.c.h.b16 %v801
      %v1124 = vunpack.c.l.b16 %v802
      %v1125 = vunpack.c.h.b16 %v802
      %v1126 = vunpack.c.l.b16 %v803
      %v1127 = vunpack.c.h.b16 %v803
      %v1128 = vunpack.c.l.b16 %v804
      %v1129 = vunpack.c.h.b16 %v804
      %v1130 = vunpack.c.l.b16 %v805
      %v1131 = vunpack.c.h.b16 %v805
      %v1132 = vunpack.c.l.b16 %v806
      %v1133 = vunpack.c.h.b16 %v806
      %v1134 = vunpack.c.l.b16 %v807
      %v1135 = vunpack.c.h.b16 %v807
      %v1136 = vunpack.c.l.b16 %v808
      %v1137 = vunpack.c.h.b16 %v808
      %v1138 = vunpack.c.l.b16 %v809
      %v1139 = vunpack.c.h.b16 %v809
      %v1140 = vunpack.c.l.b16 %v810
      %v1141 = vunpack.c.h.b16 %v810
      %v1142 = vunpack.c.l.b16 %v811
      %v1143 = vunpack.c.h.b16 %v811
      %v1144 = vunpack.c.l.b16 %v812
      %v1145 = vunpack.c.h.b16 %v812
      %v1146 = vunpack.c.l.b16 %v813
      %v1147 = vunpack.c.h.b16 %v813
      %v1148 = vunpack.c.l.b16 %v814
      %v1149 = vunpack.c.h.b16 %v814
      %v1150 = vunpack.c.l.b16 %v815
      %v1151 = vunpack.c.h.b16 %v815
      %v1152 = vunpack.c.l.b16 %v816
      %v1153 = vunpack.c.h.b16 %v816
      %v1154 = vunpack.c.l.b16 %v817
      %v1155 = vunpack.c.h.b16 %v817
      %v1156 = vunpack.c.l.b16 %v818
      %v1157 = vunpack.c.h.b16 %v818
      %v1158 = vunpack.c.l.b16 %v819
      %v1159 = vunpack.c.h.b16 %v819
      %v1160 = vunpack.c.l.b16 %v820
      %v1161 = vunpack.c.h.b16 %v820
      %v1162 = vunpack.c.l.b16 %v821
      %v1163 = vunpack.c.h.b16 %v821
      %v1164 = vunpack.c.l.b16 %v822
      %v1165 = vunpack.c.h.b16 %v822
      %v1166 = vunpack.c.l.b16 %v823
      %v1167 = vunpack.c.h.b16 %v823
      %v1168 = vunpack.c.l.b16 %v824
      %v1169 = vunpack.c.h.b16 %v824
      %v1170 = vunpack.c.l.b16 %v825
      %v1171 = vunpack.c.h.b16 %v825
      %v1172 = vunpack.c.l.b16 %v826
      %v1173 = vunpack.c.h.b16 %v826
      %v1174 = vunpack.c.l.b16 %v827
      %v1175 = vunpack.c.h.b16 %v827
      %v1176 = vunpack.c.l.b16 %v828
      %v1177 = vunpack.c.h.b16 %v828
      %v1178 = vunpack.c.l.b16 %v829
      %v1179 = vunpack.c.h.b16 %v829
      %v1180 = vunpack.c.l.b16 %v830
      %v1181 = vunpack.c.h.b16 %v830
      %v1182 = vunpack.c.l.b16 %v831
      %v1183 = vunpack.c.h.b16 %v831
      %v1184 = vunpack.c.l.b16 %v832
      %v1185 = vunpack.c.h.b16 %v832
      %v1186 = vunpack.c.l.b16 %v833
      %v1187 = vunpack.c.h.b16 %v833
      %v1188 = vunpack.c.l.b16 %v834
      %v1189 = vunpack.c.h.b16 %v834
      %v1190 = vunpack.c.l.b16 %v835
      %v1191 = vunpack.c.h.b16 %v835
      %v1192 = vunpack.c.l.b16 %v836
      %v1193 = vunpack.c.h.b16 %v836
      %v1194 = vunpack.c.l.b16 %v837
      %v1195 = vunpack.c.h.b16 %v837
      %v1196 = vunpack.c.l.b16 %v838
      %v1197 = vunpack.c.h.b16 %v838
      %v1198 = vunpack.c.l.b16 %v839
      %v1199 = vunpack.c.h.b16 %v839
      %v1200 = vunpack.c.l.b16 %v840
      %v1201 = vunpack.c.h.b16 %v840
      %v1202 = vunpack.c.l.b16 %v841
      %v1203 = vunpack.c.h.b16 %v841
      %v1204 = vunpack.c.l.b16 %v842
      %v1205 = vunpack.c.h.b16 %v842
      %v1206 = vunpack.c.l.b16 %v843
      %v1207 = vunpack.c.h.b16 %v843
      %v1208 = vunpack.c.l.b16 %v844
      %v1209 = vunpack.c.h.b16 %v844
      %v1210 = vunpack.c.l.b16 %v845
      %v1211 = vunpack.c.h.b16 %v845
      %v1212 = vunpack.c.l.b16 %v846
      %v1213 = vunpack.c.h.b16 %v846
      %v1214 = vunpack.c.l.b16 %v847
      %v1215 = vunpack.c.h.b16 %v847
      %v1216 = vunpack.c.l.b16 %v848
      %v1217 = vunpack.c.h.b16 %v848
      %v1218 = vunpack.c.l.b16 %v849
      %v1219 = vunpack.c.h.b16 %v849
      %v1220 = vunpack.c.l.b16 %v850
      %v1221 = vunpack.c.h.b16 %v850
      %v1222 = vunpack.c.l.b16 %v851
      %v1223 = vunpack.c.h.b16 %v851
      %v1224 = vunpack.c.l.b16 %v852
      %v1225 = vunpack.c.h.b16 %v852
      %v1226 = vunpack.c.l.b16 %v853
      %v1227 = vunpack.c.h.b16 %v853
      %v1228 = vunpack.c.l.b16 %v854
      %v1229 = vunpack.c.h.b16 %v854
      %v1230 = vunpack.c.l.b16 %v855
      %v1231 = vunpack.c.h.b16 %v855
      %v1232 = vunpack.c.l.b16 %v856
      %v1233 = vunpack.c.h.b16 %v856
      %v1234 = vunpack.c.l.b16 %v857
      %v1235 = vunpack.c.h.b16 %v857
      %v1236 = vunpack.c.l.b16 %v858
      %v1237 = vunpack.c.h.b16 %v858
      %v1238 = vunpack.c.l.b16 %v859
      %v1239 = vunpack.c.h.b16 %v859
      %v1240 = vunpack.c.l.b16 %v860
      %v1241 = vunpack.c.h.b16 %v860
      %v1242 = vunpack.c.l.b16 %v861
      %v1243 = vunpack.c.h.b16 %v861
      %v1244 = vunpack.c.l.b16 %v862
      %v1245 = vunpack.c.h.b16 %v862
      %v1246 = vunpack.c.l.b16 %v863
      %v1247 = vunpack.c.h.b16 %v863
      %v1248 = vpack.c.b16 %v1000, %v992
      %v1249 = vpack.c.b16 %v1001, %v993
      %v1250 = vpack.c.b16 %v1002, %v994
      %v1251 = vpack.c.b16 %v1003, %v995
      %v1252 = vpack.c.b16 %v1004, %v996
      %v1253 = vpack.c.b16 %v1005, %v997
      %v1254 = vpack.c.b16 %v1006, %v998
      %v1255 = vpack.c.b16 %v1007, %v999
      %v1256 = vpack.c.b16 %v1016, %v1008
      %v1257 = vpack.c.b16 %v1017, %v1009
      %v1258 = vpack.c.b16 %v1018, %v1010
      %v1259 = vpack.c.b16 %v1019, %v1011
      %v1260 = vpack.c.b16 %v1020, %v1012
      %v1261 = vpack.c.b16 %v1021, %v1013
      %v1262 = vpack.c.b16 %v1022, %v1014
      %v1263 = vpack.c.b16 %v1023, %v1015
      %v1264 = vpack.c.b16 %v1032, %v1024
      %v1265 = vpack.c.b16 %v1033, %v1025
      %v1266 = vpack.c.b16 %v1034, %v1026
      %v1267 = vpack.c.b16 %v1035, %v1027
      %v1268 = vpack.c.b16 %v1036, %v1028
      %v1269 = vpack.c.b16 %v1037, %v1029
      %v1270 = vpack.c.b16 %v1038, %v1030
      %v1271 = vpack.c.b16 %v1039, %v1031
      %v1272 = vpack.c.b16 %v1048, %v1040
      %v1273 = vpack.c.b16 %v1049, %v1041
      %v1274 = vpack.c.b16 %v1050, %v1042
      %v1275 = vpack.c.b16 %v1051, %v1043
      %v1276 = vpack.c.b16 %v1052, %v1044
      %v1277 = vpack.c.b16 %v1053, %v1045
      %v1278 = vpack.c.b16 %v1054, %v1046
      %v1279 = vpack.c.b16 %v1055, %v1047
      %v1280 = vpack.c.b16 %v1064, %v1056
      %v1281 = vpack.c.b16 %v1065, %v1057
      %v1282 = vpack.c.b16 %v1066, %v1058
      %v1283 = vpack.c.b16 %v1067, %v1059
      %v1284 = vpack.c.b16 %v1068, %v1060
      %v1285 = vpack.c.b16 %v1069, %v1061
      %v1286 = vpack.c.b16 %v1070, %v1062
      %v1287 = vpack.c.b16 %v1071, %v1063
      %v1288 = vpack.c.b16 %v1080, %v1072
      %v1289 = vpack.c.b16 %v1081, %v1073
      %v1290 = vpack.c.b16 %v1082, %v1074
      %v1291 = vpack.c.b16 %v1083, %v1075
      %v1292 = vpack.c.b16 %v1084, %v1076
      %v1293 = vpack.c.b16 %v1085, %v1077
      %v1294 = vpack.c.b16 %v1086, %v1078
      %v1295 = vpack.c.b16 %v1087, %v1079
      %v1296 = vpack.c.b16 %v1096, %v1088
      %v1297 = vpack.c.b16 %v1097, %v1089
      %v1298 = vpack.c.b16 %v1098, %v1090
      %v1299 = vpack.c.b16 %v1099, %v1091
      %v1300 = vpack.c.b16 %v1100, %v1092
      %v1301 = vpack.c.b16 %v1101, %v1093
      %v1302 = vpack.c.b16 %v1102, %v1094
      %v1303 = vpack.c.b16 %v1103, %v1095
      %v1304 = vpack.c.b16 %v1112, %v1104
      %v1305 = vpack.c.b16 %v1113, %v1105
      %v1306 = vpack.c.b16 %v1114, %v1106
      %v1307 = vpack.c.b16 %v1115, %v1107
      %v1308 = vpack.c.b16 %v1116, %v1108
      %v1309 = vpack.c.b16 %v1117, %v1109
      %v1310 = vpack.c.b16 %v1118, %v1110
      %v1311 = vpack.c.b16 %v1119, %v1111
      %v1312 = vpack.c.b16 %v1128, %v1120
      %v1313 = vpack.c.b16 %v1129, %v1121
      %v1314 = vpack.c.b16 %v1130, %v1122
      %v1315 = vpack.c.b16 %v1131, %v1123
      %v1316 = vpack.c.b16 %v1132, %v1124
      %v1317 = vpack.c.b16 %v1133, %v1125
      %v1318 = vpack.c.b16 %v1134, %v1126
      %v1319 = vpack.c.b16 %v1135, %v1127
      %v1320 = vpack.c.b16 %v1144, %v1136
      %v1321 = vpack.c.b16 %v1145, %v1137
      %v1322 = vpack.c.b16 %v1146, %v1138
      %v1323 = vpack.c.b16 %v1147, %v1139
      %v1324 = vpack.c.b16 %v1148, %v1140
      %v1325 = vpack.c.b16 %v1149, %v1141
      %v1326 = vpack.c.b16 %v1150, %v1142
      %v1327 = vpack.c.b16 %v1151, %v1143
      %v1328 = vpack.c.b16 %v1160, %v1152
      %v1329 = vpack.c.b16 %v1161, %v1153
      %v1330 = vpack.c.b16 %v1162, %v1154
      %v1331 = vpack.c.b16 %v1163, %v1155
      %v1332 = vpack.c.b16 %v1164, %v1156
      %v1333 = vpack.c.b16 %v1165, %v1157
      %v1334 = vpack.c.b16 %v1166, %v1158
      %v1335 = vpack.c.b16 %v1167, %v1159
      %v1336 = vpack.c.b16 %v1176, %v1168
      %v1337 = vpack.c.b16 %v1177, %v1169
      %v1338 = vpack.c.b16 %v1178, %v1170
      %v1339 = vpack.c.b16 %v1179, %v1171
      %v1340 = vpack.c.b16 %v1180, %v1172
      %v1341 = vpack.c.b16 %v1181, %v1173
      %v1342 = vpack.c.b16 %v1182, %v1174
      %v1343 = vpack.c.b16 %v1183, %v1175
      %v1344 = vpack.c.b16 %v1192, %v1184
      %v1345 = vpack.c.b16 %v1193, %v1185
      %v1346 = vpack.c.b16 %v1194, %v1186
      %v1347 = vpack.c.b16 %v1195, %v1187
      %v1348 = vpack.c.b16 %v1196, %v1188
      %v1349 = vpack.c.b16 %v1197, %v1189
      %v1350 = vpack.c.b16 %v1198, %v1190
      %v1351 = vpack.c.b16 %v1199, %v1191
      %v1352 = vpack.c.b16 %v1208, %v1200
      %v1353 = vpack.c.b16 %v1209, %v1201
      %v1354 = vpack.c.b16 %v1210, %v1202
      %v1355 = vpack.c.b16 %v1211, %v1203
      %v1356 = vpack.c.b16 %v1212, %v1204
      %v1357 = vpack.c.b16 %v1213, %v1205
      %v1358 = vpack.c.b16 %v1214, %v1206
      %v1359 = vpack.c.b16 %v1215, %v1207
      %v1360 = vpack.c.b16 %v1224, %v1216
      %v1361 = vpack.c.b16 %v1225, %v1217
      %v1362 = vpack.c.b16 %v1226, %v1218
      %v1363 = vpack.c.b16 %v1227, %v1219
      %v1364 = vpack.c.b16 %v1228, %v1220
      %v1365 = vpack.c.b16 %v1229, %v1221
      %v1366 = vpack.c.b16 %v1230, %v1222
      %v1367 = vpack.c.b16 %v1231, %v1223
      %v1368 = vpack.c.b16 %v1240, %v1232
      %v1369 = vpack.c.b16 %v1241, %v1233
      %v1370 = vpack.c.b16 %v1242, %v1234
      %v1371 = vpack.c.b16 %v1243, %v1235
      %v1372 = vpack.c.b16 %v1244, %v1236
      %v1373 = vpack.c.b16 %v1245, %v1237
      %v1374 = vpack.c.b16 %v1246, %v1238
      %v1375 = vpack.c.b16 %v1247, %v1239
      %1504 = vmatpush.bf16.msra.mxu0 %v1304
      %1505 = vmatpush.bf16.msra.mxu0 %v1296
      %1506 = vmatpush.bf16.msra.mxu0 %v1288
      %1507 = vmatpush.bf16.msra.mxu0 %v1280
      %1508 = vmatpush.bf16.msra.mxu0 %v1272
      %1509 = vmatpush.bf16.msra.mxu0 %v1264
      %1510 = vmatpush.bf16.msra.mxu0 %v1256
      %1511 = vmatpush.bf16.msra.mxu0 %v1248
      %1512 = vmatmul.bf16.gmra.mxu0 %v720
      %v1513 = vpop.f32.mrf.mxu0
      %v1514 = vadd.f32 0.0, %v1513
      %v1515 = vpop.f32.mrf.mxu0
      %v1516 = vadd.f32 0.0, %v1515
      %1517 = vmatmul.bf16.gmra.mxu0 %v722
      %v1518 = vpop.f32.mrf.mxu0
      %v1519 = vadd.f32 0.0, %v1518
      %v1520 = vpop.f32.mrf.mxu0
      %v1521 = vadd.f32 0.0, %v1520
      %1522 = vmatmul.bf16.gmra.mxu0 %v724
      %v1523 = vpop.f32.mrf.mxu0
      %v1524 = vadd.f32 0.0, %v1523
      %v1525 = vpop.f32.mrf.mxu0
      %v1526 = vadd.f32 0.0, %v1525
      %1527 = vmatmul.bf16.gmra.mxu0 %v726
      %v1528 = vpop.f32.mrf.mxu0
      %v1529 = vadd.f32 0.0, %v1528
      %v1530 = vpop.f32.mrf.mxu0
      %v1531 = vadd.f32 0.0, %v1530
      %1532 = vmatmul.bf16.gmra.mxu0 %v728
      %v1533 = vpop.f32.mrf.mxu0
      %v1534 = vadd.f32 0.0, %v1533
      %v1535 = vpop.f32.mrf.mxu0
      %v1536 = vadd.f32 0.0, %v1535
      %1537 = vmatmul.bf16.gmra.mxu0 %v730
      %v1538 = vpop.f32.mrf.mxu0
      %v1539 = vadd.f32 0.0, %v1538
      %v1540 = vpop.f32.mrf.mxu0
      %v1541 = vadd.f32 0.0, %v1540
      %1542 = vmatmul.bf16.gmra.mxu0 %v732
      %v1543 = vpop.f32.mrf.mxu0
      %v1544 = vadd.f32 0.0, %v1543
      %v1545 = vpop.f32.mrf.mxu0
      %v1546 = vadd.f32 0.0, %v1545
      %1547 = vmatmul.bf16.gmra.mxu0 %v734
      %v1548 = vpop.f32.mrf.mxu0
      %v1549 = vadd.f32 0.0, %v1548
      %v1550 = vpop.f32.mrf.mxu0
      %v1551 = vadd.f32 0.0, %v1550
      %1552 = vdwg.mxu0
      %1553 = vmatpush.bf16.msra.mxu0 %v1368
      %1554 = vmatpush.bf16.msra.mxu0 %v1360
      %1555 = vmatpush.bf16.msra.mxu0 %v1352
      %1556 = vmatpush.bf16.msra.mxu0 %v1344
      %1557 = vmatpush.bf16.msra.mxu0 %v1336
      %1558 = vmatpush.bf16.msra.mxu0 %v1328
      %1559 = vmatpush.bf16.msra.mxu0 %v1320
      %1560 = vmatpush.bf16.msra.mxu0 %v1312
      %1561 = vmatmul.bf16.gmra.mxu0 %v721
      %v1562 = vpop.f32.mrf.mxu0
      %v1563 = vadd.f32 %v1514, %v1562
      %v1564 = vpop.f32.mrf.mxu0
      %v1565 = vadd.f32 %v1516, %v1564
      %1566 = vmatmul.bf16.gmra.mxu0 %v723
      %v1567 = vpop.f32.mrf.mxu0
      %v1568 = vadd.f32 %v1519, %v1567
      %v1569 = vpop.f32.mrf.mxu0
      %v1570 = vadd.f32 %v1521, %v1569
      %1571 = vmatmul.bf16.gmra.mxu0 %v725
      %v1572 = vpop.f32.mrf.mxu0
      %v1573 = vadd.f32 %v1524, %v1572
      %v1574 = vpop.f32.mrf.mxu0
      %v1575 = vadd.f32 %v1526, %v1574
      %1576 = vmatmul.bf16.gmra.mxu0 %v727
      %v1577 = vpop.f32.mrf.mxu0
      %v1578 = vadd.f32 %v1529, %v1577
      %v1579 = vpop.f32.mrf.mxu0
      %v1580 = vadd.f32 %v1531, %v1579
      %1581 = vmatmul.bf16.gmra.mxu0 %v729
      %v1582 = vpop.f32.mrf.mxu0
      %v1583 = vadd.f32 %v1534, %v1582
      %v1584 = vpop.f32.mrf.mxu0
      %v1585 = vadd.f32 %v1536, %v1584
      %1586 = vmatmul.bf16.gmra.mxu0 %v731
      %v1587 = vpop.f32.mrf.mxu0
      %v1588 = vadd.f32 %v1539, %v1587
      %v1589 = vpop.f32.mrf.mxu0
      %v1590 = vadd.f32 %v1541, %v1589
      %1591 = vmatmul.bf16.gmra.mxu0 %v733
      %v1592 = vpop.f32.mrf.mxu0
      %v1593 = vadd.f32 %v1544, %v1592
      %v1594 = vpop.f32.mrf.mxu0
      %v1595 = vadd.f32 %v1546, %v1594
      %1596 = vmatmul.bf16.gmra.mxu0 %v735
      %v1597 = vpop.f32.mrf.mxu0
      %v1598 = vadd.f32 %v1549, %v1597
      %v1599 = vpop.f32.mrf.mxu0
      %v1600 = vadd.f32 %v1551, %v1599
      %1601 = vdwg.mxu0
      %1602 = vmatpush.bf16.msra.mxu0 %v1305
      %1603 = vmatpush.bf16.msra.mxu0 %v1297
      %1604 = vmatpush.bf16.msra.mxu0 %v1289
      %1605 = vmatpush.bf16.msra.mxu0 %v1281
      %1606 = vmatpush.bf16.msra.mxu0 %v1273
      %1607 = vmatpush.bf16.msra.mxu0 %v1265
      %1608 = vmatpush.bf16.msra.mxu0 %v1257
      %1609 = vmatpush.bf16.msra.mxu0 %v1249
      %1610 = vmatmul.bf16.gmra.mxu0 %v720
      %v1611 = vpop.f32.mrf.mxu0
      %v1612 = vadd.f32 0.0, %v1611
      %v1613 = vpop.f32.mrf.mxu0
      %v1614 = vadd.f32 0.0, %v1613
      %1615 = vmatmul.bf16.gmra.mxu0 %v722
      %v1616 = vpop.f32.mrf.mxu0
      %v1617 = vadd.f32 0.0, %v1616
      %v1618 = vpop.f32.mrf.mxu0
      %v1619 = vadd.f32 0.0, %v1618
      %1620 = vmatmul.bf16.gmra.mxu0 %v724
      %v1621 = vpop.f32.mrf.mxu0
      %v1622 = vadd.f32 0.0, %v1621
      %v1623 = vpop.f32.mrf.mxu0
      %v1624 = vadd.f32 0.0, %v1623
      %1625 = vmatmul.bf16.gmra.mxu0 %v726
      %v1626 = vpop.f32.mrf.mxu0
      %v1627 = vadd.f32 0.0, %v1626
      %v1628 = vpop.f32.mrf.mxu0
      %v1629 = vadd.f32 0.0, %v1628
      %1630 = vmatmul.bf16.gmra.mxu0 %v728
      %v1631 = vpop.f32.mrf.mxu0
      %v1632 = vadd.f32 0.0, %v1631
      %v1633 = vpop.f32.mrf.mxu0
      %v1634 = vadd.f32 0.0, %v1633
      %1635 = vmatmul.bf16.gmra.mxu0 %v730
      %v1636 = vpop.f32.mrf.mxu0
      %v1637 = vadd.f32 0.0, %v1636
      %v1638 = vpop.f32.mrf.mxu0
      %v1639 = vadd.f32 0.0, %v1638
      %1640 = vmatmul.bf16.gmra.mxu0 %v732
      %v1641 = vpop.f32.mrf.mxu0
      %v1642 = vadd.f32 0.0, %v1641
      %v1643 = vpop.f32.mrf.mxu0
      %v1644 = vadd.f32 0.0, %v1643
      %1645 = vmatmul.bf16.gmra.mxu0 %v734
      %v1646 = vpop.f32.mrf.mxu0
      %v1647 = vadd.f32 0.0, %v1646
      %v1648 = vpop.f32.mrf.mxu0
      %v1649 = vadd.f32 0.0, %v1648
      %1650 = vdwg.mxu0
      %1651 = vmatpush.bf16.msra.mxu0 %v1369
      %1652 = vmatpush.bf16.msra.mxu0 %v1361
      %1653 = vmatpush.bf16.msra.mxu0 %v1353
      %1654 = vmatpush.bf16.msra.mxu0 %v1345
      %1655 = vmatpush.bf16.msra.mxu0 %v1337
      %1656 = vmatpush.bf16.msra.mxu0 %v1329
      %1657 = vmatpush.bf16.msra.mxu0 %v1321
      %1658 = vmatpush.bf16.msra.mxu0 %v1313
      %1659 = vmatmul.bf16.gmra.mxu0 %v721
      %v1660 = vpop.f32.mrf.mxu0
      %v1661 = vadd.f32 %v1612, %v1660
      %v1662 = vpop.f32.mrf.mxu0
      %v1663 = vadd.f32 %v1614, %v1662
      %1664 = vmatmul.bf16.gmra.mxu0 %v723
      %v1665 = vpop.f32.mrf.mxu0
      %v1666 = vadd.f32 %v1617, %v1665
      %v1667 = vpop.f32.mrf.mxu0
      %v1668 = vadd.f32 %v1619, %v1667
      %1669 = vmatmul.bf16.gmra.mxu0 %v725
      %v1670 = vpop.f32.mrf.mxu0
      %v1671 = vadd.f32 %v1622, %v1670
      %v1672 = vpop.f32.mrf.mxu0
      %v1673 = vadd.f32 %v1624, %v1672
      %1674 = vmatmul.bf16.gmra.mxu0 %v727
      %v1675 = vpop.f32.mrf.mxu0
      %v1676 = vadd.f32 %v1627, %v1675
      %v1677 = vpop.f32.mrf.mxu0
      %v1678 = vadd.f32 %v1629, %v1677
      %1679 = vmatmul.bf16.gmra.mxu0 %v729
      %v1680 = vpop.f32.mrf.mxu0
      %v1681 = vadd.f32 %v1632, %v1680
      %v1682 = vpop.f32.mrf.mxu0
      %v1683 = vadd.f32 %v1634, %v1682
      %1684 = vmatmul.bf16.gmra.mxu0 %v731
      %v1685 = vpop.f32.mrf.mxu0
      %v1686 = vadd.f32 %v1637, %v1685
      %v1687 = vpop.f32.mrf.mxu0
      %v1688 = vadd.f32 %v1639, %v1687
      %1689 = vmatmul.bf16.gmra.mxu0 %v733
      %v1690 = vpop.f32.mrf.mxu0
      %v1691 = vadd.f32 %v1642, %v1690
      %v1692 = vpop.f32.mrf.mxu0
      %v1693 = vadd.f32 %v1644, %v1692
      %1694 = vmatmul.bf16.gmra.mxu0 %v735
      %v1695 = vpop.f32.mrf.mxu0
      %v1696 = vadd.f32 %v1647, %v1695
      %v1697 = vpop.f32.mrf.mxu0
      %v1698 = vadd.f32 %v1649, %v1697
      %1699 = vdwg.mxu0
      %1700 = vmatpush.bf16.msra.mxu0 %v1306
      %1701 = vmatpush.bf16.msra.mxu0 %v1298
      %1702 = vmatpush.bf16.msra.mxu0 %v1290
      %1703 = vmatpush.bf16.msra.mxu0 %v1282
      %1704 = vmatpush.bf16.msra.mxu0 %v1274
      %1705 = vmatpush.bf16.msra.mxu0 %v1266
      %1706 = vmatpush.bf16.msra.mxu0 %v1258
      %1707 = vmatpush.bf16.msra.mxu0 %v1250
      %1708 = vmatmul.bf16.gmra.mxu0 %v720
      %v1709 = vpop.f32.mrf.mxu0
      %v1710 = vadd.f32 0.0, %v1709
      %v1711 = vpop.f32.mrf.mxu0
      %v1712 = vadd.f32 0.0, %v1711
      %1713 = vmatmul.bf16.gmra.mxu0 %v722
      %v1714 = vpop.f32.mrf.mxu0
      %v1715 = vadd.f32 0.0, %v1714
      %v1716 = vpop.f32.mrf.mxu0
      %v1717 = vadd.f32 0.0, %v1716
      %1718 = vmatmul.bf16.gmra.mxu0 %v724
      %v1719 = vpop.f32.mrf.mxu0
      %v1720 = vadd.f32 0.0, %v1719
      %v1721 = vpop.f32.mrf.mxu0
      %v1722 = vadd.f32 0.0, %v1721
      %1723 = vmatmul.bf16.gmra.mxu0 %v726
      %v1724 = vpop.f32.mrf.mxu0
      %v1725 = vadd.f32 0.0, %v1724
      %v1726 = vpop.f32.mrf.mxu0
      %v1727 = vadd.f32 0.0, %v1726
      %1728 = vmatmul.bf16.gmra.mxu0 %v728
      %v1729 = vpop.f32.mrf.mxu0
      %v1730 = vadd.f32 0.0, %v1729
      %v1731 = vpop.f32.mrf.mxu0
      %v1732 = vadd.f32 0.0, %v1731
      %1733 = vmatmul.bf16.gmra.mxu0 %v730
      %v1734 = vpop.f32.mrf.mxu0
      %v1735 = vadd.f32 0.0, %v1734
      %v1736 = vpop.f32.mrf.mxu0
      %v1737 = vadd.f32 0.0, %v1736
      %1738 = vmatmul.bf16.gmra.mxu0 %v732
      %v1739 = vpop.f32.mrf.mxu0
      %v1740 = vadd.f32 0.0, %v1739
      %v1741 = vpop.f32.mrf.mxu0
      %v1742 = vadd.f32 0.0, %v1741
      %1743 = vmatmul.bf16.gmra.mxu0 %v734
      %v1744 = vpop.f32.mrf.mxu0
      %v1745 = vadd.f32 0.0, %v1744
      %v1746 = vpop.f32.mrf.mxu0
      %v1747 = vadd.f32 0.0, %v1746
      %1748 = vdwg.mxu0
      %1749 = vmatpush.bf16.msra.mxu0 %v1370
      %1750 = vmatpush.bf16.msra.mxu0 %v1362
      %1751 = vmatpush.bf16.msra.mxu0 %v1354
      %1752 = vmatpush.bf16.msra.mxu0 %v1346
      %1753 = vmatpush.bf16.msra.mxu0 %v1338
      %1754 = vmatpush.bf16.msra.mxu0 %v1330
      %1755 = vmatpush.bf16.msra.mxu0 %v1322
      %1756 = vmatpush.bf16.msra.mxu0 %v1314
      %1757 = vmatmul.bf16.gmra.mxu0 %v721
      %v1758 = vpop.f32.mrf.mxu0
      %v1759 = vadd.f32 %v1710, %v1758
      %v1760 = vpop.f32.mrf.mxu0
      %v1761 = vadd.f32 %v1712, %v1760
      %1762 = vmatmul.bf16.gmra.mxu0 %v723
      %v1763 = vpop.f32.mrf.mxu0
      %v1764 = vadd.f32 %v1715, %v1763
      %v1765 = vpop.f32.mrf.mxu0
      %v1766 = vadd.f32 %v1717, %v1765
      %1767 = vmatmul.bf16.gmra.mxu0 %v725
      %v1768 = vpop.f32.mrf.mxu0
      %v1769 = vadd.f32 %v1720, %v1768
      %v1770 = vpop.f32.mrf.mxu0
      %v1771 = vadd.f32 %v1722, %v1770
      %1772 = vmatmul.bf16.gmra.mxu0 %v727
      %v1773 = vpop.f32.mrf.mxu0
      %v1774 = vadd.f32 %v1725, %v1773
      %v1775 = vpop.f32.mrf.mxu0
      %v1776 = vadd.f32 %v1727, %v1775
      %1777 = vmatmul.bf16.gmra.mxu0 %v729
      %v1778 = vpop.f32.mrf.mxu0
      %v1779 = vadd.f32 %v1730, %v1778
      %v1780 = vpop.f32.mrf.mxu0
      %v1781 = vadd.f32 %v1732, %v1780
      %1782 = vmatmul.bf16.gmra.mxu0 %v731
      %v1783 = vpop.f32.mrf.mxu0
      %v1784 = vadd.f32 %v1735, %v1783
      %v1785 = vpop.f32.mrf.mxu0
      %v1786 = vadd.f32 %v1737, %v1785
      %1787 = vmatmul.bf16.gmra.mxu0 %v733
      %v1788 = vpop.f32.mrf.mxu0
      %v1789 = vadd.f32 %v1740, %v1788
      %v1790 = vpop.f32.mrf.mxu0
      %v1791 = vadd.f32 %v1742, %v1790
      %1792 = vmatmul.bf16.gmra.mxu0 %v735
      %v1793 = vpop.f32.mrf.mxu0
      %v1794 = vadd.f32 %v1745, %v1793
      %v1795 = vpop.f32.mrf.mxu0
      %v1796 = vadd.f32 %v1747, %v1795
      %1797 = vdwg.mxu0
      %1798 = vmatpush.bf16.msra.mxu0 %v1307
      %1799 = vmatpush.bf16.msra.mxu0 %v1299
      %1800 = vmatpush.bf16.msra.mxu0 %v1291
      %1801 = vmatpush.bf16.msra.mxu0 %v1283
      %1802 = vmatpush.bf16.msra.mxu0 %v1275
      %1803 = vmatpush.bf16.msra.mxu0 %v1267
      %1804 = vmatpush.bf16.msra.mxu0 %v1259
      %1805 = vmatpush.bf16.msra.mxu0 %v1251
      %1806 = vmatmul.bf16.gmra.mxu0 %v720
      %v1807 = vpop.f32.mrf.mxu0
      %v1808 = vadd.f32 0.0, %v1807
      %v1809 = vpop.f32.mrf.mxu0
      %v1810 = vadd.f32 0.0, %v1809
      %1811 = vmatmul.bf16.gmra.mxu0 %v722
      %v1812 = vpop.f32.mrf.mxu0
      %v1813 = vadd.f32 0.0, %v1812
      %v1814 = vpop.f32.mrf.mxu0
      %v1815 = vadd.f32 0.0, %v1814
      %1816 = vmatmul.bf16.gmra.mxu0 %v724
      %v1817 = vpop.f32.mrf.mxu0
      %v1818 = vadd.f32 0.0, %v1817
      %v1819 = vpop.f32.mrf.mxu0
      %v1820 = vadd.f32 0.0, %v1819
      %1821 = vmatmul.bf16.gmra.mxu0 %v726
      %v1822 = vpop.f32.mrf.mxu0
      %v1823 = vadd.f32 0.0, %v1822
      %v1824 = vpop.f32.mrf.mxu0
      %v1825 = vadd.f32 0.0, %v1824
      %1826 = vmatmul.bf16.gmra.mxu0 %v728
      %v1827 = vpop.f32.mrf.mxu0
      %v1828 = vadd.f32 0.0, %v1827
      %v1829 = vpop.f32.mrf.mxu0
      %v1830 = vadd.f32 0.0, %v1829
      %1831 = vmatmul.bf16.gmra.mxu0 %v730
      %v1832 = vpop.f32.mrf.mxu0
      %v1833 = vadd.f32 0.0, %v1832
      %v1834 = vpop.f32.mrf.mxu0
      %v1835 = vadd.f32 0.0, %v1834
      %1836 = vmatmul.bf16.gmra.mxu0 %v732
      %v1837 = vpop.f32.mrf.mxu0
      %v1838 = vadd.f32 0.0, %v1837
      %v1839 = vpop.f32.mrf.mxu0
      %v1840 = vadd.f32 0.0, %v1839
      %1841 = vmatmul.bf16.gmra.mxu0 %v734
      %v1842 = vpop.f32.mrf.mxu0
      %v1843 = vadd.f32 0.0, %v1842
      %v1844 = vpop.f32.mrf.mxu0
      %v1845 = vadd.f32 0.0, %v1844
      %1846 = vdwg.mxu0
      %1847 = vmatpush.bf16.msra.mxu0 %v1371
      %1848 = vmatpush.bf16.msra.mxu0 %v1363
      %1849 = vmatpush.bf16.msra.mxu0 %v1355
      %1850 = vmatpush.bf16.msra.mxu0 %v1347
      %1851 = vmatpush.bf16.msra.mxu0 %v1339
      %1852 = vmatpush.bf16.msra.mxu0 %v1331
      %1853 = vmatpush.bf16.msra.mxu0 %v1323
      %1854 = vmatpush.bf16.msra.mxu0 %v1315
      %1855 = vmatmul.bf16.gmra.mxu0 %v721
      %v1856 = vpop.f32.mrf.mxu0
      %v1857 = vadd.f32 %v1808, %v1856
      %v1858 = vpop.f32.mrf.mxu0
      %v1859 = vadd.f32 %v1810, %v1858
      %1860 = vmatmul.bf16.gmra.mxu0 %v723
      %v1861 = vpop.f32.mrf.mxu0
      %v1862 = vadd.f32 %v1813, %v1861
      %v1863 = vpop.f32.mrf.mxu0
      %v1864 = vadd.f32 %v1815, %v1863
      %1865 = vmatmul.bf16.gmra.mxu0 %v725
      %v1866 = vpop.f32.mrf.mxu0
      %v1867 = vadd.f32 %v1818, %v1866
      %v1868 = vpop.f32.mrf.mxu0
      %v1869 = vadd.f32 %v1820, %v1868
      %1870 = vmatmul.bf16.gmra.mxu0 %v727
      %v1871 = vpop.f32.mrf.mxu0
      %v1872 = vadd.f32 %v1823, %v1871
      %v1873 = vpop.f32.mrf.mxu0
      %v1874 = vadd.f32 %v1825, %v1873
      %1875 = vmatmul.bf16.gmra.mxu0 %v729
      %v1876 = vpop.f32.mrf.mxu0
      %v1877 = vadd.f32 %v1828, %v1876
      %v1878 = vpop.f32.mrf.mxu0
      %v1879 = vadd.f32 %v1830, %v1878
      %1880 = vmatmul.bf16.gmra.mxu0 %v731
      %v1881 = vpop.f32.mrf.mxu0
      %v1882 = vadd.f32 %v1833, %v1881
      %v1883 = vpop.f32.mrf.mxu0
      %v1884 = vadd.f32 %v1835, %v1883
      %1885 = vmatmul.bf16.gmra.mxu0 %v733
      %v1886 = vpop.f32.mrf.mxu0
      %v1887 = vadd.f32 %v1838, %v1886
      %v1888 = vpop.f32.mrf.mxu0
      %v1889 = vadd.f32 %v1840, %v1888
      %1890 = vmatmul.bf16.gmra.mxu0 %v735
      %v1891 = vpop.f32.mrf.mxu0
      %v1892 = vadd.f32 %v1843, %v1891
      %v1893 = vpop.f32.mrf.mxu0
      %v1894 = vadd.f32 %v1845, %v1893
      %1895 = vdwg.mxu0
      %1896 = vmatpush.bf16.msra.mxu0 %v1308
      %1897 = vmatpush.bf16.msra.mxu0 %v1300
      %1898 = vmatpush.bf16.msra.mxu0 %v1292
      %1899 = vmatpush.bf16.msra.mxu0 %v1284
      %1900 = vmatpush.bf16.msra.mxu0 %v1276
      %1901 = vmatpush.bf16.msra.mxu0 %v1268
      %1902 = vmatpush.bf16.msra.mxu0 %v1260
      %1903 = vmatpush.bf16.msra.mxu0 %v1252
      %1904 = vmatmul.bf16.gmra.mxu0 %v720
      %v1905 = vpop.f32.mrf.mxu0
      %v1906 = vadd.f32 0.0, %v1905
      %v1907 = vpop.f32.mrf.mxu0
      %v1908 = vadd.f32 0.0, %v1907
      %1909 = vmatmul.bf16.gmra.mxu0 %v722
      %v1910 = vpop.f32.mrf.mxu0
      %v1911 = vadd.f32 0.0, %v1910
      %v1912 = vpop.f32.mrf.mxu0
      %v1913 = vadd.f32 0.0, %v1912
      %1914 = vmatmul.bf16.gmra.mxu0 %v724
      %v1915 = vpop.f32.mrf.mxu0
      %v1916 = vadd.f32 0.0, %v1915
      %v1917 = vpop.f32.mrf.mxu0
      %v1918 = vadd.f32 0.0, %v1917
      %1919 = vmatmul.bf16.gmra.mxu0 %v726
      %v1920 = vpop.f32.mrf.mxu0
      %v1921 = vadd.f32 0.0, %v1920
      %v1922 = vpop.f32.mrf.mxu0
      %v1923 = vadd.f32 0.0, %v1922
      %1924 = vmatmul.bf16.gmra.mxu0 %v728
      %v1925 = vpop.f32.mrf.mxu0
      %v1926 = vadd.f32 0.0, %v1925
      %v1927 = vpop.f32.mrf.mxu0
      %v1928 = vadd.f32 0.0, %v1927
      %1929 = vmatmul.bf16.gmra.mxu0 %v730
      %v1930 = vpop.f32.mrf.mxu0
      %v1931 = vadd.f32 0.0, %v1930
      %v1932 = vpop.f32.mrf.mxu0
      %v1933 = vadd.f32 0.0, %v1932
      %1934 = vmatmul.bf16.gmra.mxu0 %v732
      %v1935 = vpop.f32.mrf.mxu0
      %v1936 = vadd.f32 0.0, %v1935
      %v1937 = vpop.f32.mrf.mxu0
      %v1938 = vadd.f32 0.0, %v1937
      %1939 = vmatmul.bf16.gmra.mxu0 %v734
      %v1940 = vpop.f32.mrf.mxu0
      %v1941 = vadd.f32 0.0, %v1940
      %v1942 = vpop.f32.mrf.mxu0
      %v1943 = vadd.f32 0.0, %v1942
      %1944 = vdwg.mxu0
      %1945 = vmatpush.bf16.msra.mxu0 %v1372
      %1946 = vmatpush.bf16.msra.mxu0 %v1364
      %1947 = vmatpush.bf16.msra.mxu0 %v1356
      %1948 = vmatpush.bf16.msra.mxu0 %v1348
      %1949 = vmatpush.bf16.msra.mxu0 %v1340
      %1950 = vmatpush.bf16.msra.mxu0 %v1332
      %1951 = vmatpush.bf16.msra.mxu0 %v1324
      %1952 = vmatpush.bf16.msra.mxu0 %v1316
      %1953 = vmatmul.bf16.gmra.mxu0 %v721
      %v1954 = vpop.f32.mrf.mxu0
      %v1955 = vadd.f32 %v1906, %v1954
      %v1956 = vpop.f32.mrf.mxu0
      %v1957 = vadd.f32 %v1908, %v1956
      %1958 = vmatmul.bf16.gmra.mxu0 %v723
      %v1959 = vpop.f32.mrf.mxu0
      %v1960 = vadd.f32 %v1911, %v1959
      %v1961 = vpop.f32.mrf.mxu0
      %v1962 = vadd.f32 %v1913, %v1961
      %1963 = vmatmul.bf16.gmra.mxu0 %v725
      %v1964 = vpop.f32.mrf.mxu0
      %v1965 = vadd.f32 %v1916, %v1964
      %v1966 = vpop.f32.mrf.mxu0
      %v1967 = vadd.f32 %v1918, %v1966
      %1968 = vmatmul.bf16.gmra.mxu0 %v727
      %v1969 = vpop.f32.mrf.mxu0
      %v1970 = vadd.f32 %v1921, %v1969
      %v1971 = vpop.f32.mrf.mxu0
      %v1972 = vadd.f32 %v1923, %v1971
      %1973 = vmatmul.bf16.gmra.mxu0 %v729
      %v1974 = vpop.f32.mrf.mxu0
      %v1975 = vadd.f32 %v1926, %v1974
      %v1976 = vpop.f32.mrf.mxu0
      %v1977 = vadd.f32 %v1928, %v1976
      %1978 = vmatmul.bf16.gmra.mxu0 %v731
      %v1979 = vpop.f32.mrf.mxu0
      %v1980 = vadd.f32 %v1931, %v1979
      %v1981 = vpop.f32.mrf.mxu0
      %v1982 = vadd.f32 %v1933, %v1981
      %1983 = vmatmul.bf16.gmra.mxu0 %v733
      %v1984 = vpop.f32.mrf.mxu0
      %v1985 = vadd.f32 %v1936, %v1984
      %v1986 = vpop.f32.mrf.mxu0
      %v1987 = vadd.f32 %v1938, %v1986
      %1988 = vmatmul.bf16.gmra.mxu0 %v735
      %v1989 = vpop.f32.mrf.mxu0
      %v1990 = vadd.f32 %v1941, %v1989
      %v1991 = vpop.f32.mrf.mxu0
      %v1992 = vadd.f32 %v1943, %v1991
      %1993 = vdwg.mxu0
      %1994 = vmatpush.bf16.msra.mxu0 %v1309
      %1995 = vmatpush.bf16.msra.mxu0 %v1301
      %1996 = vmatpush.bf16.msra.mxu0 %v1293
      %1997 = vmatpush.bf16.msra.mxu0 %v1285
      %1998 = vmatpush.bf16.msra.mxu0 %v1277
      %1999 = vmatpush.bf16.msra.mxu0 %v1269
      %2000 = vmatpush.bf16.msra.mxu0 %v1261
      %2001 = vmatpush.bf16.msra.mxu0 %v1253
      %2002 = vmatmul.bf16.gmra.mxu0 %v720
      %v2003 = vpop.f32.mrf.mxu0
      %v2004 = vadd.f32 0.0, %v2003
      %v2005 = vpop.f32.mrf.mxu0
      %v2006 = vadd.f32 0.0, %v2005
      %2007 = vmatmul.bf16.gmra.mxu0 %v722
      %v2008 = vpop.f32.mrf.mxu0
      %v2009 = vadd.f32 0.0, %v2008
      %v2010 = vpop.f32.mrf.mxu0
      %v2011 = vadd.f32 0.0, %v2010
      %2012 = vmatmul.bf16.gmra.mxu0 %v724
      %v2013 = vpop.f32.mrf.mxu0
      %v2014 = vadd.f32 0.0, %v2013
      %v2015 = vpop.f32.mrf.mxu0
      %v2016 = vadd.f32 0.0, %v2015
      %2017 = vmatmul.bf16.gmra.mxu0 %v726
      %v2018 = vpop.f32.mrf.mxu0
      %v2019 = vadd.f32 0.0, %v2018
      %v2020 = vpop.f32.mrf.mxu0
      %v2021 = vadd.f32 0.0, %v2020
      %2022 = vmatmul.bf16.gmra.mxu0 %v728
      %v2023 = vpop.f32.mrf.mxu0
      %v2024 = vadd.f32 0.0, %v2023
      %v2025 = vpop.f32.mrf.mxu0
      %v2026 = vadd.f32 0.0, %v2025
      %2027 = vmatmul.bf16.gmra.mxu0 %v730
      %v2028 = vpop.f32.mrf.mxu0
      %v2029 = vadd.f32 0.0, %v2028
      %v2030 = vpop.f32.mrf.mxu0
      %v2031 = vadd.f32 0.0, %v2030
      %2032 = vmatmul.bf16.gmra.mxu0 %v732
      %v2033 = vpop.f32.mrf.mxu0
      %v2034 = vadd.f32 0.0, %v2033
      %v2035 = vpop.f32.mrf.mxu0
      %v2036 = vadd.f32 0.0, %v2035
      %2037 = vmatmul.bf16.gmra.mxu0 %v734
      %v2038 = vpop.f32.mrf.mxu0
      %v2039 = vadd.f32 0.0, %v2038
      %v2040 = vpop.f32.mrf.mxu0
      %v2041 = vadd.f32 0.0, %v2040
      %2042 = vdwg.mxu0
      %2043 = vmatpush.bf16.msra.mxu0 %v1373
      %2044 = vmatpush.bf16.msra.mxu0 %v1365
      %2045 = vmatpush.bf16.msra.mxu0 %v1357
      %2046 = vmatpush.bf16.msra.mxu0 %v1349
      %2047 = vmatpush.bf16.msra.mxu0 %v1341
      %2048 = vmatpush.bf16.msra.mxu0 %v1333
      %2049 = vmatpush.bf16.msra.mxu0 %v1325
      %2050 = vmatpush.bf16.msra.mxu0 %v1317
      %2051 = vmatmul.bf16.gmra.mxu0 %v721
      %v2052 = vpop.f32.mrf.mxu0
      %v2053 = vadd.f32 %v2004, %v2052
      %v2054 = vpop.f32.mrf.mxu0
      %v2055 = vadd.f32 %v2006, %v2054
      %2056 = vmatmul.bf16.gmra.mxu0 %v723
      %v2057 = vpop.f32.mrf.mxu0
      %v2058 = vadd.f32 %v2009, %v2057
      %v2059 = vpop.f32.mrf.mxu0
      %v2060 = vadd.f32 %v2011, %v2059
      %2061 = vmatmul.bf16.gmra.mxu0 %v725
      %v2062 = vpop.f32.mrf.mxu0
      %v2063 = vadd.f32 %v2014, %v2062
      %v2064 = vpop.f32.mrf.mxu0
      %v2065 = vadd.f32 %v2016, %v2064
      %2066 = vmatmul.bf16.gmra.mxu0 %v727
      %v2067 = vpop.f32.mrf.mxu0
      %v2068 = vadd.f32 %v2019, %v2067
      %v2069 = vpop.f32.mrf.mxu0
      %v2070 = vadd.f32 %v2021, %v2069
      %2071 = vmatmul.bf16.gmra.mxu0 %v729
      %v2072 = vpop.f32.mrf.mxu0
      %v2073 = vadd.f32 %v2024, %v2072
      %v2074 = vpop.f32.mrf.mxu0
      %v2075 = vadd.f32 %v2026, %v2074
      %2076 = vmatmul.bf16.gmra.mxu0 %v731
      %v2077 = vpop.f32.mrf.mxu0
      %v2078 = vadd.f32 %v2029, %v2077
      %v2079 = vpop.f32.mrf.mxu0
      %v2080 = vadd.f32 %v2031, %v2079
      %2081 = vmatmul.bf16.gmra.mxu0 %v733
      %v2082 = vpop.f32.mrf.mxu0
      %v2083 = vadd.f32 %v2034, %v2082
      %v2084 = vpop.f32.mrf.mxu0
      %v2085 = vadd.f32 %v2036, %v2084
      %2086 = vmatmul.bf16.gmra.mxu0 %v735
      %v2087 = vpop.f32.mrf.mxu0
      %v2088 = vadd.f32 %v2039, %v2087
      %v2089 = vpop.f32.mrf.mxu0
      %v2090 = vadd.f32 %v2041, %v2089
      %2091 = vdwg.mxu0
      %2092 = vmatpush.bf16.msra.mxu0 %v1310
      %2093 = vmatpush.bf16.msra.mxu0 %v1302
      %2094 = vmatpush.bf16.msra.mxu0 %v1294
      %2095 = vmatpush.bf16.msra.mxu0 %v1286
      %2096 = vmatpush.bf16.msra.mxu0 %v1278
      %2097 = vmatpush.bf16.msra.mxu0 %v1270
      %2098 = vmatpush.bf16.msra.mxu0 %v1262
      %2099 = vmatpush.bf16.msra.mxu0 %v1254
      %2100 = vmatmul.bf16.gmra.mxu0 %v720
      %v2101 = vpop.f32.mrf.mxu0
      %v2102 = vadd.f32 0.0, %v2101
      %v2103 = vpop.f32.mrf.mxu0
      %v2104 = vadd.f32 0.0, %v2103
      %2105 = vmatmul.bf16.gmra.mxu0 %v722
      %v2106 = vpop.f32.mrf.mxu0
      %v2107 = vadd.f32 0.0, %v2106
      %v2108 = vpop.f32.mrf.mxu0
      %v2109 = vadd.f32 0.0, %v2108
      %2110 = vmatmul.bf16.gmra.mxu0 %v724
      %v2111 = vpop.f32.mrf.mxu0
      %v2112 = vadd.f32 0.0, %v2111
      %v2113 = vpop.f32.mrf.mxu0
      %v2114 = vadd.f32 0.0, %v2113
      %2115 = vmatmul.bf16.gmra.mxu0 %v726
      %v2116 = vpop.f32.mrf.mxu0
      %v2117 = vadd.f32 0.0, %v2116
      %v2118 = vpop.f32.mrf.mxu0
      %v2119 = vadd.f32 0.0, %v2118
      %2120 = vmatmul.bf16.gmra.mxu0 %v728
      %v2121 = vpop.f32.mrf.mxu0
      %v2122 = vadd.f32 0.0, %v2121
      %v2123 = vpop.f32.mrf.mxu0
      %v2124 = vadd.f32 0.0, %v2123
      %2125 = vmatmul.bf16.gmra.mxu0 %v730
      %v2126 = vpop.f32.mrf.mxu0
      %v2127 = vadd.f32 0.0, %v2126
      %v2128 = vpop.f32.mrf.mxu0
      %v2129 = vadd.f32 0.0, %v2128
      %2130 = vmatmul.bf16.gmra.mxu0 %v732
      %v2131 = vpop.f32.mrf.mxu0
      %v2132 = vadd.f32 0.0, %v2131
      %v2133 = vpop.f32.mrf.mxu0
      %v2134 = vadd.f32 0.0, %v2133
      %2135 = vmatmul.bf16.gmra.mxu0 %v734
      %v2136 = vpop.f32.mrf.mxu0
      %v2137 = vadd.f32 0.0, %v2136
      %v2138 = vpop.f32.mrf.mxu0
      %v2139 = vadd.f32 0.0, %v2138
      %2140 = vdwg.mxu0
      %2141 = vmatpush.bf16.msra.mxu0 %v1374
      %2142 = vmatpush.bf16.msra.mxu0 %v1366
      %2143 = vmatpush.bf16.msra.mxu0 %v1358
      %2144 = vmatpush.bf16.msra.mxu0 %v1350
      %2145 = vmatpush.bf16.msra.mxu0 %v1342
      %2146 = vmatpush.bf16.msra.mxu0 %v1334
      %2147 = vmatpush.bf16.msra.mxu0 %v1326
      %2148 = vmatpush.bf16.msra.mxu0 %v1318
      %2149 = vmatmul.bf16.gmra.mxu0 %v721
      %v2150 = vpop.f32.mrf.mxu0
      %v2151 = vadd.f32 %v2102, %v2150
      %v2152 = vpop.f32.mrf.mxu0
      %v2153 = vadd.f32 %v2104, %v2152
      %2154 = vmatmul.bf16.gmra.mxu0 %v723
      %v2155 = vpop.f32.mrf.mxu0
      %v2156 = vadd.f32 %v2107, %v2155
      %v2157 = vpop.f32.mrf.mxu0
      %v2158 = vadd.f32 %v2109, %v2157
      %2159 = vmatmul.bf16.gmra.mxu0 %v725
      %v2160 = vpop.f32.mrf.mxu0
      %v2161 = vadd.f32 %v2112, %v2160
      %v2162 = vpop.f32.mrf.mxu0
      %v2163 = vadd.f32 %v2114, %v2162
      %2164 = vmatmul.bf16.gmra.mxu0 %v727
      %v2165 = vpop.f32.mrf.mxu0
      %v2166 = vadd.f32 %v2117, %v2165
      %v2167 = vpop.f32.mrf.mxu0
      %v2168 = vadd.f32 %v2119, %v2167
      %2169 = vmatmul.bf16.gmra.mxu0 %v729
      %v2170 = vpop.f32.mrf.mxu0
      %v2171 = vadd.f32 %v2122, %v2170
      %v2172 = vpop.f32.mrf.mxu0
      %v2173 = vadd.f32 %v2124, %v2172
      %2174 = vmatmul.bf16.gmra.mxu0 %v731
      %v2175 = vpop.f32.mrf.mxu0
      %v2176 = vadd.f32 %v2127, %v2175
      %v2177 = vpop.f32.mrf.mxu0
      %v2178 = vadd.f32 %v2129, %v2177
      %2179 = vmatmul.bf16.gmra.mxu0 %v733
      %v2180 = vpop.f32.mrf.mxu0
      %v2181 = vadd.f32 %v2132, %v2180
      %v2182 = vpop.f32.mrf.mxu0
      %v2183 = vadd.f32 %v2134, %v2182
      %2184 = vmatmul.bf16.gmra.mxu0 %v735
      %v2185 = vpop.f32.mrf.mxu0
      %v2186 = vadd.f32 %v2137, %v2185
      %v2187 = vpop.f32.mrf.mxu0
      %v2188 = vadd.f32 %v2139, %v2187
      %2189 = vdwg.mxu0
      %2190 = vmatpush.bf16.msra.mxu0 %v1311
      %2191 = vmatpush.bf16.msra.mxu0 %v1303
      %2192 = vmatpush.bf16.msra.mxu0 %v1295
      %2193 = vmatpush.bf16.msra.mxu0 %v1287
      %2194 = vmatpush.bf16.msra.mxu0 %v1279
      %2195 = vmatpush.bf16.msra.mxu0 %v1271
      %2196 = vmatpush.bf16.msra.mxu0 %v1263
      %2197 = vmatpush.bf16.msra.mxu0 %v1255
      %2198 = vmatmul.bf16.gmra.mxu0 %v720
      %v2199 = vpop.f32.mrf.mxu0
      %v2200 = vadd.f32 0.0, %v2199
      %v2201 = vpop.f32.mrf.mxu0
      %v2202 = vadd.f32 0.0, %v2201
      %2203 = vmatmul.bf16.gmra.mxu0 %v722
      %v2204 = vpop.f32.mrf.mxu0
      %v2205 = vadd.f32 0.0, %v2204
      %v2206 = vpop.f32.mrf.mxu0
      %v2207 = vadd.f32 0.0, %v2206
      %2208 = vmatmul.bf16.gmra.mxu0 %v724
      %v2209 = vpop.f32.mrf.mxu0
      %v2210 = vadd.f32 0.0, %v2209
      %v2211 = vpop.f32.mrf.mxu0
      %v2212 = vadd.f32 0.0, %v2211
      %2213 = vmatmul.bf16.gmra.mxu0 %v726
      %v2214 = vpop.f32.mrf.mxu0
      %v2215 = vadd.f32 0.0, %v2214
      %v2216 = vpop.f32.mrf.mxu0
      %v2217 = vadd.f32 0.0, %v2216
      %2218 = vmatmul.bf16.gmra.mxu0 %v728
      %v2219 = vpop.f32.mrf.mxu0
      %v2220 = vadd.f32 0.0, %v2219
      %v2221 = vpop.f32.mrf.mxu0
      %v2222 = vadd.f32 0.0, %v2221
      %2223 = vmatmul.bf16.gmra.mxu0 %v730
      %v2224 = vpop.f32.mrf.mxu0
      %v2225 = vadd.f32 0.0, %v2224
      %v2226 = vpop.f32.mrf.mxu0
      %v2227 = vadd.f32 0.0, %v2226
      %2228 = vmatmul.bf16.gmra.mxu0 %v732
      %v2229 = vpop.f32.mrf.mxu0
      %v2230 = vadd.f32 0.0, %v2229
      %v2231 = vpop.f32.mrf.mxu0
      %v2232 = vadd.f32 0.0, %v2231
      %2233 = vmatmul.bf16.gmra.mxu0 %v734
      %v2234 = vpop.f32.mrf.mxu0
      %v2235 = vadd.f32 0.0, %v2234
      %v2236 = vpop.f32.mrf.mxu0
      %v2237 = vadd.f32 0.0, %v2236
      %2238 = vdwg.mxu0
      %2239 = vmatpush.bf16.msra.mxu0 %v1375
      %2240 = vmatpush.bf16.msra.mxu0 %v1367
      %2241 = vmatpush.bf16.msra.mxu0 %v1359
      %2242 = vmatpush.bf16.msra.mxu0 %v1351
      %2243 = vmatpush.bf16.msra.mxu0 %v1343
      %2244 = vmatpush.bf16.msra.mxu0 %v1335
      %2245 = vmatpush.bf16.msra.mxu0 %v1327
      %2246 = vmatpush.bf16.msra.mxu0 %v1319
      %2247 = vmatmul.bf16.gmra.mxu0 %v721
      %v2248 = vpop.f32.mrf.mxu0
      %v2249 = vadd.f32 %v2200, %v2248
      %v2250 = vpop.f32.mrf.mxu0
      %v2251 = vadd.f32 %v2202, %v2250
      %2252 = vmatmul.bf16.gmra.mxu0 %v723
      %v2253 = vpop.f32.mrf.mxu0
      %v2254 = vadd.f32 %v2205, %v2253
      %v2255 = vpop.f32.mrf.mxu0
      %v2256 = vadd.f32 %v2207, %v2255
      %2257 = vmatmul.bf16.gmra.mxu0 %v725
      %v2258 = vpop.f32.mrf.mxu0
      %v2259 = vadd.f32 %v2210, %v2258
      %v2260 = vpop.f32.mrf.mxu0
      %v2261 = vadd.f32 %v2212, %v2260
      %2262 = vmatmul.bf16.gmra.mxu0 %v727
      %v2263 = vpop.f32.mrf.mxu0
      %v2264 = vadd.f32 %v2215, %v2263
      %v2265 = vpop.f32.mrf.mxu0
      %v2266 = vadd.f32 %v2217, %v2265
      %2267 = vmatmul.bf16.gmra.mxu0 %v729
      %v2268 = vpop.f32.mrf.mxu0
      %v2269 = vadd.f32 %v2220, %v2268
      %v2270 = vpop.f32.mrf.mxu0
      %v2271 = vadd.f32 %v2222, %v2270
      %2272 = vmatmul.bf16.gmra.mxu0 %v731
      %v2273 = vpop.f32.mrf.mxu0
      %v2274 = vadd.f32 %v2225, %v2273
      %v2275 = vpop.f32.mrf.mxu0
      %v2276 = vadd.f32 %v2227, %v2275
      %2277 = vmatmul.bf16.gmra.mxu0 %v733
      %v2278 = vpop.f32.mrf.mxu0
      %v2279 = vadd.f32 %v2230, %v2278
      %v2280 = vpop.f32.mrf.mxu0
      %v2281 = vadd.f32 %v2232, %v2280
      %2282 = vmatmul.bf16.gmra.mxu0 %v735
      %v2283 = vpop.f32.mrf.mxu0
      %v2284 = vadd.f32 %v2235, %v2283
      %v2285 = vpop.f32.mrf.mxu0
      %v2286 = vadd.f32 %v2237, %v2285
      %2287 = vdwg.mxu0
      %2288 = vst [vmem:[%s317] sm:$0xff] %v1563
      %2289 = vst [vmem:[%s317 + $0x8] sm:$0xff] %v1661
      %2290 = vst [vmem:[%s317 + $0x10] sm:$0xff] %v1759
      %2291 = vst [vmem:[%s317 + $0x18] sm:$0xff] %v1857
      %2292 = vst [vmem:[%s317 + $0x20] sm:$0xff] %v1955
      %2293 = vst [vmem:[%s317 + $0x28] sm:$0xff] %v2053
      %2294 = vst [vmem:[%s317 + $0x30] sm:$0xff] %v2151
      %2295 = vst [vmem:[%s317 + $0x38] sm:$0xff] %v2249
      %2296 = vst [vmem:[%s317 + $0x40] sm:$0xff] %v1565
      %2297 = vst [vmem:[%s317 + $0x48] sm:$0xff] %v1663
      %2298 = vst [vmem:[%s317 + $0x50] sm:$0xff] %v1761
      %2299 = vst [vmem:[%s317 + $0x58] sm:$0xff] %v1859
      %2300 = vst [vmem:[%s317 + $0x60] sm:$0xff] %v1957
      %2301 = vst [vmem:[%s317 + $0x68] sm:$0xff] %v2055
      %2302 = vst [vmem:[%s317 + $0x70] sm:$0xff] %v2153
      %2303 = vst [vmem:[%s317 + $0x78] sm:$0xff] %v2251
      %2304 = vst [vmem:[%s317 + $0x80] sm:$0xff] %v1568
      %2305 = vst [vmem:[%s317 + $0x88] sm:$0xff] %v1666
      %2306 = vst [vmem:[%s317 + $0x90] sm:$0xff] %v1764
      %2307 = vst [vmem:[%s317 + $0x98] sm:$0xff] %v1862
      %2308 = vst [vmem:[%s317 + $0xa0] sm:$0xff] %v1960
      %2309 = vst [vmem:[%s317 + $0xa8] sm:$0xff] %v2058
      %2310 = vst [vmem:[%s317 + $0xb0] sm:$0xff] %v2156
      %2311 = vst [vmem:[%s317 + $0xb8] sm:$0xff] %v2254
      %2312 = vst [vmem:[%s317 + $0xc0] sm:$0xff] %v1570
      %2313 = vst [vmem:[%s317 + $0xc8] sm:$0xff] %v1668
      %2314 = vst [vmem:[%s317 + $0xd0] sm:$0xff] %v1766
      %2315 = vst [vmem:[%s317 + $0xd8] sm:$0xff] %v1864
      %2316 = vst [vmem:[%s317 + $0xe0] sm:$0xff] %v1962
      %2317 = vst [vmem:[%s317 + $0xe8] sm:$0xff] %v2060
      %2318 = vst [vmem:[%s317 + $0xf0] sm:$0xff] %v2158
      %2319 = vst [vmem:[%s317 + $0xf8] sm:$0xff] %v2256
      %2320 = vst [vmem:[%s317 + $0x100] sm:$0xff] %v1573
      %2321 = vst [vmem:[%s317 + $0x108] sm:$0xff] %v1671
      %2322 = vst [vmem:[%s317 + $0x110] sm:$0xff] %v1769
      %2323 = vst [vmem:[%s317 + $0x118] sm:$0xff] %v1867
      %2324 = vst [vmem:[%s317 + $0x120] sm:$0xff] %v1965
      %2325 = vst [vmem:[%s317 + $0x128] sm:$0xff] %v2063
      %2326 = vst [vmem:[%s317 + $0x130] sm:$0xff] %v2161
      %2327 = vst [vmem:[%s317 + $0x138] sm:$0xff] %v2259
      %2328 = vst [vmem:[%s317 + $0x140] sm:$0xff] %v1575
      %2329 = vst [vmem:[%s317 + $0x148] sm:$0xff] %v1673
      %2330 = vst [vmem:[%s317 + $0x150] sm:$0xff] %v1771
      %2331 = vst [vmem:[%s317 + $0x158] sm:$0xff] %v1869
      %2332 = vst [vmem:[%s317 + $0x160] sm:$0xff] %v1967
      %2333 = vst [vmem:[%s317 + $0x168] sm:$0xff] %v2065
      %2334 = vst [vmem:[%s317 + $0x170] sm:$0xff] %v2163
      %2335 = vst [vmem:[%s317 + $0x178] sm:$0xff] %v2261
      %2336 = vst [vmem:[%s317 + $0x180] sm:$0xff] %v1578
      %2337 = vst [vmem:[%s317 + $0x188] sm:$0xff] %v1676
      %2338 = vst [vmem:[%s317 + $0x190] sm:$0xff] %v1774
      %2339 = vst [vmem:[%s317 + $0x198] sm:$0xff] %v1872
      %2340 = vst [vmem:[%s317 + $0x1a0] sm:$0xff] %v1970
      %2341 = vst [vmem:[%s317 + $0x1a8] sm:$0xff] %v2068
      %2342 = vst [vmem:[%s317 + $0x1b0] sm:$0xff] %v2166
      %2343 = vst [vmem:[%s317 + $0x1b8] sm:$0xff] %v2264
      %2344 = vst [vmem:[%s317 + $0x1c0] sm:$0xff] %v1580
      %2345 = vst [vmem:[%s317 + $0x1c8] sm:$0xff] %v1678
      %2346 = vst [vmem:[%s317 + $0x1d0] sm:$0xff] %v1776
      %2347 = vst [vmem:[%s317 + $0x1d8] sm:$0xff] %v1874
      %2348 = vst [vmem:[%s317 + $0x1e0] sm:$0xff] %v1972
      %2349 = vst [vmem:[%s317 + $0x1e8] sm:$0xff] %v2070
      %2350 = vst [vmem:[%s317 + $0x1f0] sm:$0xff] %v2168
      %2351 = vst [vmem:[%s317 + $0x1f8] sm:$0xff] %v2266
      %2352 = vst [vmem:[%s317 + $0x200] sm:$0xff] %v1583
      %2353 = vst [vmem:[%s317 + $0x208] sm:$0xff] %v1681
      %2354 = vst [vmem:[%s317 + $0x210] sm:$0xff] %v1779
      %2355 = vst [vmem:[%s317 + $0x218] sm:$0xff] %v1877
      %2356 = vst [vmem:[%s317 + $0x220] sm:$0xff] %v1975
      %2357 = vst [vmem:[%s317 + $0x228] sm:$0xff] %v2073
      %2358 = vst [vmem:[%s317 + $0x230] sm:$0xff] %v2171
      %2359 = vst [vmem:[%s317 + $0x238] sm:$0xff] %v2269
      %2360 = vst [vmem:[%s317 + $0x240] sm:$0xff] %v1585
      %2361 = vst [vmem:[%s317 + $0x248] sm:$0xff] %v1683
      %2362 = vst [vmem:[%s317 + $0x250] sm:$0xff] %v1781
      %2363 = vst [vmem:[%s317 + $0x258] sm:$0xff] %v1879
      %2364 = vst [vmem:[%s317 + $0x260] sm:$0xff] %v1977
      %2365 = vst [vmem:[%s317 + $0x268] sm:$0xff] %v2075
      %2366 = vst [vmem:[%s317 + $0x270] sm:$0xff] %v2173
      %2367 = vst [vmem:[%s317 + $0x278] sm:$0xff] %v2271
      %2368 = vst [vmem:[%s317 + $0x280] sm:$0xff] %v1588
      %2369 = vst [vmem:[%s317 + $0x288] sm:$0xff] %v1686
      %2370 = vst [vmem:[%s317 + $0x290] sm:$0xff] %v1784
      %2371 = vst [vmem:[%s317 + $0x298] sm:$0xff] %v1882
      %2372 = vst [vmem:[%s317 + $0x2a0] sm:$0xff] %v1980
      %2373 = vst [vmem:[%s317 + $0x2a8] sm:$0xff] %v2078
      %2374 = vst [vmem:[%s317 + $0x2b0] sm:$0xff] %v2176
      %2375 = vst [vmem:[%s317 + $0x2b8] sm:$0xff] %v2274
      %2376 = vst [vmem:[%s317 + $0x2c0] sm:$0xff] %v1590
      %2377 = vst [vmem:[%s317 + $0x2c8] sm:$0xff] %v1688
      %2378 = vst [vmem:[%s317 + $0x2d0] sm:$0xff] %v1786
      %2379 = vst [vmem:[%s317 + $0x2d8] sm:$0xff] %v1884
      %2380 = vst [vmem:[%s317 + $0x2e0] sm:$0xff] %v1982
      %2381 = vst [vmem:[%s317 + $0x2e8] sm:$0xff] %v2080
      %2382 = vst [vmem:[%s317 + $0x2f0] sm:$0xff] %v2178
      %2383 = vst [vmem:[%s317 + $0x2f8] sm:$0xff] %v2276
      %2384 = vst [vmem:[%s317 + $0x300] sm:$0xff] %v1593
      %2385 = vst [vmem:[%s317 + $0x308] sm:$0xff] %v1691
      %2386 = vst [vmem:[%s317 + $0x310] sm:$0xff] %v1789
      %2387 = vst [vmem:[%s317 + $0x318] sm:$0xff] %v1887
      %2388 = vst [vmem:[%s317 + $0x320] sm:$0xff] %v1985
      %2389 = vst [vmem:[%s317 + $0x328] sm:$0xff] %v2083
      %2390 = vst [vmem:[%s317 + $0x330] sm:$0xff] %v2181
      %2391 = vst [vmem:[%s317 + $0x338] sm:$0xff] %v2279
      %2392 = vst [vmem:[%s317 + $0x340] sm:$0xff] %v1595
      %2393 = vst [vmem:[%s317 + $0x348] sm:$0xff] %v1693
      %2394 = vst [vmem:[%s317 + $0x350] sm:$0xff] %v1791
      %2395 = vst [vmem:[%s317 + $0x358] sm:$0xff] %v1889
      %2396 = vst [vmem:[%s317 + $0x360] sm:$0xff] %v1987
      %2397 = vst [vmem:[%s317 + $0x368] sm:$0xff] %v2085
      %2398 = vst [vmem:[%s317 + $0x370] sm:$0xff] %v2183
      %2399 = vst [vmem:[%s317 + $0x378] sm:$0xff] %v2281
      %2400 = vst [vmem:[%s317 + $0x380] sm:$0xff] %v1598
      %2401 = vst [vmem:[%s317 + $0x388] sm:$0xff] %v1696
      %2402 = vst [vmem:[%s317 + $0x390] sm:$0xff] %v1794
      %2403 = vst [vmem:[%s317 + $0x398] sm:$0xff] %v1892
      %2404 = vst [vmem:[%s317 + $0x3a0] sm:$0xff] %v1990
      %2405 = vst [vmem:[%s317 + $0x3a8] sm:$0xff] %v2088
      %2406 = vst [vmem:[%s317 + $0x3b0] sm:$0xff] %v2186
      %2407 = vst [vmem:[%s317 + $0x3b8] sm:$0xff] %v2284
      %2408 = vst [vmem:[%s317 + $0x3c0] sm:$0xff] %v1600
      %2409 = vst [vmem:[%s317 + $0x3c8] sm:$0xff] %v1698
      %2410 = vst [vmem:[%s317 + $0x3d0] sm:$0xff] %v1796
      %2411 = vst [vmem:[%s317 + $0x3d8] sm:$0xff] %v1894
      %2412 = vst [vmem:[%s317 + $0x3e0] sm:$0xff] %v1992
      %2413 = vst [vmem:[%s317 + $0x3e8] sm:$0xff] %v2090
      %2414 = vst [vmem:[%s317 + $0x3f0] sm:$0xff] %v2188
      %2415 = vst [vmem:[%s317 + $0x3f8] sm:$0xff] %v2286
      %s2416 = smul.u32 16, %s21
      %s2417 = smul.u32 8, %s22
      %p2418 = scmp.lt.s32.totalorder %s20, 1
      %s2419 = scalar_select %p2418, %s20, 1
      %p2420 = scmp.lt.s32.totalorder %s2416, 15
      %s2421 = scalar_select %p2420, %s2416, 15
      %p2422 = scmp.lt.s32.totalorder %s2417, 7
      %s2423 = scalar_select %p2422, %s2417, 7
      %s2424 = smul.addr %s2421, 8
      %s2425 = sadd.s32 %s2423, %s2424
      %s2426 = smul.addr %s2419, 128
      %s2427 = sadd.s32 %s2425, %s2426
      %s2428 = smul.addr %s2427, 8
      %s2429 = scalar_lea.vmem %s4, %s2428
      // Predicated region
      $region37: #{upsample_forward.3} parent=35 // pred_check
        %p2430 = pneg %p159
      $region38: #{upsample_forward.3} parent=35 // pred_check_branch
        %2432 = sbr.rel (%p2430) target = $region40
      $region39: #{upsample_forward.3} parent=35 // pred_region
        %s2433 = smul.u32 16, %s21
        %s2434 = smul.u32 8, %s22
      $region40: #{upsample_forward.3} parent=35 // pred_fallthru
        _
    $region36: #{upsample_forward.3} parent=5 // pred_fallthru
      _
    %p2435 = scmp.le.s32.totalorder 2, %s10
    // Predicated region
    $region41: #{upsample_forward.3} parent=5 // pred_check
      %p2436 = pneg %p2435
    $region42: #{upsample_forward.3} parent=5 // pred_check_branch
      %2438 = sbr.rel (%p2436) target = $region44
    $region43: #{upsample_forward.3} parent=5 // pred_region
      %s2439 = ssub.s32 %s10, 2
      // Predicated region
      $region45: #{upsample_forward.3} parent=43 // pred_check
        %p2440 = pneg %p165
      $region46: #{upsample_forward.3} parent=43 // pred_check_branch
        %2442 = sbr.rel (%p2440) target = $region48
      $region47: #{upsample_forward.3} parent=43 // pred_region
        %s2443 = smul.u32 16, %s24
        %s2444 = smul.u32 8, %s25
        %p2445 = scmp.lt.s32.totalorder %s23, 1
        %s2446 = scalar_select %p2445, %s23, 1
        %p2447 = scmp.lt.s32.totalorder %s2443, 15
        %s2448 = scalar_select %p2447, %s2443, 15
        %p2449 = scmp.lt.s32.totalorder %s2444, 7
        %s2450 = scalar_select %p2449, %s2444, 7
        %s2451 = smul.addr %s2448, 8
        %s2452 = sadd.s32 %s2450, %s2451
        %s2453 = smul.addr %s2446, 128
        %s2454 = sadd.s32 %s2452, %s2453
        %s2455 = smul.addr %s2454, 8
        %s2456 = scalar_lea.vmem %s4, %s2455
      $region48: #{upsample_forward.3} parent=43 // pred_fallthru
        _
    $region44: #{upsample_forward.3} parent=5 // pred_fallthru
      _
  $region6: #{upsample_forward.3} parent=0 // loop_footer
    %s14 = sadd.s32 1, %s10
  $region7: #{upsample_forward.3} parent=0 // loop_footer_branch
    %9 = sbr.rel target = $region3
  $region8: #{upsample_forward.3} parent=0 // loop_exit
    _

</llo_original>
